<compile_context>
chip_gen: v7x
topology: tpu7x:2x2x1
jax: 0.10.0
libtpu: 0.0.40
codegen_flags: <defaults>
</compile_context>

<pallas_src>
import math

import jax
import jax.numpy as jnp
from jax import lax
from jax.experimental import pallas as pl
from jax.experimental.pallas import tpu as pltpu

# Model hyper-parameters (small, synthetic).
D = 32        # model dim
H = 2         # attention heads
HD = D // H   # head dim
FFN = 64      # feed-forward dim
EPS = 1e-5
NEG = -1e9

# Order in which stacked weights are passed to the fused kernel.
WEIGHT_ORDER = [
    # encoder layer
    'e_wq', 'e_wk', 'e_wv', 'e_wo', 'e_ln1g', 'e_ln1b',
    'e_w1', 'e_b1', 'e_w2', 'e_b2', 'e_ln2g', 'e_ln2b',
    # decoder self-attention
    'd_swq', 'd_swk', 'd_swv', 'd_swo', 'd_ln1g', 'd_ln1b',
    # decoder cross-attention
    'd_cwq', 'd_cwk', 'd_cwv', 'd_cwo', 'd_ln2g', 'd_ln2b',
    # decoder FFN
    'd_w1', 'd_b1', 'd_w2', 'd_b2', 'd_ln3g', 'd_ln3b',
]


# ---------------------------------------------------------------------------
# In-kernel building blocks (traced inside the Pallas kernel body).
# ---------------------------------------------------------------------------
def _layer_norm(x, g, b):
    mu = jnp.mean(x, axis=-1, keepdims=True)
    var = jnp.mean((x - mu) ** 2, axis=-1, keepdims=True)
    return (x - mu) * lax.rsqrt(var + EPS) * g + b


def _mha(q_in, kv_in, b, sq, sk, wq, wk, wv, wo, add_mask):
    """Multi-head attention over the whole batch.

    q_in:  (b*sq, D)   flattened queries
    kv_in: (b*sk, D)   flattened keys/values source
    wq/wk/wv: (H, D, HD) refs (stacked per-head weights -> no lane slicing)
    wo:       (H, HD, D) ref  (per-head output projection, summed -> no concat)
    add_mask: additive mask broadcastable to (b, sq, sk)
    returns (b*sq, D)
    """
    scale = 1.0 / math.sqrt(HD)
    out = jnp.zeros((b * sq, D), jnp.float32)
    for h in range(H):  # H=2, unrolled at trace time
        # Per-head projections: lane-dense 2D MXU matmuls over the whole batch.
        q = jnp.dot(q_in, wq[h], preferred_element_type=jnp.float32).reshape(b, sq, HD)
        k = jnp.dot(kv_in, wk[h], preferred_element_type=jnp.float32).reshape(b, sk, HD)
        v = jnp.dot(kv_in, wv[h], preferred_element_type=jnp.float32).reshape(b, sk, HD)
        # Batched scores, contracting the last axis of both operands (no .T).
        s = jnp.einsum('bqe,bke->bqk', q, k,
                       preferred_element_type=jnp.float32) * scale + add_mask
        s = s - jnp.max(s, axis=-1, keepdims=True)
        p = jnp.exp(s)
        # EUP reciprocal instead of a VALU divide.
        p = p * pl.reciprocal(jnp.sum(p, axis=-1, keepdims=True), approx=True)
        ctx = jnp.einsum('bqk,bke->bqe', p, v, preferred_element_type=jnp.float32)
        # Fold output projection per head (sum over heads) — no concatenate.
        out = out + jnp.dot(ctx.reshape(b * sq, HD), wo[h],
                            preferred_element_type=jnp.float32)
    return out


# ---------------------------------------------------------------------------
# Fused encoder+decoder Pallas kernel (single grid point, whole batch).
# ---------------------------------------------------------------------------
def autoencoder_kernel(x_ref, y_ref, mask_ref, *refs):
    (e_wq, e_wk, e_wv, e_wo, e_ln1g, e_ln1b,
     e_w1, e_b1, e_w2, e_b2, e_ln2g, e_ln2b,
     d_swq, d_swk, d_swv, d_swo, d_ln1g, d_ln1b,
     d_cwq, d_cwk, d_cwv, d_cwo, d_ln2g, d_ln2b,
     d_w1, d_b1, d_w2, d_b2, d_ln3g, d_ln3b,
     o_ref) = refs

    B, _, Se = mask_ref.shape          # mask is (B, 1, S_enc)
    Sd = y_ref.shape[0] // B
    x = x_ref[...]                     # (B*Se, D)
    y = y_ref[...]                     # (B*Sd, D)

    # Masks built once for the whole batch (single grid point).
    enc_add = (mask_ref[...] - 1.0) * 1e9          # (B, 1, Se): 0 keep, -1e9 masked
    row = lax.broadcasted_iota(jnp.int32, (Sd, Sd), 0)
    col = lax.broadcasted_iota(jnp.int32, (Sd, Sd), 1)
    causal = jnp.where(col <= row, 0.0, NEG).astype(jnp.float32)[None]   # (1, Sd, Sd)

    # ---- Encoder layer (post-LN) ----
    attn = _mha(x, x, B, Se, Se, e_wq, e_wk, e_wv, e_wo, enc_add)
    h = _layer_norm(x + attn, e_ln1g[...], e_ln1b[...])
    ff = jnp.maximum(
        jnp.dot(h, e_w1[...], preferred_element_type=jnp.float32) + e_b1[...], 0.0)
    ff = jnp.dot(ff, e_w2[...], preferred_element_type=jnp.float32) + e_b2[...]
    enc = _layer_norm(h + ff, e_ln2g[...], e_ln2b[...])   # last_hidden_state, stays in VMEM

    # ---- Decoder layer: causal self-attn -> cross-attn -> FFN ----
    sattn = _mha(y, y, B, Sd, Sd, d_swq, d_swk, d_swv, d_swo, causal)
    h1 = _layer_norm(y + sattn, d_ln1g[...], d_ln1b[...])

    cattn = _mha(h1, enc, B, Sd, Se, d_cwq, d_cwk, d_cwv, d_cwo, enc_add)
    h2 = _layer_norm(h1 + cattn, d_ln2g[...], d_ln2b[...])

    ffd = jnp.maximum(
        jnp.dot(h2, d_w1[...], preferred_element_type=jnp.float32) + d_b1[...], 0.0)
    ffd = jnp.dot(ffd, d_w2[...], preferred_element_type=jnp.float32) + d_b2[...]
    o_ref[...] = _layer_norm(h2 + ffd, d_ln3g[...], d_ln3b[...])


# ---------------------------------------------------------------------------
# pallas_call wrapper (one call for the whole forward pass).
# ---------------------------------------------------------------------------
def _full_spec(shape):
    n = len(shape)
    return pl.BlockSpec(shape, lambda i, _n=n: (0,) * _n)


def _embed(ids, tok_emb, pos_emb):
    return tok_emb[ids] + pos_emb[None, :ids.shape[1], :]


def autoencoder_forward(params, input_ids, decoder_input_ids, attention_mask=None):
    """Mirrors AutoEncoder.forward:
       enc_out = encoder(input_ids, attention_mask)
       return decoder(decoder_input_ids,
                      encoder_hidden_states=enc_out.last_hidden_state,
                      encoder_attention_mask=attention_mask)
    Returns the decoder's last hidden state (B, S_dec, D)."""
    B, S_enc = input_ids.shape
    _, S_dec = decoder_input_ids.shape
    if attention_mask is None:
        attention_mask = jnp.ones((B, S_enc), jnp.float32)
    mask3 = attention_mask.astype(jnp.float32)[:, None, :]          # (B, 1, S_enc)

    # Embedding lookups (gather) stay in plain JAX; activations are flattened so
    # every in-kernel projection is a single 2D matmul over the whole batch.
    x = _embed(input_ids, params['enc_tok'], params['enc_pos']).reshape(B * S_enc, D)
    y = _embed(decoder_input_ids, params['dec_tok'], params['dec_pos']).reshape(B * S_dec, D)

    weights = [params[k] for k in WEIGHT_ORDER]

    out = pl.pallas_call(
        autoencoder_kernel,
        out_shape=jax.ShapeDtypeStruct((B * S_dec, D), jnp.float32),
        grid=(1,),
        in_specs=[_full_spec(x.shape), _full_spec(y.shape), _full_spec(mask3.shape)]
                 + [_full_spec(w.shape) for w in weights],
        out_specs=_full_spec((B * S_dec, D)),
        compiler_params=pltpu.CompilerParams(dimension_semantics=("arbitrary",)),
    )(x, y, mask3, *weights)

    # TODO(synk): HF decoders optionally project to vocab logits / return a
    # ModelOutput object; the generic wrapper doesn't pin that down, so we
    # return the decoder's last hidden state.
    return out.reshape(B, S_dec, D)


# ---------------------------------------------------------------------------
# Parameter init (per-head stacked attention weights: (H, D, HD) / (H, HD, D)).
# ---------------------------------------------------------------------------
def init_params(key, vocab, max_pos=64):
    def nrm(k, shape):
        return (0.02 * jax.random.normal(k, shape)).astype(jnp.float32)

    ks = jax.random.split(key, 24)
    ones = lambda s: jnp.ones(s, jnp.float32)
    zeros = lambda s: jnp.zeros(s, jnp.float32)
    p = {
        'enc_tok': nrm(ks[0], (vocab, D)), 'enc_pos': nrm(ks[1], (max_pos, D)),
        'dec_tok': nrm(ks[2], (vocab, D)), 'dec_pos': nrm(ks[3], (max_pos, D)),
        # encoder layer
        'e_wq': nrm(ks[4], (H, D, HD)), 'e_wk': nrm(ks[5], (H, D, HD)),
        'e_wv': nrm(ks[6], (H, D, HD)), 'e_wo': nrm(ks[7], (H, HD, D)),
        'e_ln1g': ones((1, D)), 'e_ln1b': zeros((1, D)),
        'e_w1': nrm(ks[8], (D, FFN)), 'e_b1': zeros((1, FFN)),
        'e_w2': nrm(ks[9], (FFN, D)), 'e_b2': zeros((1, D)),
        'e_ln2g': ones((1, D)), 'e_ln2b': zeros((1, D)),
        # decoder self-attention
        'd_swq': nrm(ks[10], (H, D, HD)), 'd_swk': nrm(ks[11], (H, D, HD)),
        'd_swv': nrm(ks[12], (H, D, HD)), 'd_swo': nrm(ks[13], (H, HD, D)),
        'd_ln1g': ones((1, D)), 'd_ln1b': zeros((1, D)),
        # decoder cross-attention
        'd_cwq': nrm(ks[14], (H, D, HD)), 'd_cwk': nrm(ks[15], (H, D, HD)),
        'd_cwv': nrm(ks[16], (H, D, HD)), 'd_cwo': nrm(ks[17], (H, HD, D)),
        'd_ln2g': ones((1, D)), 'd_ln2b': zeros((1, D)),
        # decoder FFN
        'd_w1': nrm(ks[18], (D, FFN)), 'd_b1': zeros((1, FFN)),
        'd_w2': nrm(ks[19], (FFN, D)), 'd_b2': zeros((1, D)),
        'd_ln3g': ones((1, D)), 'd_ln3b': zeros((1, D)),
    }
    return p


if __name__ == "__main__":
    B, S_ENC, S_DEC, VOCAB = 2, 8, 8, 32

    root = jax.random.PRNGKey(0)
    k_params, k_enc_ids, k_dec_ids = jax.random.split(root, 3)

    params = init_params(k_params, VOCAB)
    input_ids = jax.random.randint(k_enc_ids, (B, S_ENC), 0, VOCAB, dtype=jnp.int32)
    decoder_input_ids = jax.random.randint(k_dec_ids, (B, S_DEC), 0, VOCAB, dtype=jnp.int32)
    attention_mask = jnp.array(
        [[1, 1, 1, 1, 1, 1, 0, 0],
         [1, 1, 1, 1, 1, 1, 1, 1]], dtype=jnp.float32)

    out = jax.jit(autoencoder_forward)(params, input_ids, decoder_input_ids, attention_mask)
    jax.block_until_ready(out)
    assert out.shape == (B, S_DEC, D) and out.dtype == jnp.float32
    assert bool(jnp.all(jnp.isfinite(out)))
    print("KERNEL_OK")
</pallas_src>

<mosaic_0001>
module attributes {stable_mosaic.version = 11 : i64} {
  func.func @autoencoder_kernel(%arg0: i32, %arg1: memref<16x32xf32, #tpu.memory_space<vmem>>, %arg2: memref<16x32xf32, #tpu.memory_space<vmem>>, %arg3: memref<2x1x8xf32, #tpu.memory_space<vmem>>, %arg4: memref<2x32x16xf32, #tpu.memory_space<vmem>>, %arg5: memref<2x32x16xf32, #tpu.memory_space<vmem>>, %arg6: memref<2x32x16xf32, #tpu.memory_space<vmem>>, %arg7: memref<2x16x32xf32, #tpu.memory_space<vmem>>, %arg8: memref<1x32xf32, #tpu.memory_space<vmem>>, %arg9: memref<1x32xf32, #tpu.memory_space<vmem>>, %arg10: memref<32x64xf32, #tpu.memory_space<vmem>>, %arg11: memref<1x64xf32, #tpu.memory_space<vmem>>, %arg12: memref<64x32xf32, #tpu.memory_space<vmem>>, %arg13: memref<1x32xf32, #tpu.memory_space<vmem>>, %arg14: memref<1x32xf32, #tpu.memory_space<vmem>>, %arg15: memref<1x32xf32, #tpu.memory_space<vmem>>, %arg16: memref<2x32x16xf32, #tpu.memory_space<vmem>>, %arg17: memref<2x32x16xf32, #tpu.memory_space<vmem>>, %arg18: memref<2x32x16xf32, #tpu.memory_space<vmem>>, %arg19: memref<2x16x32xf32, #tpu.memory_space<vmem>>, %arg20: memref<1x32xf32, #tpu.memory_space<vmem>>, %arg21: memref<1x32xf32, #tpu.memory_space<vmem>>, %arg22: memref<2x32x16xf32, #tpu.memory_space<vmem>>, %arg23: memref<2x32x16xf32, #tpu.memory_space<vmem>>, %arg24: memref<2x32x16xf32, #tpu.memory_space<vmem>>, %arg25: memref<2x16x32xf32, #tpu.memory_space<vmem>>, %arg26: memref<1x32xf32, #tpu.memory_space<vmem>>, %arg27: memref<1x32xf32, #tpu.memory_space<vmem>>, %arg28: memref<32x64xf32, #tpu.memory_space<vmem>>, %arg29: memref<1x64xf32, #tpu.memory_space<vmem>>, %arg30: memref<64x32xf32, #tpu.memory_space<vmem>>, %arg31: memref<1x32xf32, #tpu.memory_space<vmem>>, %arg32: memref<1x32xf32, #tpu.memory_space<vmem>>, %arg33: memref<1x32xf32, #tpu.memory_space<vmem>>, %arg34: memref<16x32xf32, #tpu.memory_space<vmem>>) attributes {dimension_semantics = [#tpu.dimension_semantics<arbitrary>], iteration_bounds = array<i64: 1>, scalar_prefetch = 0 : i64, scratch_operands = 0 : i64, tpu.core_type = #tpu.core_type<tc>, window_params = [{pipeline_mode = #tpu.pipeline_mode<synchronous>, transform_indices = @transform_0, window_bounds = array<i64: 16, 32>}, {pipeline_mode = #tpu.pipeline_mode<synchronous>, transform_indices = @transform_1, window_bounds = array<i64: 16, 32>}, {pipeline_mode = #tpu.pipeline_mode<synchronous>, transform_indices = @transform_2, window_bounds = array<i64: 2, 1, 8>}, {pipeline_mode = #tpu.pipeline_mode<synchronous>, transform_indices = @transform_3, window_bounds = array<i64: 2, 32, 16>}, {pipeline_mode = #tpu.pipeline_mode<synchronous>, transform_indices = @transform_4, window_bounds = array<i64: 2, 32, 16>}, {pipeline_mode = #tpu.pipeline_mode<synchronous>, transform_indices = @transform_5, window_bounds = array<i64: 2, 32, 16>}, {pipeline_mode = #tpu.pipeline_mode<synchronous>, transform_indices = @transform_6, window_bounds = array<i64: 2, 16, 32>}, {pipeline_mode = #tpu.pipeline_mode<synchronous>, transform_indices = @transform_7, window_bounds = array<i64: 1, 32>}, {pipeline_mode = #tpu.pipeline_mode<synchronous>, transform_indices = @transform_8, window_bounds = array<i64: 1, 32>}, {pipeline_mode = #tpu.pipeline_mode<synchronous>, transform_indices = @transform_9, window_bounds = array<i64: 32, 64>}, {pipeline_mode = #tpu.pipeline_mode<synchronous>, transform_indices = @transform_10, window_bounds = array<i64: 1, 64>}, {pipeline_mode = #tpu.pipeline_mode<synchronous>, transform_indices = @transform_11, window_bounds = array<i64: 64, 32>}, {pipeline_mode = #tpu.pipeline_mode<synchronous>, transform_indices = @transform_12, window_bounds = array<i64: 1, 32>}, {pipeline_mode = #tpu.pipeline_mode<synchronous>, transform_indices = @transform_13, window_bounds = array<i64: 1, 32>}, {pipeline_mode = #tpu.pipeline_mode<synchronous>, transform_indices = @transform_14, window_bounds = array<i64: 1, 32>}, {pipeline_mode = #tpu.pipeline_mode<synchronous>, transform_indices = @transform_15, window_bounds = array<i64: 2, 32, 16>}, {pipeline_mode = #tpu.pipeline_mode<synchronous>, transform_indices = @transform_16, window_bounds = array<i64: 2, 32, 16>}, {pipeline_mode = #tpu.pipeline_mode<synchronous>, transform_indices = @transform_17, window_bounds = array<i64: 2, 32, 16>}, {pipeline_mode = #tpu.pipeline_mode<synchronous>, transform_indices = @transform_18, window_bounds = array<i64: 2, 16, 32>}, {pipeline_mode = #tpu.pipeline_mode<synchronous>, transform_indices = @transform_19, window_bounds = array<i64: 1, 32>}, {pipeline_mode = #tpu.pipeline_mode<synchronous>, transform_indices = @transform_20, window_bounds = array<i64: 1, 32>}, {pipeline_mode = #tpu.pipeline_mode<synchronous>, transform_indices = @transform_21, window_bounds = array<i64: 2, 32, 16>}, {pipeline_mode = #tpu.pipeline_mode<synchronous>, transform_indices = @transform_22, window_bounds = array<i64: 2, 32, 16>}, {pipeline_mode = #tpu.pipeline_mode<synchronous>, transform_indices = @transform_23, window_bounds = array<i64: 2, 32, 16>}, {pipeline_mode = #tpu.pipeline_mode<synchronous>, transform_indices = @transform_24, window_bounds = array<i64: 2, 16, 32>}, {pipeline_mode = #tpu.pipeline_mode<synchronous>, transform_indices = @transform_25, window_bounds = array<i64: 1, 32>}, {pipeline_mode = #tpu.pipeline_mode<synchronous>, transform_indices = @transform_26, window_bounds = array<i64: 1, 32>}, {pipeline_mode = #tpu.pipeline_mode<synchronous>, transform_indices = @transform_27, window_bounds = array<i64: 32, 64>}, {pipeline_mode = #tpu.pipeline_mode<synchronous>, transform_indices = @transform_28, window_bounds = array<i64: 1, 64>}, {pipeline_mode = #tpu.pipeline_mode<synchronous>, transform_indices = @transform_29, window_bounds = array<i64: 64, 32>}, {pipeline_mode = #tpu.pipeline_mode<synchronous>, transform_indices = @transform_30, window_bounds = array<i64: 1, 32>}, {pipeline_mode = #tpu.pipeline_mode<synchronous>, transform_indices = @transform_31, window_bounds = array<i64: 1, 32>}, {pipeline_mode = #tpu.pipeline_mode<synchronous>, transform_indices = @transform_32, window_bounds = array<i64: 1, 32>}, {pipeline_mode = #tpu.pipeline_mode<synchronous>, transform_indices = @transform_33, window_bounds = array<i64: 16, 32>}]} {
    %c0 = arith.constant 0 : index
    %c0_0 = arith.constant 0 : index
    %0 = vector.load %arg1[%c0, %c0_0] : memref<16x32xf32, #tpu.memory_space<vmem>>, vector<16x32xf32>
    %c0_1 = arith.constant 0 : index
    %c0_2 = arith.constant 0 : index
    %1 = vector.load %arg2[%c0_1, %c0_2] : memref<16x32xf32, #tpu.memory_space<vmem>>, vector<16x32xf32>
    %c0_3 = arith.constant 0 : index
    %c0_4 = arith.constant 0 : index
    %c0_5 = arith.constant 0 : index
    %2 = vector.load %arg3[%c0_3, %c0_4, %c0_5] : memref<2x1x8xf32, #tpu.memory_space<vmem>>, vector<2x1x8xf32>
    %cst = arith.constant 1.000000e+00 : f32
    %3 = vector.broadcast %cst : f32 to vector<2x1x8xf32>
    %4 = arith.subf %2, %3 : vector<2x1x8xf32>
    %cst_6 = arith.constant 1.000000e+09 : f32
    %5 = vector.broadcast %cst_6 : f32 to vector<2x1x8xf32>
    %6 = arith.mulf %4, %5 : vector<2x1x8xf32>
    %7 = tpu.iota {dimensions = array<i32: 0>} : vector<8x8xi32>
    %8 = tpu.iota {dimensions = array<i32: 1>} : vector<8x8xi32>
    %9 = arith.cmpi sle, %8, %7 : vector<8x8xi32>
    %cst_7 = arith.constant 0.000000e+00 : f32
    %cst_8 = arith.constant -1.000000e+09 : f32
    %10 = vector.broadcast %cst_7 : f32 to vector<8x8xf32>
    %11 = vector.broadcast %cst_8 : f32 to vector<8x8xf32>
    %12 = arith.select %9, %10, %11 : vector<8x8xi1>, vector<8x8xf32>
    %13 = vector.shape_cast %12 : vector<8x8xf32> to vector<1x8x8xf32>
    %cst_9 = arith.constant 0.000000e+00 : f32
    %14 = vector.broadcast %cst_9 : f32 to vector<16x32xf32>
    %c0_10 = arith.constant 0 : index
    %c0_11 = arith.constant 0 : index
    %c0_12 = arith.constant 0 : index
    %15 = vector.load %arg4[%c0_10, %c0_11, %c0_12] : memref<2x32x16xf32, #tpu.memory_space<vmem>>, vector<1x32x16xf32>
    %16 = vector.shape_cast %15 : vector<1x32x16xf32> to vector<32x16xf32>
    %cst_13 = arith.constant dense<0.000000e+00> : vector<16x16xf32>
    %17 = tpu.matmul %0, %16, %cst_13 {dimension_numbers = #tpu.dot_dimension_numbers<[1], [0], [0], [1], [0, 0, 1, 1], [], []>} : vector<16x32xf32>, vector<32x16xf32>, vector<16x16xf32> -> vector<16x16xf32>
    %18 = vector.shape_cast %17 : vector<16x16xf32> to vector<2x8x16xf32>
    %c0_14 = arith.constant 0 : index
    %c0_15 = arith.constant 0 : index
    %c0_16 = arith.constant 0 : index
    %19 = vector.load %arg5[%c0_14, %c0_15, %c0_16] : memref<2x32x16xf32, #tpu.memory_space<vmem>>, vector<1x32x16xf32>
    %20 = vector.shape_cast %19 : vector<1x32x16xf32> to vector<32x16xf32>
    %cst_17 = arith.constant dense<0.000000e+00> : vector<16x16xf32>
    %21 = tpu.matmul %0, %20, %cst_17 {dimension_numbers = #tpu.dot_dimension_numbers<[1], [0], [0], [1], [0, 0, 1, 1], [], []>} : vector<16x32xf32>, vector<32x16xf32>, vector<16x16xf32> -> vector<16x16xf32>
    %22 = vector.shape_cast %21 : vector<16x16xf32> to vector<2x8x16xf32>
    %c0_18 = arith.constant 0 : index
    %c0_19 = arith.constant 0 : index
    %c0_20 = arith.constant 0 : index
    %23 = vector.load %arg6[%c0_18, %c0_19, %c0_20] : memref<2x32x16xf32, #tpu.memory_space<vmem>>, vector<1x32x16xf32>
    %24 = vector.shape_cast %23 : vector<1x32x16xf32> to vector<32x16xf32>
    %cst_21 = arith.constant dense<0.000000e+00> : vector<16x16xf32>
    %25 = tpu.matmul %0, %24, %cst_21 {dimension_numbers = #tpu.dot_dimension_numbers<[1], [0], [0], [1], [0, 0, 1, 1], [], []>} : vector<16x32xf32>, vector<32x16xf32>, vector<16x16xf32> -> vector<16x16xf32>
    %26 = vector.shape_cast %25 : vector<16x16xf32> to vector<2x8x16xf32>
    "tpu.trace_start"() <{level = 10 : i32, message = "bqe,bke->bqk"}> : () -> ()
    %cst_22 = arith.constant dense<0.000000e+00> : vector<2x8x8xf32>
    %27 = tpu.matmul %18, %22, %cst_22 {dimension_numbers = #tpu.dot_dimension_numbers<[2], [2], [1], [1], [0, 0, 0, 1, 1, 1], [0], [0]>} : vector<2x8x16xf32>, vector<2x8x16xf32>, vector<2x8x8xf32> -> vector<2x8x8xf32>
    "tpu.trace_stop"() : () -> ()
    %cst_23 = arith.constant 2.500000e-01 : f32
    %28 = vector.broadcast %cst_23 : f32 to vector<2x8x8xf32>
    %29 = arith.mulf %27, %28 : vector<2x8x8xf32>
    %30 = vector.broadcast %6 : vector<2x1x8xf32> to vector<2x8x8xf32>
    %31 = arith.addf %29, %30 : vector<2x8x8xf32>
    %cst_24 = arith.constant dense<0xFF800000> : vector<2x8xf32>
    %32 = vector.multi_reduction <maximumf>, %31, %cst_24 [2] : vector<2x8x8xf32> to vector<2x8xf32>
    %33 = vector.shape_cast %32 : vector<2x8xf32> to vector<2x8x1xf32>
    %34 = vector.broadcast %33 : vector<2x8x1xf32> to vector<2x8x8xf32>
    %35 = arith.subf %31, %34 : vector<2x8x8xf32>
    %36 = math.exp %35 : vector<2x8x8xf32>
    %cst_25 = arith.constant dense<0.000000e+00> : vector<2x8xf32>
    %37 = vector.multi_reduction <add>, %36, %cst_25 [2] : vector<2x8x8xf32> to vector<2x8xf32>
    %38 = vector.shape_cast %37 : vector<2x8xf32> to vector<2x8x1xf32>
    %39 = tpu.reciprocal %38 {approx = true} : vector<2x8x1xf32> -> vector<2x8x1xf32>
    %40 = vector.broadcast %39 : vector<2x8x1xf32> to vector<2x8x8xf32>
    %41 = arith.mulf %36, %40 : vector<2x8x8xf32>
    "tpu.trace_start"() <{level = 10 : i32, message = "bqk,bke->bqe"}> : () -> ()
    %cst_26 = arith.constant dense<0.000000e+00> : vector<2x8x16xf32>
    %42 = tpu.matmul %41, %26, %cst_26 {dimension_numbers = #tpu.dot_dimension_numbers<[2], [1], [1], [2], [0, 0, 0, 1, 1, 2], [0], [0]>} : vector<2x8x8xf32>, vector<2x8x16xf32>, vector<2x8x16xf32> -> vector<2x8x16xf32>
    "tpu.trace_stop"() : () -> ()
    %43 = vector.shape_cast %42 : vector<2x8x16xf32> to vector<16x16xf32>
    %c0_27 = arith.constant 0 : index
    %c0_28 = arith.constant 0 : index
    %c0_29 = arith.constant 0 : index
    %44 = vector.load %arg7[%c0_27, %c0_28, %c0_29] : memref<2x16x32xf32, #tpu.memory_space<vmem>>, vector<1x16x32xf32>
    %45 = vector.shape_cast %44 : vector<1x16x32xf32> to vector<16x32xf32>
    %cst_30 = arith.constant dense<0.000000e+00> : vector<16x32xf32>
    %46 = tpu.matmul %43, %45, %cst_30 {dimension_numbers = #tpu.dot_dimension_numbers<[1], [0], [0], [1], [0, 0, 1, 1], [], []>} : vector<16x16xf32>, vector<16x32xf32>, vector<16x32xf32> -> vector<16x32xf32>
    %47 = arith.addf %14, %46 : vector<16x32xf32>
    %c1 = arith.constant 1 : index
    %c0_31 = arith.constant 0 : index
    %c0_32 = arith.constant 0 : index
    %48 = vector.load %arg4[%c1, %c0_31, %c0_32] : memref<2x32x16xf32, #tpu.memory_space<vmem>>, vector<1x32x16xf32>
    %49 = vector.shape_cast %48 : vector<1x32x16xf32> to vector<32x16xf32>
    %cst_33 = arith.constant dense<0.000000e+00> : vector<16x16xf32>
    %50 = tpu.matmul %0, %49, %cst_33 {dimension_numbers = #tpu.dot_dimension_numbers<[1], [0], [0], [1], [0, 0, 1, 1], [], []>} : vector<16x32xf32>, vector<32x16xf32>, vector<16x16xf32> -> vector<16x16xf32>
    %51 = vector.shape_cast %50 : vector<16x16xf32> to vector<2x8x16xf32>
    %c1_34 = arith.constant 1 : index
    %c0_35 = arith.constant 0 : index
    %c0_36 = arith.constant 0 : index
    %52 = vector.load %arg5[%c1_34, %c0_35, %c0_36] : memref<2x32x16xf32, #tpu.memory_space<vmem>>, vector<1x32x16xf32>
    %53 = vector.shape_cast %52 : vector<1x32x16xf32> to vector<32x16xf32>
    %cst_37 = arith.constant dense<0.000000e+00> : vector<16x16xf32>
    %54 = tpu.matmul %0, %53, %cst_37 {dimension_numbers = #tpu.dot_dimension_numbers<[1], [0], [0], [1], [0, 0, 1, 1], [], []>} : vector<16x32xf32>, vector<32x16xf32>, vector<16x16xf32> -> vector<16x16xf32>
    %55 = vector.shape_cast %54 : vector<16x16xf32> to vector<2x8x16xf32>
    %c1_38 = arith.constant 1 : index
    %c0_39 = arith.constant 0 : index
    %c0_40 = arith.constant 0 : index
    %56 = vector.load %arg6[%c1_38, %c0_39, %c0_40] : memref<2x32x16xf32, #tpu.memory_space<vmem>>, vector<1x32x16xf32>
    %57 = vector.shape_cast %56 : vector<1x32x16xf32> to vector<32x16xf32>
    %cst_41 = arith.constant dense<0.000000e+00> : vector<16x16xf32>
    %58 = tpu.matmul %0, %57, %cst_41 {dimension_numbers = #tpu.dot_dimension_numbers<[1], [0], [0], [1], [0, 0, 1, 1], [], []>} : vector<16x32xf32>, vector<32x16xf32>, vector<16x16xf32> -> vector<16x16xf32>
    %59 = vector.shape_cast %58 : vector<16x16xf32> to vector<2x8x16xf32>
    "tpu.trace_start"() <{level = 10 : i32, message = "bqe,bke->bqk"}> : () -> ()
    %cst_42 = arith.constant dense<0.000000e+00> : vector<2x8x8xf32>
    %60 = tpu.matmul %51, %55, %cst_42 {dimension_numbers = #tpu.dot_dimension_numbers<[2], [2], [1], [1], [0, 0, 0, 1, 1, 1], [0], [0]>} : vector<2x8x16xf32>, vector<2x8x16xf32>, vector<2x8x8xf32> -> vector<2x8x8xf32>
    "tpu.trace_stop"() : () -> ()
    %cst_43 = arith.constant 2.500000e-01 : f32
    %61 = vector.broadcast %cst_43 : f32 to vector<2x8x8xf32>
    %62 = arith.mulf %60, %61 : vector<2x8x8xf32>
    %63 = vector.broadcast %6 : vector<2x1x8xf32> to vector<2x8x8xf32>
    %64 = arith.addf %62, %63 : vector<2x8x8xf32>
    %cst_44 = arith.constant dense<0xFF800000> : vector<2x8xf32>
    %65 = vector.multi_reduction <maximumf>, %64, %cst_44 [2] : vector<2x8x8xf32> to vector<2x8xf32>
    %66 = vector.shape_cast %65 : vector<2x8xf32> to vector<2x8x1xf32>
    %67 = vector.broadcast %66 : vector<2x8x1xf32> to vector<2x8x8xf32>
    %68 = arith.subf %64, %67 : vector<2x8x8xf32>
    %69 = math.exp %68 : vector<2x8x8xf32>
    %cst_45 = arith.constant dense<0.000000e+00> : vector<2x8xf32>
    %70 = vector.multi_reduction <add>, %69, %cst_45 [2] : vector<2x8x8xf32> to vector<2x8xf32>
    %71 = vector.shape_cast %70 : vector<2x8xf32> to vector<2x8x1xf32>
    %72 = tpu.reciprocal %71 {approx = true} : vector<2x8x1xf32> -> vector<2x8x1xf32>
    %73 = vector.broadcast %72 : vector<2x8x1xf32> to vector<2x8x8xf32>
    %74 = arith.mulf %69, %73 : vector<2x8x8xf32>
    "tpu.trace_start"() <{level = 10 : i32, message = "bqk,bke->bqe"}> : () -> ()
    %cst_46 = arith.constant dense<0.000000e+00> : vector<2x8x16xf32>
    %75 = tpu.matmul %74, %59, %cst_46 {dimension_numbers = #tpu.dot_dimension_numbers<[2], [1], [1], [2], [0, 0, 0, 1, 1, 2], [0], [0]>} : vector<2x8x8xf32>, vector<2x8x16xf32>, vector<2x8x16xf32> -> vector<2x8x16xf32>
    "tpu.trace_stop"() : () -> ()
    %76 = vector.shape_cast %75 : vector<2x8x16xf32> to vector<16x16xf32>
    %c1_47 = arith.constant 1 : index
    %c0_48 = arith.constant 0 : index
    %c0_49 = arith.constant 0 : index
    %77 = vector.load %arg7[%c1_47, %c0_48, %c0_49] : memref<2x16x32xf32, #tpu.memory_space<vmem>>, vector<1x16x32xf32>
    %78 = vector.shape_cast %77 : vector<1x16x32xf32> to vector<16x32xf32>
    %cst_50 = arith.constant dense<0.000000e+00> : vector<16x32xf32>
    %79 = tpu.matmul %76, %78, %cst_50 {dimension_numbers = #tpu.dot_dimension_numbers<[1], [0], [0], [1], [0, 0, 1, 1], [], []>} : vector<16x16xf32>, vector<16x32xf32>, vector<16x32xf32> -> vector<16x32xf32>
    %80 = arith.addf %47, %79 : vector<16x32xf32>
    %81 = arith.addf %0, %80 : vector<16x32xf32>
    %c0_51 = arith.constant 0 : index
    %c0_52 = arith.constant 0 : index
    %82 = vector.load %arg8[%c0_51, %c0_52] : memref<1x32xf32, #tpu.memory_space<vmem>>, vector<1x32xf32>
    %c0_53 = arith.constant 0 : index
    %c0_54 = arith.constant 0 : index
    %83 = vector.load %arg9[%c0_53, %c0_54] : memref<1x32xf32, #tpu.memory_space<vmem>>, vector<1x32xf32>
    %cst_55 = arith.constant dense<0.000000e+00> : vector<16xf32>
    %84 = vector.multi_reduction <add>, %81, %cst_55 [1] : vector<16x32xf32> to vector<16xf32>
    %85 = vector.shape_cast %84 : vector<16xf32> to vector<16x1xf32>
    %cst_56 = arith.constant 3.200000e+01 : f32
    %86 = vector.broadcast %cst_56 : f32 to vector<16x1xf32>
    %87 = arith.divf %85, %86 : vector<16x1xf32>
    %88 = vector.broadcast %87 : vector<16x1xf32> to vector<16x32xf32>
    %89 = arith.subf %81, %88 : vector<16x32xf32>
    %90 = arith.mulf %89, %89 : vector<16x32xf32>
    %cst_57 = arith.constant dense<0.000000e+00> : vector<16xf32>
    %91 = vector.multi_reduction <add>, %90, %cst_57 [1] : vector<16x32xf32> to vector<16xf32>
    %92 = vector.shape_cast %91 : vector<16xf32> to vector<16x1xf32>
    %cst_58 = arith.constant 3.200000e+01 : f32
    %93 = vector.broadcast %cst_58 : f32 to vector<16x1xf32>
    %94 = arith.divf %92, %93 : vector<16x1xf32>
    %95 = vector.broadcast %87 : vector<16x1xf32> to vector<16x32xf32>
    %96 = arith.subf %81, %95 : vector<16x32xf32>
    %cst_59 = arith.constant 9.99999974E-6 : f32
    %97 = vector.broadcast %cst_59 : f32 to vector<16x1xf32>
    %98 = arith.addf %94, %97 : vector<16x1xf32>
    %99 = math.rsqrt %98 : vector<16x1xf32>
    %100 = vector.broadcast %99 : vector<16x1xf32> to vector<16x32xf32>
    %101 = arith.mulf %96, %100 : vector<16x32xf32>
    %102 = vector.broadcast %82 : vector<1x32xf32> to vector<16x32xf32>
    %103 = arith.mulf %101, %102 : vector<16x32xf32>
    %104 = vector.broadcast %83 : vector<1x32xf32> to vector<16x32xf32>
    %105 = arith.addf %103, %104 : vector<16x32xf32>
    %c0_60 = arith.constant 0 : index
    %c0_61 = arith.constant 0 : index
    %106 = vector.load %arg10[%c0_60, %c0_61] : memref<32x64xf32, #tpu.memory_space<vmem>>, vector<32x64xf32>
    %cst_62 = arith.constant dense<0.000000e+00> : vector<16x64xf32>
    %107 = tpu.matmul %105, %106, %cst_62 {dimension_numbers = #tpu.dot_dimension_numbers<[1], [0], [0], [1], [0, 0, 1, 1], [], []>} : vector<16x32xf32>, vector<32x64xf32>, vector<16x64xf32> -> vector<16x64xf32>
    %c0_63 = arith.constant 0 : index
    %c0_64 = arith.constant 0 : index
    %108 = vector.load %arg11[%c0_63, %c0_64] : memref<1x64xf32, #tpu.memory_space<vmem>>, vector<1x64xf32>
    %109 = vector.broadcast %108 : vector<1x64xf32> to vector<16x64xf32>
    %110 = arith.addf %107, %109 : vector<16x64xf32>
    %cst_65 = arith.constant 0.000000e+00 : f32
    %111 = vector.broadcast %cst_65 : f32 to vector<16x64xf32>
    %112 = arith.maximumf %110, %111 : vector<16x64xf32>
    %c0_66 = arith.constant 0 : index
    %c0_67 = arith.constant 0 : index
    %113 = vector.load %arg12[%c0_66, %c0_67] : memref<64x32xf32, #tpu.memory_space<vmem>>, vector<64x32xf32>
    %cst_68 = arith.constant dense<0.000000e+00> : vector<16x32xf32>
    %114 = tpu.matmul %112, %113, %cst_68 {dimension_numbers = #tpu.dot_dimension_numbers<[1], [0], [0], [1], [0, 0, 1, 1], [], []>} : vector<16x64xf32>, vector<64x32xf32>, vector<16x32xf32> -> vector<16x32xf32>
    %c0_69 = arith.constant 0 : index
    %c0_70 = arith.constant 0 : index
    %115 = vector.load %arg13[%c0_69, %c0_70] : memref<1x32xf32, #tpu.memory_space<vmem>>, vector<1x32xf32>
    %116 = vector.broadcast %115 : vector<1x32xf32> to vector<16x32xf32>
    %117 = arith.addf %114, %116 : vector<16x32xf32>
    %118 = arith.addf %105, %117 : vector<16x32xf32>
    %c0_71 = arith.constant 0 : index
    %c0_72 = arith.constant 0 : index
    %119 = vector.load %arg14[%c0_71, %c0_72] : memref<1x32xf32, #tpu.memory_space<vmem>>, vector<1x32xf32>
    %c0_73 = arith.constant 0 : index
    %c0_74 = arith.constant 0 : index
    %120 = vector.load %arg15[%c0_73, %c0_74] : memref<1x32xf32, #tpu.memory_space<vmem>>, vector<1x32xf32>
    %cst_75 = arith.constant dense<0.000000e+00> : vector<16xf32>
    %121 = vector.multi_reduction <add>, %118, %cst_75 [1] : vector<16x32xf32> to vector<16xf32>
    %122 = vector.shape_cast %121 : vector<16xf32> to vector<16x1xf32>
    %cst_76 = arith.constant 3.200000e+01 : f32
    %123 = vector.broadcast %cst_76 : f32 to vector<16x1xf32>
    %124 = arith.divf %122, %123 : vector<16x1xf32>
    %125 = vector.broadcast %124 : vector<16x1xf32> to vector<16x32xf32>
    %126 = arith.subf %118, %125 : vector<16x32xf32>
    %127 = arith.mulf %126, %126 : vector<16x32xf32>
    %cst_77 = arith.constant dense<0.000000e+00> : vector<16xf32>
    %128 = vector.multi_reduction <add>, %127, %cst_77 [1] : vector<16x32xf32> to vector<16xf32>
    %129 = vector.shape_cast %128 : vector<16xf32> to vector<16x1xf32>
    %cst_78 = arith.constant 3.200000e+01 : f32
    %130 = vector.broadcast %cst_78 : f32 to vector<16x1xf32>
    %131 = arith.divf %129, %130 : vector<16x1xf32>
    %132 = vector.broadcast %124 : vector<16x1xf32> to vector<16x32xf32>
    %133 = arith.subf %118, %132 : vector<16x32xf32>
    %cst_79 = arith.constant 9.99999974E-6 : f32
    %134 = vector.broadcast %cst_79 : f32 to vector<16x1xf32>
    %135 = arith.addf %131, %134 : vector<16x1xf32>
    %136 = math.rsqrt %135 : vector<16x1xf32>
    %137 = vector.broadcast %136 : vector<16x1xf32> to vector<16x32xf32>
    %138 = arith.mulf %133, %137 : vector<16x32xf32>
    %139 = vector.broadcast %119 : vector<1x32xf32> to vector<16x32xf32>
    %140 = arith.mulf %138, %139 : vector<16x32xf32>
    %141 = vector.broadcast %120 : vector<1x32xf32> to vector<16x32xf32>
    %142 = arith.addf %140, %141 : vector<16x32xf32>
    %cst_80 = arith.constant 0.000000e+00 : f32
    %143 = vector.broadcast %cst_80 : f32 to vector<16x32xf32>
    %c0_81 = arith.constant 0 : index
    %c0_82 = arith.constant 0 : index
    %c0_83 = arith.constant 0 : index
    %144 = vector.load %arg16[%c0_81, %c0_82, %c0_83] : memref<2x32x16xf32, #tpu.memory_space<vmem>>, vector<1x32x16xf32>
    %145 = vector.shape_cast %144 : vector<1x32x16xf32> to vector<32x16xf32>
    %cst_84 = arith.constant dense<0.000000e+00> : vector<16x16xf32>
    %146 = tpu.matmul %1, %145, %cst_84 {dimension_numbers = #tpu.dot_dimension_numbers<[1], [0], [0], [1], [0, 0, 1, 1], [], []>} : vector<16x32xf32>, vector<32x16xf32>, vector<16x16xf32> -> vector<16x16xf32>
    %147 = vector.shape_cast %146 : vector<16x16xf32> to vector<2x8x16xf32>
    %c0_85 = arith.constant 0 : index
    %c0_86 = arith.constant 0 : index
    %c0_87 = arith.constant 0 : index
    %148 = vector.load %arg17[%c0_85, %c0_86, %c0_87] : memref<2x32x16xf32, #tpu.memory_space<vmem>>, vector<1x32x16xf32>
    %149 = vector.shape_cast %148 : vector<1x32x16xf32> to vector<32x16xf32>
    %cst_88 = arith.constant dense<0.000000e+00> : vector<16x16xf32>
    %150 = tpu.matmul %1, %149, %cst_88 {dimension_numbers = #tpu.dot_dimension_numbers<[1], [0], [0], [1], [0, 0, 1, 1], [], []>} : vector<16x32xf32>, vector<32x16xf32>, vector<16x16xf32> -> vector<16x16xf32>
    %151 = vector.shape_cast %150 : vector<16x16xf32> to vector<2x8x16xf32>
    %c0_89 = arith.constant 0 : index
    %c0_90 = arith.constant 0 : index
    %c0_91 = arith.constant 0 : index
    %152 = vector.load %arg18[%c0_89, %c0_90, %c0_91] : memref<2x32x16xf32, #tpu.memory_space<vmem>>, vector<1x32x16xf32>
    %153 = vector.shape_cast %152 : vector<1x32x16xf32> to vector<32x16xf32>
    %cst_92 = arith.constant dense<0.000000e+00> : vector<16x16xf32>
    %154 = tpu.matmul %1, %153, %cst_92 {dimension_numbers = #tpu.dot_dimension_numbers<[1], [0], [0], [1], [0, 0, 1, 1], [], []>} : vector<16x32xf32>, vector<32x16xf32>, vector<16x16xf32> -> vector<16x16xf32>
    %155 = vector.shape_cast %154 : vector<16x16xf32> to vector<2x8x16xf32>
    "tpu.trace_start"() <{level = 10 : i32, message = "bqe,bke->bqk"}> : () -> ()
    %cst_93 = arith.constant dense<0.000000e+00> : vector<2x8x8xf32>
    %156 = tpu.matmul %147, %151, %cst_93 {dimension_numbers = #tpu.dot_dimension_numbers<[2], [2], [1], [1], [0, 0, 0, 1, 1, 1], [0], [0]>} : vector<2x8x16xf32>, vector<2x8x16xf32>, vector<2x8x8xf32> -> vector<2x8x8xf32>
    "tpu.trace_stop"() : () -> ()
    %cst_94 = arith.constant 2.500000e-01 : f32
    %157 = vector.broadcast %cst_94 : f32 to vector<2x8x8xf32>
    %158 = arith.mulf %156, %157 : vector<2x8x8xf32>
    %159 = vector.broadcast %13 : vector<1x8x8xf32> to vector<2x8x8xf32>
    %160 = arith.addf %158, %159 : vector<2x8x8xf32>
    %cst_95 = arith.constant dense<0xFF800000> : vector<2x8xf32>
    %161 = vector.multi_reduction <maximumf>, %160, %cst_95 [2] : vector<2x8x8xf32> to vector<2x8xf32>
    %162 = vector.shape_cast %161 : vector<2x8xf32> to vector<2x8x1xf32>
    %163 = vector.broadcast %162 : vector<2x8x1xf32> to vector<2x8x8xf32>
    %164 = arith.subf %160, %163 : vector<2x8x8xf32>
    %165 = math.exp %164 : vector<2x8x8xf32>
    %cst_96 = arith.constant dense<0.000000e+00> : vector<2x8xf32>
    %166 = vector.multi_reduction <add>, %165, %cst_96 [2] : vector<2x8x8xf32> to vector<2x8xf32>
    %167 = vector.shape_cast %166 : vector<2x8xf32> to vector<2x8x1xf32>
    %168 = tpu.reciprocal %167 {approx = true} : vector<2x8x1xf32> -> vector<2x8x1xf32>
    %169 = vector.broadcast %168 : vector<2x8x1xf32> to vector<2x8x8xf32>
    %170 = arith.mulf %165, %169 : vector<2x8x8xf32>
    "tpu.trace_start"() <{level = 10 : i32, message = "bqk,bke->bqe"}> : () -> ()
    %cst_97 = arith.constant dense<0.000000e+00> : vector<2x8x16xf32>
    %171 = tpu.matmul %170, %155, %cst_97 {dimension_numbers = #tpu.dot_dimension_numbers<[2], [1], [1], [2], [0, 0, 0, 1, 1, 2], [0], [0]>} : vector<2x8x8xf32>, vector<2x8x16xf32>, vector<2x8x16xf32> -> vector<2x8x16xf32>
    "tpu.trace_stop"() : () -> ()
    %172 = vector.shape_cast %171 : vector<2x8x16xf32> to vector<16x16xf32>
    %c0_98 = arith.constant 0 : index
    %c0_99 = arith.constant 0 : index
    %c0_100 = arith.constant 0 : index
    %173 = vector.load %arg19[%c0_98, %c0_99, %c0_100] : memref<2x16x32xf32, #tpu.memory_space<vmem>>, vector<1x16x32xf32>
    %174 = vector.shape_cast %173 : vector<1x16x32xf32> to vector<16x32xf32>
    %cst_101 = arith.constant dense<0.000000e+00> : vector<16x32xf32>
    %175 = tpu.matmul %172, %174, %cst_101 {dimension_numbers = #tpu.dot_dimension_numbers<[1], [0], [0], [1], [0, 0, 1, 1], [], []>} : vector<16x16xf32>, vector<16x32xf32>, vector<16x32xf32> -> vector<16x32xf32>
    %176 = arith.addf %143, %175 : vector<16x32xf32>
    %c1_102 = arith.constant 1 : index
    %c0_103 = arith.constant 0 : index
    %c0_104 = arith.constant 0 : index
    %177 = vector.load %arg16[%c1_102, %c0_103, %c0_104] : memref<2x32x16xf32, #tpu.memory_space<vmem>>, vector<1x32x16xf32>
    %178 = vector.shape_cast %177 : vector<1x32x16xf32> to vector<32x16xf32>
    %cst_105 = arith.constant dense<0.000000e+00> : vector<16x16xf32>
    %179 = tpu.matmul %1, %178, %cst_105 {dimension_numbers = #tpu.dot_dimension_numbers<[1], [0], [0], [1], [0, 0, 1, 1], [], []>} : vector<16x32xf32>, vector<32x16xf32>, vector<16x16xf32> -> vector<16x16xf32>
    %180 = vector.shape_cast %179 : vector<16x16xf32> to vector<2x8x16xf32>
    %c1_106 = arith.constant 1 : index
    %c0_107 = arith.constant 0 : index
    %c0_108 = arith.constant 0 : index
    %181 = vector.load %arg17[%c1_106, %c0_107, %c0_108] : memref<2x32x16xf32, #tpu.memory_space<vmem>>, vector<1x32x16xf32>
    %182 = vector.shape_cast %181 : vector<1x32x16xf32> to vector<32x16xf32>
    %cst_109 = arith.constant dense<0.000000e+00> : vector<16x16xf32>
    %183 = tpu.matmul %1, %182, %cst_109 {dimension_numbers = #tpu.dot_dimension_numbers<[1], [0], [0], [1], [0, 0, 1, 1], [], []>} : vector<16x32xf32>, vector<32x16xf32>, vector<16x16xf32> -> vector<16x16xf32>
    %184 = vector.shape_cast %183 : vector<16x16xf32> to vector<2x8x16xf32>
    %c1_110 = arith.constant 1 : index
    %c0_111 = arith.constant 0 : index
    %c0_112 = arith.constant 0 : index
    %185 = vector.load %arg18[%c1_110, %c0_111, %c0_112] : memref<2x32x16xf32, #tpu.memory_space<vmem>>, vector<1x32x16xf32>
    %186 = vector.shape_cast %185 : vector<1x32x16xf32> to vector<32x16xf32>
    %cst_113 = arith.constant dense<0.000000e+00> : vector<16x16xf32>
    %187 = tpu.matmul %1, %186, %cst_113 {dimension_numbers = #tpu.dot_dimension_numbers<[1], [0], [0], [1], [0, 0, 1, 1], [], []>} : vector<16x32xf32>, vector<32x16xf32>, vector<16x16xf32> -> vector<16x16xf32>
    %188 = vector.shape_cast %187 : vector<16x16xf32> to vector<2x8x16xf32>
    "tpu.trace_start"() <{level = 10 : i32, message = "bqe,bke->bqk"}> : () -> ()
    %cst_114 = arith.constant dense<0.000000e+00> : vector<2x8x8xf32>
    %189 = tpu.matmul %180, %184, %cst_114 {dimension_numbers = #tpu.dot_dimension_numbers<[2], [2], [1], [1], [0, 0, 0, 1, 1, 1], [0], [0]>} : vector<2x8x16xf32>, vector<2x8x16xf32>, vector<2x8x8xf32> -> vector<2x8x8xf32>
    "tpu.trace_stop"() : () -> ()
    %cst_115 = arith.constant 2.500000e-01 : f32
    %190 = vector.broadcast %cst_115 : f32 to vector<2x8x8xf32>
    %191 = arith.mulf %189, %190 : vector<2x8x8xf32>
    %192 = vector.broadcast %13 : vector<1x8x8xf32> to vector<2x8x8xf32>
    %193 = arith.addf %191, %192 : vector<2x8x8xf32>
    %cst_116 = arith.constant dense<0xFF800000> : vector<2x8xf32>
    %194 = vector.multi_reduction <maximumf>, %193, %cst_116 [2] : vector<2x8x8xf32> to vector<2x8xf32>
    %195 = vector.shape_cast %194 : vector<2x8xf32> to vector<2x8x1xf32>
    %196 = vector.broadcast %195 : vector<2x8x1xf32> to vector<2x8x8xf32>
    %197 = arith.subf %193, %196 : vector<2x8x8xf32>
    %198 = math.exp %197 : vector<2x8x8xf32>
    %cst_117 = arith.constant dense<0.000000e+00> : vector<2x8xf32>
    %199 = vector.multi_reduction <add>, %198, %cst_117 [2] : vector<2x8x8xf32> to vector<2x8xf32>
    %200 = vector.shape_cast %199 : vector<2x8xf32> to vector<2x8x1xf32>
    %201 = tpu.reciprocal %200 {approx = true} : vector<2x8x1xf32> -> vector<2x8x1xf32>
    %202 = vector.broadcast %201 : vector<2x8x1xf32> to vector<2x8x8xf32>
    %203 = arith.mulf %198, %202 : vector<2x8x8xf32>
    "tpu.trace_start"() <{level = 10 : i32, message = "bqk,bke->bqe"}> : () -> ()
    %cst_118 = arith.constant dense<0.000000e+00> : vector<2x8x16xf32>
    %204 = tpu.matmul %203, %188, %cst_118 {dimension_numbers = #tpu.dot_dimension_numbers<[2], [1], [1], [2], [0, 0, 0, 1, 1, 2], [0], [0]>} : vector<2x8x8xf32>, vector<2x8x16xf32>, vector<2x8x16xf32> -> vector<2x8x16xf32>
    "tpu.trace_stop"() : () -> ()
    %205 = vector.shape_cast %204 : vector<2x8x16xf32> to vector<16x16xf32>
    %c1_119 = arith.constant 1 : index
    %c0_120 = arith.constant 0 : index
    %c0_121 = arith.constant 0 : index
    %206 = vector.load %arg19[%c1_119, %c0_120, %c0_121] : memref<2x16x32xf32, #tpu.memory_space<vmem>>, vector<1x16x32xf32>
    %207 = vector.shape_cast %206 : vector<1x16x32xf32> to vector<16x32xf32>
    %cst_122 = arith.constant dense<0.000000e+00> : vector<16x32xf32>
    %208 = tpu.matmul %205, %207, %cst_122 {dimension_numbers = #tpu.dot_dimension_numbers<[1], [0], [0], [1], [0, 0, 1, 1], [], []>} : vector<16x16xf32>, vector<16x32xf32>, vector<16x32xf32> -> vector<16x32xf32>
    %209 = arith.addf %176, %208 : vector<16x32xf32>
    %210 = arith.addf %1, %209 : vector<16x32xf32>
    %c0_123 = arith.constant 0 : index
    %c0_124 = arith.constant 0 : index
    %211 = vector.load %arg20[%c0_123, %c0_124] : memref<1x32xf32, #tpu.memory_space<vmem>>, vector<1x32xf32>
    %c0_125 = arith.constant 0 : index
    %c0_126 = arith.constant 0 : index
    %212 = vector.load %arg21[%c0_125, %c0_126] : memref<1x32xf32, #tpu.memory_space<vmem>>, vector<1x32xf32>
    %cst_127 = arith.constant dense<0.000000e+00> : vector<16xf32>
    %213 = vector.multi_reduction <add>, %210, %cst_127 [1] : vector<16x32xf32> to vector<16xf32>
    %214 = vector.shape_cast %213 : vector<16xf32> to vector<16x1xf32>
    %cst_128 = arith.constant 3.200000e+01 : f32
    %215 = vector.broadcast %cst_128 : f32 to vector<16x1xf32>
    %216 = arith.divf %214, %215 : vector<16x1xf32>
    %217 = vector.broadcast %216 : vector<16x1xf32> to vector<16x32xf32>
    %218 = arith.subf %210, %217 : vector<16x32xf32>
    %219 = arith.mulf %218, %218 : vector<16x32xf32>
    %cst_129 = arith.constant dense<0.000000e+00> : vector<16xf32>
    %220 = vector.multi_reduction <add>, %219, %cst_129 [1] : vector<16x32xf32> to vector<16xf32>
    %221 = vector.shape_cast %220 : vector<16xf32> to vector<16x1xf32>
    %cst_130 = arith.constant 3.200000e+01 : f32
    %222 = vector.broadcast %cst_130 : f32 to vector<16x1xf32>
    %223 = arith.divf %221, %222 : vector<16x1xf32>
    %224 = vector.broadcast %216 : vector<16x1xf32> to vector<16x32xf32>
    %225 = arith.subf %210, %224 : vector<16x32xf32>
    %cst_131 = arith.constant 9.99999974E-6 : f32
    %226 = vector.broadcast %cst_131 : f32 to vector<16x1xf32>
    %227 = arith.addf %223, %226 : vector<16x1xf32>
    %228 = math.rsqrt %227 : vector<16x1xf32>
    %229 = vector.broadcast %228 : vector<16x1xf32> to vector<16x32xf32>
    %230 = arith.mulf %225, %229 : vector<16x32xf32>
    %231 = vector.broadcast %211 : vector<1x32xf32> to vector<16x32xf32>
    %232 = arith.mulf %230, %231 : vector<16x32xf32>
    %233 = vector.broadcast %212 : vector<1x32xf32> to vector<16x32xf32>
    %234 = arith.addf %232, %233 : vector<16x32xf32>
    %cst_132 = arith.constant 0.000000e+00 : f32
    %235 = vector.broadcast %cst_132 : f32 to vector<16x32xf32>
    %c0_133 = arith.constant 0 : index
    %c0_134 = arith.constant 0 : index
    %c0_135 = arith.constant 0 : index
    %236 = vector.load %arg22[%c0_133, %c0_134, %c0_135] : memref<2x32x16xf32, #tpu.memory_space<vmem>>, vector<1x32x16xf32>
    %237 = vector.shape_cast %236 : vector<1x32x16xf32> to vector<32x16xf32>
    %cst_136 = arith.constant dense<0.000000e+00> : vector<16x16xf32>
    %238 = tpu.matmul %234, %237, %cst_136 {dimension_numbers = #tpu.dot_dimension_numbers<[1], [0], [0], [1], [0, 0, 1, 1], [], []>} : vector<16x32xf32>, vector<32x16xf32>, vector<16x16xf32> -> vector<16x16xf32>
    %239 = vector.shape_cast %238 : vector<16x16xf32> to vector<2x8x16xf32>
    %c0_137 = arith.constant 0 : index
    %c0_138 = arith.constant 0 : index
    %c0_139 = arith.constant 0 : index
    %240 = vector.load %arg23[%c0_137, %c0_138, %c0_139] : memref<2x32x16xf32, #tpu.memory_space<vmem>>, vector<1x32x16xf32>
    %241 = vector.shape_cast %240 : vector<1x32x16xf32> to vector<32x16xf32>
    %cst_140 = arith.constant dense<0.000000e+00> : vector<16x16xf32>
    %242 = tpu.matmul %142, %241, %cst_140 {dimension_numbers = #tpu.dot_dimension_numbers<[1], [0], [0], [1], [0, 0, 1, 1], [], []>} : vector<16x32xf32>, vector<32x16xf32>, vector<16x16xf32> -> vector<16x16xf32>
    %243 = vector.shape_cast %242 : vector<16x16xf32> to vector<2x8x16xf32>
    %c0_141 = arith.constant 0 : index
    %c0_142 = arith.constant 0 : index
    %c0_143 = arith.constant 0 : index
    %244 = vector.load %arg24[%c0_141, %c0_142, %c0_143] : memref<2x32x16xf32, #tpu.memory_space<vmem>>, vector<1x32x16xf32>
    %245 = vector.shape_cast %244 : vector<1x32x16xf32> to vector<32x16xf32>
    %cst_144 = arith.constant dense<0.000000e+00> : vector<16x16xf32>
    %246 = tpu.matmul %142, %245, %cst_144 {dimension_numbers = #tpu.dot_dimension_numbers<[1], [0], [0], [1], [0, 0, 1, 1], [], []>} : vector<16x32xf32>, vector<32x16xf32>, vector<16x16xf32> -> vector<16x16xf32>
    %247 = vector.shape_cast %246 : vector<16x16xf32> to vector<2x8x16xf32>
    "tpu.trace_start"() <{level = 10 : i32, message = "bqe,bke->bqk"}> : () -> ()
    %cst_145 = arith.constant dense<0.000000e+00> : vector<2x8x8xf32>
    %248 = tpu.matmul %239, %243, %cst_145 {dimension_numbers = #tpu.dot_dimension_numbers<[2], [2], [1], [1], [0, 0, 0, 1, 1, 1], [0], [0]>} : vector<2x8x16xf32>, vector<2x8x16xf32>, vector<2x8x8xf32> -> vector<2x8x8xf32>
    "tpu.trace_stop"() : () -> ()
    %cst_146 = arith.constant 2.500000e-01 : f32
    %249 = vector.broadcast %cst_146 : f32 to vector<2x8x8xf32>
    %250 = arith.mulf %248, %249 : vector<2x8x8xf32>
    %251 = vector.broadcast %6 : vector<2x1x8xf32> to vector<2x8x8xf32>
    %252 = arith.addf %250, %251 : vector<2x8x8xf32>
    %cst_147 = arith.constant dense<0xFF800000> : vector<2x8xf32>
    %253 = vector.multi_reduction <maximumf>, %252, %cst_147 [2] : vector<2x8x8xf32> to vector<2x8xf32>
    %254 = vector.shape_cast %253 : vector<2x8xf32> to vector<2x8x1xf32>
    %255 = vector.broadcast %254 : vector<2x8x1xf32> to vector<2x8x8xf32>
    %256 = arith.subf %252, %255 : vector<2x8x8xf32>
    %257 = math.exp %256 : vector<2x8x8xf32>
    %cst_148 = arith.constant dense<0.000000e+00> : vector<2x8xf32>
    %258 = vector.multi_reduction <add>, %257, %cst_148 [2] : vector<2x8x8xf32> to vector<2x8xf32>
    %259 = vector.shape_cast %258 : vector<2x8xf32> to vector<2x8x1xf32>
    %260 = tpu.reciprocal %259 {approx = true} : vector<2x8x1xf32> -> vector<2x8x1xf32>
    %261 = vector.broadcast %260 : vector<2x8x1xf32> to vector<2x8x8xf32>
    %262 = arith.mulf %257, %261 : vector<2x8x8xf32>
    "tpu.trace_start"() <{level = 10 : i32, message = "bqk,bke->bqe"}> : () -> ()
    %cst_149 = arith.constant dense<0.000000e+00> : vector<2x8x16xf32>
    %263 = tpu.matmul %262, %247, %cst_149 {dimension_numbers = #tpu.dot_dimension_numbers<[2], [1], [1], [2], [0, 0, 0, 1, 1, 2], [0], [0]>} : vector<2x8x8xf32>, vector<2x8x16xf32>, vector<2x8x16xf32> -> vector<2x8x16xf32>
    "tpu.trace_stop"() : () -> ()
    %264 = vector.shape_cast %263 : vector<2x8x16xf32> to vector<16x16xf32>
    %c0_150 = arith.constant 0 : index
    %c0_151 = arith.constant 0 : index
    %c0_152 = arith.constant 0 : index
    %265 = vector.load %arg25[%c0_150, %c0_151, %c0_152] : memref<2x16x32xf32, #tpu.memory_space<vmem>>, vector<1x16x32xf32>
    %266 = vector.shape_cast %265 : vector<1x16x32xf32> to vector<16x32xf32>
    %cst_153 = arith.constant dense<0.000000e+00> : vector<16x32xf32>
    %267 = tpu.matmul %264, %266, %cst_153 {dimension_numbers = #tpu.dot_dimension_numbers<[1], [0], [0], [1], [0, 0, 1, 1], [], []>} : vector<16x16xf32>, vector<16x32xf32>, vector<16x32xf32> -> vector<16x32xf32>
    %268 = arith.addf %235, %267 : vector<16x32xf32>
    %c1_154 = arith.constant 1 : index
    %c0_155 = arith.constant 0 : index
    %c0_156 = arith.constant 0 : index
    %269 = vector.load %arg22[%c1_154, %c0_155, %c0_156] : memref<2x32x16xf32, #tpu.memory_space<vmem>>, vector<1x32x16xf32>
    %270 = vector.shape_cast %269 : vector<1x32x16xf32> to vector<32x16xf32>
    %cst_157 = arith.constant dense<0.000000e+00> : vector<16x16xf32>
    %271 = tpu.matmul %234, %270, %cst_157 {dimension_numbers = #tpu.dot_dimension_numbers<[1], [0], [0], [1], [0, 0, 1, 1], [], []>} : vector<16x32xf32>, vector<32x16xf32>, vector<16x16xf32> -> vector<16x16xf32>
    %272 = vector.shape_cast %271 : vector<16x16xf32> to vector<2x8x16xf32>
    %c1_158 = arith.constant 1 : index
    %c0_159 = arith.constant 0 : index
    %c0_160 = arith.constant 0 : index
    %273 = vector.load %arg23[%c1_158, %c0_159, %c0_160] : memref<2x32x16xf32, #tpu.memory_space<vmem>>, vector<1x32x16xf32>
    %274 = vector.shape_cast %273 : vector<1x32x16xf32> to vector<32x16xf32>
    %cst_161 = arith.constant dense<0.000000e+00> : vector<16x16xf32>
    %275 = tpu.matmul %142, %274, %cst_161 {dimension_numbers = #tpu.dot_dimension_numbers<[1], [0], [0], [1], [0, 0, 1, 1], [], []>} : vector<16x32xf32>, vector<32x16xf32>, vector<16x16xf32> -> vector<16x16xf32>
    %276 = vector.shape_cast %275 : vector<16x16xf32> to vector<2x8x16xf32>
    %c1_162 = arith.constant 1 : index
    %c0_163 = arith.constant 0 : index
    %c0_164 = arith.constant 0 : index
    %277 = vector.load %arg24[%c1_162, %c0_163, %c0_164] : memref<2x32x16xf32, #tpu.memory_space<vmem>>, vector<1x32x16xf32>
    %278 = vector.shape_cast %277 : vector<1x32x16xf32> to vector<32x16xf32>
    %cst_165 = arith.constant dense<0.000000e+00> : vector<16x16xf32>
    %279 = tpu.matmul %142, %278, %cst_165 {dimension_numbers = #tpu.dot_dimension_numbers<[1], [0], [0], [1], [0, 0, 1, 1], [], []>} : vector<16x32xf32>, vector<32x16xf32>, vector<16x16xf32> -> vector<16x16xf32>
    %280 = vector.shape_cast %279 : vector<16x16xf32> to vector<2x8x16xf32>
    "tpu.trace_start"() <{level = 10 : i32, message = "bqe,bke->bqk"}> : () -> ()
    %cst_166 = arith.constant dense<0.000000e+00> : vector<2x8x8xf32>
    %281 = tpu.matmul %272, %276, %cst_166 {dimension_numbers = #tpu.dot_dimension_numbers<[2], [2], [1], [1], [0, 0, 0, 1, 1, 1], [0], [0]>} : vector<2x8x16xf32>, vector<2x8x16xf32>, vector<2x8x8xf32> -> vector<2x8x8xf32>
    "tpu.trace_stop"() : () -> ()
    %cst_167 = arith.constant 2.500000e-01 : f32
    %282 = vector.broadcast %cst_167 : f32 to vector<2x8x8xf32>
    %283 = arith.mulf %281, %282 : vector<2x8x8xf32>
    %284 = vector.broadcast %6 : vector<2x1x8xf32> to vector<2x8x8xf32>
    %285 = arith.addf %283, %284 : vector<2x8x8xf32>
    %cst_168 = arith.constant dense<0xFF800000> : vector<2x8xf32>
    %286 = vector.multi_reduction <maximumf>, %285, %cst_168 [2] : vector<2x8x8xf32> to vector<2x8xf32>
    %287 = vector.shape_cast %286 : vector<2x8xf32> to vector<2x8x1xf32>
    %288 = vector.broadcast %287 : vector<2x8x1xf32> to vector<2x8x8xf32>
    %289 = arith.subf %285, %288 : vector<2x8x8xf32>
    %290 = math.exp %289 : vector<2x8x8xf32>
    %cst_169 = arith.constant dense<0.000000e+00> : vector<2x8xf32>
    %291 = vector.multi_reduction <add>, %290, %cst_169 [2] : vector<2x8x8xf32> to vector<2x8xf32>
    %292 = vector.shape_cast %291 : vector<2x8xf32> to vector<2x8x1xf32>
    %293 = tpu.reciprocal %292 {approx = true} : vector<2x8x1xf32> -> vector<2x8x1xf32>
    %294 = vector.broadcast %293 : vector<2x8x1xf32> to vector<2x8x8xf32>
    %295 = arith.mulf %290, %294 : vector<2x8x8xf32>
    "tpu.trace_start"() <{level = 10 : i32, message = "bqk,bke->bqe"}> : () -> ()
    %cst_170 = arith.constant dense<0.000000e+00> : vector<2x8x16xf32>
    %296 = tpu.matmul %295, %280, %cst_170 {dimension_numbers = #tpu.dot_dimension_numbers<[2], [1], [1], [2], [0, 0, 0, 1, 1, 2], [0], [0]>} : vector<2x8x8xf32>, vector<2x8x16xf32>, vector<2x8x16xf32> -> vector<2x8x16xf32>
    "tpu.trace_stop"() : () -> ()
    %297 = vector.shape_cast %296 : vector<2x8x16xf32> to vector<16x16xf32>
    %c1_171 = arith.constant 1 : index
    %c0_172 = arith.constant 0 : index
    %c0_173 = arith.constant 0 : index
    %298 = vector.load %arg25[%c1_171, %c0_172, %c0_173] : memref<2x16x32xf32, #tpu.memory_space<vmem>>, vector<1x16x32xf32>
    %299 = vector.shape_cast %298 : vector<1x16x32xf32> to vector<16x32xf32>
    %cst_174 = arith.constant dense<0.000000e+00> : vector<16x32xf32>
    %300 = tpu.matmul %297, %299, %cst_174 {dimension_numbers = #tpu.dot_dimension_numbers<[1], [0], [0], [1], [0, 0, 1, 1], [], []>} : vector<16x16xf32>, vector<16x32xf32>, vector<16x32xf32> -> vector<16x32xf32>
    %301 = arith.addf %268, %300 : vector<16x32xf32>
    %302 = arith.addf %234, %301 : vector<16x32xf32>
    %c0_175 = arith.constant 0 : index
    %c0_176 = arith.constant 0 : index
    %303 = vector.load %arg26[%c0_175, %c0_176] : memref<1x32xf32, #tpu.memory_space<vmem>>, vector<1x32xf32>
    %c0_177 = arith.constant 0 : index
    %c0_178 = arith.constant 0 : index
    %304 = vector.load %arg27[%c0_177, %c0_178] : memref<1x32xf32, #tpu.memory_space<vmem>>, vector<1x32xf32>
    %cst_179 = arith.constant dense<0.000000e+00> : vector<16xf32>
    %305 = vector.multi_reduction <add>, %302, %cst_179 [1] : vector<16x32xf32> to vector<16xf32>
    %306 = vector.shape_cast %305 : vector<16xf32> to vector<16x1xf32>
    %cst_180 = arith.constant 3.200000e+01 : f32
    %307 = vector.broadcast %cst_180 : f32 to vector<16x1xf32>
    %308 = arith.divf %306, %307 : vector<16x1xf32>
    %309 = vector.broadcast %308 : vector<16x1xf32> to vector<16x32xf32>
    %310 = arith.subf %302, %309 : vector<16x32xf32>
    %311 = arith.mulf %310, %310 : vector<16x32xf32>
    %cst_181 = arith.constant dense<0.000000e+00> : vector<16xf32>
    %312 = vector.multi_reduction <add>, %311, %cst_181 [1] : vector<16x32xf32> to vector<16xf32>
    %313 = vector.shape_cast %312 : vector<16xf32> to vector<16x1xf32>
    %cst_182 = arith.constant 3.200000e+01 : f32
    %314 = vector.broadcast %cst_182 : f32 to vector<16x1xf32>
    %315 = arith.divf %313, %314 : vector<16x1xf32>
    %316 = vector.broadcast %308 : vector<16x1xf32> to vector<16x32xf32>
    %317 = arith.subf %302, %316 : vector<16x32xf32>
    %cst_183 = arith.constant 9.99999974E-6 : f32
    %318 = vector.broadcast %cst_183 : f32 to vector<16x1xf32>
    %319 = arith.addf %315, %318 : vector<16x1xf32>
    %320 = math.rsqrt %319 : vector<16x1xf32>
    %321 = vector.broadcast %320 : vector<16x1xf32> to vector<16x32xf32>
    %322 = arith.mulf %317, %321 : vector<16x32xf32>
    %323 = vector.broadcast %303 : vector<1x32xf32> to vector<16x32xf32>
    %324 = arith.mulf %322, %323 : vector<16x32xf32>
    %325 = vector.broadcast %304 : vector<1x32xf32> to vector<16x32xf32>
    %326 = arith.addf %324, %325 : vector<16x32xf32>
    %c0_184 = arith.constant 0 : index
    %c0_185 = arith.constant 0 : index
    %327 = vector.load %arg28[%c0_184, %c0_185] : memref<32x64xf32, #tpu.memory_space<vmem>>, vector<32x64xf32>
    %cst_186 = arith.constant dense<0.000000e+00> : vector<16x64xf32>
    %328 = tpu.matmul %326, %327, %cst_186 {dimension_numbers = #tpu.dot_dimension_numbers<[1], [0], [0], [1], [0, 0, 1, 1], [], []>} : vector<16x32xf32>, vector<32x64xf32>, vector<16x64xf32> -> vector<16x64xf32>
    %c0_187 = arith.constant 0 : index
    %c0_188 = arith.constant 0 : index
    %329 = vector.load %arg29[%c0_187, %c0_188] : memref<1x64xf32, #tpu.memory_space<vmem>>, vector<1x64xf32>
    %330 = vector.broadcast %329 : vector<1x64xf32> to vector<16x64xf32>
    %331 = arith.addf %328, %330 : vector<16x64xf32>
    %cst_189 = arith.constant 0.000000e+00 : f32
    %332 = vector.broadcast %cst_189 : f32 to vector<16x64xf32>
    %333 = arith.maximumf %331, %332 : vector<16x64xf32>
    %c0_190 = arith.constant 0 : index
    %c0_191 = arith.constant 0 : index
    %334 = vector.load %arg30[%c0_190, %c0_191] : memref<64x32xf32, #tpu.memory_space<vmem>>, vector<64x32xf32>
    %cst_192 = arith.constant dense<0.000000e+00> : vector<16x32xf32>
    %335 = tpu.matmul %333, %334, %cst_192 {dimension_numbers = #tpu.dot_dimension_numbers<[1], [0], [0], [1], [0, 0, 1, 1], [], []>} : vector<16x64xf32>, vector<64x32xf32>, vector<16x32xf32> -> vector<16x32xf32>
    %c0_193 = arith.constant 0 : index
    %c0_194 = arith.constant 0 : index
    %336 = vector.load %arg31[%c0_193, %c0_194] : memref<1x32xf32, #tpu.memory_space<vmem>>, vector<1x32xf32>
    %337 = vector.broadcast %336 : vector<1x32xf32> to vector<16x32xf32>
    %338 = arith.addf %335, %337 : vector<16x32xf32>
    %339 = arith.addf %326, %338 : vector<16x32xf32>
    %c0_195 = arith.constant 0 : index
    %c0_196 = arith.constant 0 : index
    %340 = vector.load %arg32[%c0_195, %c0_196] : memref<1x32xf32, #tpu.memory_space<vmem>>, vector<1x32xf32>
    %c0_197 = arith.constant 0 : index
    %c0_198 = arith.constant 0 : index
    %341 = vector.load %arg33[%c0_197, %c0_198] : memref<1x32xf32, #tpu.memory_space<vmem>>, vector<1x32xf32>
    %cst_199 = arith.constant dense<0.000000e+00> : vector<16xf32>
    %342 = vector.multi_reduction <add>, %339, %cst_199 [1] : vector<16x32xf32> to vector<16xf32>
    %343 = vector.shape_cast %342 : vector<16xf32> to vector<16x1xf32>
    %cst_200 = arith.constant 3.200000e+01 : f32
    %344 = vector.broadcast %cst_200 : f32 to vector<16x1xf32>
    %345 = arith.divf %343, %344 : vector<16x1xf32>
    %346 = vector.broadcast %345 : vector<16x1xf32> to vector<16x32xf32>
    %347 = arith.subf %339, %346 : vector<16x32xf32>
    %348 = arith.mulf %347, %347 : vector<16x32xf32>
    %cst_201 = arith.constant dense<0.000000e+00> : vector<16xf32>
    %349 = vector.multi_reduction <add>, %348, %cst_201 [1] : vector<16x32xf32> to vector<16xf32>
    %350 = vector.shape_cast %349 : vector<16xf32> to vector<16x1xf32>
    %cst_202 = arith.constant 3.200000e+01 : f32
    %351 = vector.broadcast %cst_202 : f32 to vector<16x1xf32>
    %352 = arith.divf %350, %351 : vector<16x1xf32>
    %353 = vector.broadcast %345 : vector<16x1xf32> to vector<16x32xf32>
    %354 = arith.subf %339, %353 : vector<16x32xf32>
    %cst_203 = arith.constant 9.99999974E-6 : f32
    %355 = vector.broadcast %cst_203 : f32 to vector<16x1xf32>
    %356 = arith.addf %352, %355 : vector<16x1xf32>
    %357 = math.rsqrt %356 : vector<16x1xf32>
    %358 = vector.broadcast %357 : vector<16x1xf32> to vector<16x32xf32>
    %359 = arith.mulf %354, %358 : vector<16x32xf32>
    %360 = vector.broadcast %340 : vector<1x32xf32> to vector<16x32xf32>
    %361 = arith.mulf %359, %360 : vector<16x32xf32>
    %362 = vector.broadcast %341 : vector<1x32xf32> to vector<16x32xf32>
    %363 = arith.addf %361, %362 : vector<16x32xf32>
    %c0_204 = arith.constant 0 : index
    %c0_205 = arith.constant 0 : index
    %364 = vector.load %arg34[%c0_204, %c0_205] : memref<16x32xf32, #tpu.memory_space<vmem>>, vector<16x32xf32>
    tpu.vector_store %arg34[%c0_204, %c0_205], %363 {strides = array<i32>} : memref<16x32xf32, #tpu.memory_space<vmem>>, vector<16x32xf32>,
    return
  }
  func.func @transform_0(%arg0: i32) -> (i32, i32) {
    %c0_i32 = arith.constant 0 : i32
    %c0_i32_0 = arith.constant 0 : i32
    %c0_i32_1 = arith.constant 0 : i32
    return %c0_i32, %c0_i32_0 : i32, i32
  }
  func.func @transform_1(%arg0: i32) -> (i32, i32) {
    %c0_i32 = arith.constant 0 : i32
    %c0_i32_0 = arith.constant 0 : i32
    %c0_i32_1 = arith.constant 0 : i32
    return %c0_i32, %c0_i32_0 : i32, i32
  }
  func.func @transform_2(%arg0: i32) -> (i32, i32, i32) {
    %c0_i32 = arith.constant 0 : i32
    %c0_i32_0 = arith.constant 0 : i32
    %c0_i32_1 = arith.constant 0 : i32
    %c0_i32_2 = arith.constant 0 : i32
    return %c0_i32, %c0_i32_0, %c0_i32_1 : i32, i32, i32
  }
  func.func @transform_3(%arg0: i32) -> (i32, i32, i32) {
    %c0_i32 = arith.constant 0 : i32
    %c0_i32_0 = arith.constant 0 : i32
    %c0_i32_1 = arith.constant 0 : i32
    %c0_i32_2 = arith.constant 0 : i32
    return %c0_i32, %c0_i32_0, %c0_i32_1 : i32, i32, i32
  }
  func.func @transform_4(%arg0: i32) -> (i32, i32, i32) {
    %c0_i32 = arith.constant 0 : i32
    %c0_i32_0 = arith.constant 0 : i32
    %c0_i32_1 = arith.constant 0 : i32
    %c0_i32_2 = arith.constant 0 : i32
    return %c0_i32, %c0_i32_0, %c0_i32_1 : i32, i32, i32
  }
  func.func @transform_5(%arg0: i32) -> (i32, i32, i32) {
    %c0_i32 = arith.constant 0 : i32
    %c0_i32_0 = arith.constant 0 : i32
    %c0_i32_1 = arith.constant 0 : i32
    %c0_i32_2 = arith.constant 0 : i32
    return %c0_i32, %c0_i32_0, %c0_i32_1 : i32, i32, i32
  }
  func.func @transform_6(%arg0: i32) -> (i32, i32, i32) {
    %c0_i32 = arith.constant 0 : i32
    %c0_i32_0 = arith.constant 0 : i32
    %c0_i32_1 = arith.constant 0 : i32
    %c0_i32_2 = arith.constant 0 : i32
    return %c0_i32, %c0_i32_0, %c0_i32_1 : i32, i32, i32
  }
  func.func @transform_7(%arg0: i32) -> (i32, i32) {
    %c0_i32 = arith.constant 0 : i32
    %c0_i32_0 = arith.constant 0 : i32
    %c0_i32_1 = arith.constant 0 : i32
    return %c0_i32, %c0_i32_0 : i32, i32
  }
  func.func @transform_8(%arg0: i32) -> (i32, i32) {
    %c0_i32 = arith.constant 0 : i32
    %c0_i32_0 = arith.constant 0 : i32
    %c0_i32_1 = arith.constant 0 : i32
    return %c0_i32, %c0_i32_0 : i32, i32
  }
  func.func @transform_9(%arg0: i32) -> (i32, i32) {
    %c0_i32 = arith.constant 0 : i32
    %c0_i32_0 = arith.constant 0 : i32
    %c0_i32_1 = arith.constant 0 : i32
    return %c0_i32, %c0_i32_0 : i32, i32
  }
  func.func @transform_10(%arg0: i32) -> (i32, i32) {
    %c0_i32 = arith.constant 0 : i32
    %c0_i32_0 = arith.constant 0 : i32
    %c0_i32_1 = arith.constant 0 : i32
    return %c0_i32, %c0_i32_0 : i32, i32
  }
  func.func @transform_11(%arg0: i32) -> (i32, i32) {
    %c0_i32 = arith.constant 0 : i32
    %c0_i32_0 = arith.constant 0 : i32
    %c0_i32_1 = arith.constant 0 : i32
    return %c0_i32, %c0_i32_0 : i32, i32
  }
  func.func @transform_12(%arg0: i32) -> (i32, i32) {
    %c0_i32 = arith.constant 0 : i32
    %c0_i32_0 = arith.constant 0 : i32
    %c0_i32_1 = arith.constant 0 : i32
    return %c0_i32, %c0_i32_0 : i32, i32
  }
  func.func @transform_13(%arg0: i32) -> (i32, i32) {
    %c0_i32 = arith.constant 0 : i32
    %c0_i32_0 = arith.constant 0 : i32
    %c0_i32_1 = arith.constant 0 : i32
    return %c0_i32, %c0_i32_0 : i32, i32
  }
  func.func @transform_14(%arg0: i32) -> (i32, i32) {
    %c0_i32 = arith.constant 0 : i32
    %c0_i32_0 = arith.constant 0 : i32
    %c0_i32_1 = arith.constant 0 : i32
    return %c0_i32, %c0_i32_0 : i32, i32
  }
  func.func @transform_15(%arg0: i32) -> (i32, i32, i32) {
    %c0_i32 = arith.constant 0 : i32
    %c0_i32_0 = arith.constant 0 : i32
    %c0_i32_1 = arith.constant 0 : i32
    %c0_i32_2 = arith.constant 0 : i32
    return %c0_i32, %c0_i32_0, %c0_i32_1 : i32, i32, i32
  }
  func.func @transform_16(%arg0: i32) -> (i32, i32, i32) {
    %c0_i32 = arith.constant 0 : i32
    %c0_i32_0 = arith.constant 0 : i32
    %c0_i32_1 = arith.constant 0 : i32
    %c0_i32_2 = arith.constant 0 : i32
    return %c0_i32, %c0_i32_0, %c0_i32_1 : i32, i32, i32
  }
  func.func @transform_17(%arg0: i32) -> (i32, i32, i32) {
    %c0_i32 = arith.constant 0 : i32
    %c0_i32_0 = arith.constant 0 : i32
    %c0_i32_1 = arith.constant 0 : i32
    %c0_i32_2 = arith.constant 0 : i32
    return %c0_i32, %c0_i32_0, %c0_i32_1 : i32, i32, i32
  }
  func.func @transform_18(%arg0: i32) -> (i32, i32, i32) {
    %c0_i32 = arith.constant 0 : i32
    %c0_i32_0 = arith.constant 0 : i32
    %c0_i32_1 = arith.constant 0 : i32
    %c0_i32_2 = arith.constant 0 : i32
    return %c0_i32, %c0_i32_0, %c0_i32_1 : i32, i32, i32
  }
  func.func @transform_19(%arg0: i32) -> (i32, i32) {
    %c0_i32 = arith.constant 0 : i32
    %c0_i32_0 = arith.constant 0 : i32
    %c0_i32_1 = arith.constant 0 : i32
    return %c0_i32, %c0_i32_0 : i32, i32
  }
  func.func @transform_20(%arg0: i32) -> (i32, i32) {
    %c0_i32 = arith.constant 0 : i32
    %c0_i32_0 = arith.constant 0 : i32
    %c0_i32_1 = arith.constant 0 : i32
    return %c0_i32, %c0_i32_0 : i32, i32
  }
  func.func @transform_21(%arg0: i32) -> (i32, i32, i32) {
    %c0_i32 = arith.constant 0 : i32
    %c0_i32_0 = arith.constant 0 : i32
    %c0_i32_1 = arith.constant 0 : i32
    %c0_i32_2 = arith.constant 0 : i32
    return %c0_i32, %c0_i32_0, %c0_i32_1 : i32, i32, i32
  }
  func.func @transform_22(%arg0: i32) -> (i32, i32, i32) {
    %c0_i32 = arith.constant 0 : i32
    %c0_i32_0 = arith.constant 0 : i32
    %c0_i32_1 = arith.constant 0 : i32
    %c0_i32_2 = arith.constant 0 : i32
    return %c0_i32, %c0_i32_0, %c0_i32_1 : i32, i32, i32
  }
  func.func @transform_23(%arg0: i32) -> (i32, i32, i32) {
    %c0_i32 = arith.constant 0 : i32
    %c0_i32_0 = arith.constant 0 : i32
    %c0_i32_1 = arith.constant 0 : i32
    %c0_i32_2 = arith.constant 0 : i32
    return %c0_i32, %c0_i32_0, %c0_i32_1 : i32, i32, i32
  }
  func.func @transform_24(%arg0: i32) -> (i32, i32, i32) {
    %c0_i32 = arith.constant 0 : i32
    %c0_i32_0 = arith.constant 0 : i32
    %c0_i32_1 = arith.constant 0 : i32
    %c0_i32_2 = arith.constant 0 : i32
    return %c0_i32, %c0_i32_0, %c0_i32_1 : i32, i32, i32
  }
  func.func @transform_25(%arg0: i32) -> (i32, i32) {
    %c0_i32 = arith.constant 0 : i32
    %c0_i32_0 = arith.constant 0 : i32
    %c0_i32_1 = arith.constant 0 : i32
    return %c0_i32, %c0_i32_0 : i32, i32
  }
  func.func @transform_26(%arg0: i32) -> (i32, i32) {
    %c0_i32 = arith.constant 0 : i32
    %c0_i32_0 = arith.constant 0 : i32
    %c0_i32_1 = arith.constant 0 : i32
    return %c0_i32, %c0_i32_0 : i32, i32
  }
  func.func @transform_27(%arg0: i32) -> (i32, i32) {
    %c0_i32 = arith.constant 0 : i32
    %c0_i32_0 = arith.constant 0 : i32
    %c0_i32_1 = arith.constant 0 : i32
    return %c0_i32, %c0_i32_0 : i32, i32
  }
  func.func @transform_28(%arg0: i32) -> (i32, i32) {
    %c0_i32 = arith.constant 0 : i32
    %c0_i32_0 = arith.constant 0 : i32
    %c0_i32_1 = arith.constant 0 : i32
    return %c0_i32, %c0_i32_0 : i32, i32
  }
  func.func @transform_29(%arg0: i32) -> (i32, i32) {
    %c0_i32 = arith.constant 0 : i32
    %c0_i32_0 = arith.constant 0 : i32
    %c0_i32_1 = arith.constant 0 : i32
    return %c0_i32, %c0_i32_0 : i32, i32
  }
  func.func @transform_30(%arg0: i32) -> (i32, i32) {
    %c0_i32 = arith.constant 0 : i32
    %c0_i32_0 = arith.constant 0 : i32
    %c0_i32_1 = arith.constant 0 : i32
    return %c0_i32, %c0_i32_0 : i32, i32
  }
  func.func @transform_31(%arg0: i32) -> (i32, i32) {
    %c0_i32 = arith.constant 0 : i32
    %c0_i32_0 = arith.constant 0 : i32
    %c0_i32_1 = arith.constant 0 : i32
    return %c0_i32, %c0_i32_0 : i32, i32
  }
  func.func @transform_32(%arg0: i32) -> (i32, i32) {
    %c0_i32 = arith.constant 0 : i32
    %c0_i32_0 = arith.constant 0 : i32
    %c0_i32_1 = arith.constant 0 : i32
    return %c0_i32, %c0_i32_0 : i32, i32
  }
  func.func @transform_33(%arg0: i32) -> (i32, i32) {
    %c0_i32 = arith.constant 0 : i32
    %c0_i32_0 = arith.constant 0 : i32
    %c0_i32_1 = arith.constant 0 : i32
    return %c0_i32, %c0_i32_0 : i32, i32
  }
}

</mosaic_0001>

<llo_original>
// kernel: autoencoder_forward.1
$region0: #{autoencoder_forward.1}
  #allocation0 [shape = 'u32[]', space=smem, size = 0x4, offset = 0x4, fixed_abs, tag = 'smem constant byte address 0x4 - core index']
  #allocation1 [shape = 'u32[144,128]{1,0:T(1,128)}', space=vmem, size = 0x12000, scoped, tag = 'internal scratch']
  %s0 = inlined_call_operand.smem [shape: u32[34], index: -1, kind: input, shape index: {}]
  %s1 = sld [smem:[%s0]]
  %s2 = scalar_lea.smem %s0, 1
  %s3 = sld [smem:[%s2]]
  %s4 = scalar_lea.smem %s0, 2
  %s5 = sld [smem:[%s4]]
  %s6 = scalar_lea.smem %s0, 3
  %s7 = sld [smem:[%s6]]
  %s8 = scalar_lea.smem %s0, 4
  %s9 = sld [smem:[%s8]]
  %s10 = scalar_lea.smem %s0, 5
  %s11 = sld [smem:[%s10]]
  %s12 = scalar_lea.smem %s0, 6
  %s13 = sld [smem:[%s12]]
  %s14 = scalar_lea.smem %s0, 7
  %s15 = sld [smem:[%s14]]
  %s16 = scalar_lea.smem %s0, 8
  %s17 = sld [smem:[%s16]]
  %s18 = scalar_lea.smem %s0, 9
  %s19 = sld [smem:[%s18]]
  %s20 = scalar_lea.smem %s0, 10
  %s21 = sld [smem:[%s20]]
  %s22 = scalar_lea.smem %s0, 11
  %s23 = sld [smem:[%s22]]
  %s24 = scalar_lea.smem %s0, 12
  %s25 = sld [smem:[%s24]]
  %s26 = scalar_lea.smem %s0, 13
  %s27 = sld [smem:[%s26]]
  %s28 = scalar_lea.smem %s0, 14
  %s29 = sld [smem:[%s28]]
  %s30 = scalar_lea.smem %s0, 15
  %s31 = sld [smem:[%s30]]
  %s32 = scalar_lea.smem %s0, 16
  %s33 = sld [smem:[%s32]]
  %s34 = scalar_lea.smem %s0, 17
  %s35 = sld [smem:[%s34]]
  %s36 = scalar_lea.smem %s0, 18
  %s37 = sld [smem:[%s36]]
  %s38 = scalar_lea.smem %s0, 19
  %s39 = sld [smem:[%s38]]
  %s40 = scalar_lea.smem %s0, 20
  %s41 = sld [smem:[%s40]]
  %s42 = scalar_lea.smem %s0, 21
  %s43 = sld [smem:[%s42]]
  %s44 = scalar_lea.smem %s0, 22
  %s45 = sld [smem:[%s44]]
  %s46 = scalar_lea.smem %s0, 23
  %s47 = sld [smem:[%s46]]
  %s48 = scalar_lea.smem %s0, 24
  %s49 = sld [smem:[%s48]]
  %s50 = scalar_lea.smem %s0, 25
  %s51 = sld [smem:[%s50]]
  %s52 = scalar_lea.smem %s0, 26
  %s53 = sld [smem:[%s52]]
  %s54 = scalar_lea.smem %s0, 27
  %s55 = sld [smem:[%s54]]
  %s56 = scalar_lea.smem %s0, 28
  %s57 = sld [smem:[%s56]]
  %s58 = scalar_lea.smem %s0, 29
  %s59 = sld [smem:[%s58]]
  %s60 = scalar_lea.smem %s0, 30
  %s61 = sld [smem:[%s60]]
  %s62 = scalar_lea.smem %s0, 31
  %s63 = sld [smem:[%s62]]
  %s64 = scalar_lea.smem %s0, 32
  %s65 = sld [smem:[%s64]]
  %s66 = scalar_lea.smem %s0, 33
  %s67 = sld [smem:[%s66]]
  %s68 = sld [smem:[#allocation0]]
  $region142: #{autoencoder_forward.1} parent=0
    _
  %s70 = ssub.s32 1, %s68
  %s71 = scalar_select 0, %s70, %s68
  $region1: #{autoencoder_forward.1} parent=0
    #allocation2 [shape = 'u8[8192]{0}', space=vmem, size = 0x2000, scoped, tag = 'output window, operand 0, single buffered']
    #allocation3 [shape = 's32[1]{0}', space=sflag, size = 0x4, scoped, tag = 'scoped memory for autoencoder_forward.1']
    %72 = vsyncpa [#allocation3], 0
    // Predicated region
    $region2: #{autoencoder_forward.1} parent=1 // pred_check
      _
    $region3: #{autoencoder_forward.1} parent=1 // pred_check_branch
      %74 = sbr.rel (0) target = $region5
    $region4: #{autoencoder_forward.1} parent=1 // pred_region
      _
    $region5: #{autoencoder_forward.1} parent=1 // pred_fallthru
      _
    // Predicated region
    $region6: #{autoencoder_forward.1} parent=1 // pred_check
      _
    $region7: #{autoencoder_forward.1} parent=1 // pred_check_branch
      %76 = sbr.rel (0) target = $region9
    $region8: #{autoencoder_forward.1} parent=1 // pred_region
      _
    $region9: #{autoencoder_forward.1} parent=1 // pred_fallthru
      _
    // Predicated region
    $region10: #{autoencoder_forward.1} parent=1 // pred_check
      _
    $region11: #{autoencoder_forward.1} parent=1 // pred_check_branch
      %78 = sbr.rel (0) target = $region13
    $region12: #{autoencoder_forward.1} parent=1 // pred_region
      _
    $region13: #{autoencoder_forward.1} parent=1 // pred_fallthru
      _
    // Predicated region
    $region14: #{autoencoder_forward.1} parent=1 // pred_check
      _
    $region15: #{autoencoder_forward.1} parent=1 // pred_check_branch
      %80 = sbr.rel (0) target = $region17
    $region16: #{autoencoder_forward.1} parent=1 // pred_region
      _
    $region17: #{autoencoder_forward.1} parent=1 // pred_fallthru
      _
    // Predicated region
    $region18: #{autoencoder_forward.1} parent=1 // pred_check
      _
    $region19: #{autoencoder_forward.1} parent=1 // pred_check_branch
      %82 = sbr.rel (0) target = $region21
    $region20: #{autoencoder_forward.1} parent=1 // pred_region
      _
    $region21: #{autoencoder_forward.1} parent=1 // pred_fallthru
      _
    // Predicated region
    $region22: #{autoencoder_forward.1} parent=1 // pred_check
      _
    $region23: #{autoencoder_forward.1} parent=1 // pred_check_branch
      %84 = sbr.rel (0) target = $region25
    $region24: #{autoencoder_forward.1} parent=1 // pred_region
      _
    $region25: #{autoencoder_forward.1} parent=1 // pred_fallthru
      _
    // Predicated region
    $region26: #{autoencoder_forward.1} parent=1 // pred_check
      _
    $region27: #{autoencoder_forward.1} parent=1 // pred_check_branch
      %86 = sbr.rel (0) target = $region29
    $region28: #{autoencoder_forward.1} parent=1 // pred_region
      _
    $region29: #{autoencoder_forward.1} parent=1 // pred_fallthru
      _
    // Predicated region
    $region30: #{autoencoder_forward.1} parent=1 // pred_check
      _
    $region31: #{autoencoder_forward.1} parent=1 // pred_check_branch
      %88 = sbr.rel (0) target = $region33
    $region32: #{autoencoder_forward.1} parent=1 // pred_region
      _
    $region33: #{autoencoder_forward.1} parent=1 // pred_fallthru
      _
    // Predicated region
    $region34: #{autoencoder_forward.1} parent=1 // pred_check
      _
    $region35: #{autoencoder_forward.1} parent=1 // pred_check_branch
      %90 = sbr.rel (0) target = $region37
    $region36: #{autoencoder_forward.1} parent=1 // pred_region
      _
    $region37: #{autoencoder_forward.1} parent=1 // pred_fallthru
      _
    // Predicated region
    $region38: #{autoencoder_forward.1} parent=1 // pred_check
      _
    $region39: #{autoencoder_forward.1} parent=1 // pred_check_branch
      %92 = sbr.rel (0) target = $region41
    $region40: #{autoencoder_forward.1} parent=1 // pred_region
      _
    $region41: #{autoencoder_forward.1} parent=1 // pred_fallthru
      _
    // Predicated region
    $region42: #{autoencoder_forward.1} parent=1 // pred_check
      _
    $region43: #{autoencoder_forward.1} parent=1 // pred_check_branch
      %94 = sbr.rel (0) target = $region45
    $region44: #{autoencoder_forward.1} parent=1 // pred_region
      _
    $region45: #{autoencoder_forward.1} parent=1 // pred_fallthru
      _
    // Predicated region
    $region46: #{autoencoder_forward.1} parent=1 // pred_check
      _
    $region47: #{autoencoder_forward.1} parent=1 // pred_check_branch
      %96 = sbr.rel (0) target = $region49
    $region48: #{autoencoder_forward.1} parent=1 // pred_region
      _
    $region49: #{autoencoder_forward.1} parent=1 // pred_fallthru
      _
    // Predicated region
    $region50: #{autoencoder_forward.1} parent=1 // pred_check
      _
    $region51: #{autoencoder_forward.1} parent=1 // pred_check_branch
      %98 = sbr.rel (0) target = $region53
    $region52: #{autoencoder_forward.1} parent=1 // pred_region
      _
    $region53: #{autoencoder_forward.1} parent=1 // pred_fallthru
      _
    // Predicated region
    $region54: #{autoencoder_forward.1} parent=1 // pred_check
      _
    $region55: #{autoencoder_forward.1} parent=1 // pred_check_branch
      %100 = sbr.rel (0) target = $region57
    $region56: #{autoencoder_forward.1} parent=1 // pred_region
      _
    $region57: #{autoencoder_forward.1} parent=1 // pred_fallthru
      _
    // Predicated region
    $region58: #{autoencoder_forward.1} parent=1 // pred_check
      _
    $region59: #{autoencoder_forward.1} parent=1 // pred_check_branch
      %102 = sbr.rel (0) target = $region61
    $region60: #{autoencoder_forward.1} parent=1 // pred_region
      _
    $region61: #{autoencoder_forward.1} parent=1 // pred_fallthru
      _
    // Predicated region
    $region62: #{autoencoder_forward.1} parent=1 // pred_check
      _
    $region63: #{autoencoder_forward.1} parent=1 // pred_check_branch
      %104 = sbr.rel (0) target = $region65
    $region64: #{autoencoder_forward.1} parent=1 // pred_region
      _
    $region65: #{autoencoder_forward.1} parent=1 // pred_fallthru
      _
    // Predicated region
    $region66: #{autoencoder_forward.1} parent=1 // pred_check
      _
    $region67: #{autoencoder_forward.1} parent=1 // pred_check_branch
      %106 = sbr.rel (0) target = $region69
    $region68: #{autoencoder_forward.1} parent=1 // pred_region
      _
    $region69: #{autoencoder_forward.1} parent=1 // pred_fallthru
      _
    // Predicated region
    $region70: #{autoencoder_forward.1} parent=1 // pred_check
      _
    $region71: #{autoencoder_forward.1} parent=1 // pred_check_branch
      %108 = sbr.rel (0) target = $region73
    $region72: #{autoencoder_forward.1} parent=1 // pred_region
      _
    $region73: #{autoencoder_forward.1} parent=1 // pred_fallthru
      _
    // Predicated region
    $region74: #{autoencoder_forward.1} parent=1 // pred_check
      _
    $region75: #{autoencoder_forward.1} parent=1 // pred_check_branch
      %110 = sbr.rel (0) target = $region77
    $region76: #{autoencoder_forward.1} parent=1 // pred_region
      _
    $region77: #{autoencoder_forward.1} parent=1 // pred_fallthru
      _
    // Predicated region
    $region78: #{autoencoder_forward.1} parent=1 // pred_check
      _
    $region79: #{autoencoder_forward.1} parent=1 // pred_check_branch
      %112 = sbr.rel (0) target = $region81
    $region80: #{autoencoder_forward.1} parent=1 // pred_region
      _
    $region81: #{autoencoder_forward.1} parent=1 // pred_fallthru
      _
    // Predicated region
    $region82: #{autoencoder_forward.1} parent=1 // pred_check
      _
    $region83: #{autoencoder_forward.1} parent=1 // pred_check_branch
      %114 = sbr.rel (0) target = $region85
    $region84: #{autoencoder_forward.1} parent=1 // pred_region
      _
    $region85: #{autoencoder_forward.1} parent=1 // pred_fallthru
      _
    // Predicated region
    $region86: #{autoencoder_forward.1} parent=1 // pred_check
      _
    $region87: #{autoencoder_forward.1} parent=1 // pred_check_branch
      %116 = sbr.rel (0) target = $region89
    $region88: #{autoencoder_forward.1} parent=1 // pred_region
      _
    $region89: #{autoencoder_forward.1} parent=1 // pred_fallthru
      _
    // Predicated region
    $region90: #{autoencoder_forward.1} parent=1 // pred_check
      _
    $region91: #{autoencoder_forward.1} parent=1 // pred_check_branch
      %118 = sbr.rel (0) target = $region93
    $region92: #{autoencoder_forward.1} parent=1 // pred_region
      _
    $region93: #{autoencoder_forward.1} parent=1 // pred_fallthru
      _
    // Predicated region
    $region94: #{autoencoder_forward.1} parent=1 // pred_check
      _
    $region95: #{autoencoder_forward.1} parent=1 // pred_check_branch
      %120 = sbr.rel (0) target = $region97
    $region96: #{autoencoder_forward.1} parent=1 // pred_region
      _
    $region97: #{autoencoder_forward.1} parent=1 // pred_fallthru
      _
    // Predicated region
    $region98: #{autoencoder_forward.1} parent=1 // pred_check
      _
    $region99: #{autoencoder_forward.1} parent=1 // pred_check_branch
      %122 = sbr.rel (0) target = $region101
    $region100: #{autoencoder_forward.1} parent=1 // pred_region
      _
    $region101: #{autoencoder_forward.1} parent=1 // pred_fallthru
      _
    // Predicated region
    $region102: #{autoencoder_forward.1} parent=1 // pred_check
      _
    $region103: #{autoencoder_forward.1} parent=1 // pred_check_branch
      %124 = sbr.rel (0) target = $region105
    $region104: #{autoencoder_forward.1} parent=1 // pred_region
      _
    $region105: #{autoencoder_forward.1} parent=1 // pred_fallthru
      _
    // Predicated region
    $region106: #{autoencoder_forward.1} parent=1 // pred_check
      _
    $region107: #{autoencoder_forward.1} parent=1 // pred_check_branch
      %126 = sbr.rel (0) target = $region109
    $region108: #{autoencoder_forward.1} parent=1 // pred_region
      _
    $region109: #{autoencoder_forward.1} parent=1 // pred_fallthru
      _
    // Predicated region
    $region110: #{autoencoder_forward.1} parent=1 // pred_check
      _
    $region111: #{autoencoder_forward.1} parent=1 // pred_check_branch
      %128 = sbr.rel (0) target = $region113
    $region112: #{autoencoder_forward.1} parent=1 // pred_region
      _
    $region113: #{autoencoder_forward.1} parent=1 // pred_fallthru
      _
    // Predicated region
    $region114: #{autoencoder_forward.1} parent=1 // pred_check
      _
    $region115: #{autoencoder_forward.1} parent=1 // pred_check_branch
      %130 = sbr.rel (0) target = $region117
    $region116: #{autoencoder_forward.1} parent=1 // pred_region
      _
    $region117: #{autoencoder_forward.1} parent=1 // pred_fallthru
      _
    // Predicated region
    $region118: #{autoencoder_forward.1} parent=1 // pred_check
      _
    $region119: #{autoencoder_forward.1} parent=1 // pred_check_branch
      %132 = sbr.rel (0) target = $region121
    $region120: #{autoencoder_forward.1} parent=1 // pred_region
      _
    $region121: #{autoencoder_forward.1} parent=1 // pred_fallthru
      _
    // Predicated region
    $region122: #{autoencoder_forward.1} parent=1 // pred_check
      _
    $region123: #{autoencoder_forward.1} parent=1 // pred_check_branch
      %134 = sbr.rel (0) target = $region125
    $region124: #{autoencoder_forward.1} parent=1 // pred_region
      _
    $region125: #{autoencoder_forward.1} parent=1 // pred_fallthru
      _
    // Predicated region
    $region126: #{autoencoder_forward.1} parent=1 // pred_check
      _
    $region127: #{autoencoder_forward.1} parent=1 // pred_check_branch
      %136 = sbr.rel (0) target = $region129
    $region128: #{autoencoder_forward.1} parent=1 // pred_region
      _
    $region129: #{autoencoder_forward.1} parent=1 // pred_fallthru
      _
    // Predicated region
    $region130: #{autoencoder_forward.1} parent=1 // pred_check
      _
    $region131: #{autoencoder_forward.1} parent=1 // pred_check_branch
      %138 = sbr.rel (0) target = $region133
    $region132: #{autoencoder_forward.1} parent=1 // pred_region
      _
    $region133: #{autoencoder_forward.1} parent=1 // pred_fallthru
      _
    %v139 = vld [vmem:[%s1] sm:$0xff]
    %v140 = vld [vmem:[%s1 + $0x8] sm:$0xff]
    %v141 = vld [vmem:[%s3] sm:$0xff]
    %v142 = vld [vmem:[%s3 + $0x8] sm:$0xff]
    %v143 = vld [vmem:[%s5] sm:$0x1]
    %v144 = vld [vmem:[%s5 + $0x1] sm:$0x1]
    %v145 = vsub.f32 %v143, 1.0
    %v146 = vsub.f32 %v144, 1.0
    %v147 = vmul.f32 %v145, 1e+09
    %v148 = vmul.f32 %v146, 1e+09
    %v149 = vlaneseq
    %v150 = vshrl.u32 %v149, 7
    %v151 = vlaneseq
    %v152 = vand.u32 %v151, 127
    %vm153 = vcmp.le.s32.totalorder %v152, %v150
    %v154 = vsel %vm153, 0.0, -1e+09
    %v155 = vld [vmem:[%s7] sm:$0xff]
    %v156 = vld [vmem:[%s7 + $0x8] sm:$0xff]
    %v157 = vld [vmem:[%s7 + $0x10] sm:$0xff]
    %v158 = vld [vmem:[%s7 + $0x18] sm:$0xff]
    %vm159 = vcmask 261120
    %v161 = vsel %vm159, %v139, 0
    %v164 = vsel %vm159, %v140, 0
    %166 = vmatprep.subr.mxu0 0.0
    %167 = vmatpush1.msra.mxu0 %v155
    %168 = vmatprep.subr.mxu0 0.0
    %169 = vmatpush1.msra.mxu0 %v156
    %170 = vmatprep.subr.mxu0 0.0
    %171 = vmatpush1.msra.mxu0 %v157
    %172 = vmatprep.subr.mxu0 0.0
    %173 = vmatpush1.msra.mxu0 %v158
    %174 = vmatprep.subr.mxu0 0.0
    %175 = vmatpush1.msra.mxu0 0.0
    %176 = vmatprep.subr.mxu0 0.0
    %177 = vmatpush1.msra.mxu0 0.0
    %178 = vmatprep.subr.mxu0 0.0
    %179 = vmatpush1.msra.mxu0 0.0
    %180 = vmatprep.subr.mxu0 0.0
    %181 = vmatpush1.msra.mxu0 0.0
    %182 = vmatprep.subr.mxu0 0.0
    %183 = vmatpush1.msra.mxu0 0.0
    %184 = vmatprep.subr.mxu0 0.0
    %185 = vmatpush1.msra.mxu0 0.0
    %186 = vmatprep.subr.mxu0 0.0
    %187 = vmatpush1.msra.mxu0 0.0
    %188 = vmatprep.subr.mxu0 0.0
    %189 = vmatpush1.msra.mxu0 0.0
    %190 = vmatprep.subr.mxu0 0.0
    %191 = vmatpush1.msra.mxu0 0.0
    %192 = vmatprep.subr.mxu0 0.0
    %193 = vmatpush1.msra.mxu0 0.0
    %194 = vmatprep.subr.mxu0 0.0
    %195 = vmatpush1.msra.mxu0 0.0
    %196 = vmatprep.subr.mxu0 0.0
    %197 = vmatpush1.msra.mxu0 0.0
    %198 = vmatprep.subr.mxu0 0.0
    %199 = vmatpush1.msra.mxu0 0.0
    %200 = vmatprep.subr.mxu0 0.0
    %201 = vmatpush1.msra.mxu0 0.0
    %202 = vmatprep.subr.mxu0 0.0
    %203 = vmatpush1.msra.mxu0 0.0
    %204 = vmatprep.subr.mxu0 0.0
    %205 = vmatpush1.msra.mxu0 0.0
    %206 = vmatprep.subr.mxu0 0.0
    %207 = vmatpush1.msra.mxu0 0.0
    %208 = vmatprep.subr.mxu0 0.0
    %209 = vmatpush1.msra.mxu0 0.0
    %210 = vmatprep.subr.mxu0 0.0
    %211 = vmatpush1.msra.mxu0 0.0
    %212 = vmatprep.subr.mxu0 0.0
    %213 = vmatpush1.msra.mxu0 0.0
    %214 = vmatprep.subr.mxu0 0.0
    %215 = vmatpush1.msra.mxu0 0.0
    %216 = vmatprep.subr.mxu0 0.0
    %217 = vmatpush1.msra.mxu0 0.0
    %218 = vmatprep.subr.mxu0 0.0
    %219 = vmatpush1.msra.mxu0 0.0
    %220 = vmatprep.subr.mxu0 0.0
    %221 = vmatpush1.msra.mxu0 0.0
    %222 = vmatprep.subr.mxu0 0.0
    %223 = vmatpush1.msra.mxu0 0.0
    %224 = vmatprep.subr.mxu0 0.0
    %225 = vmatpush1.msra.mxu0 0.0
    %226 = vmatprep.subr.mxu0 0.0
    %227 = vmatpush1.msra.mxu0 0.0
    %228 = vmatprep.subr.mxu0 0.0
    %229 = vmatpush1.msra.mxu0 0.0
    %230 = vmatprep.mubr.f32.mxu0 0.0
    %231 = vmatmul.mubr.f32.gmra.mrb[0].mxu0 %v161
    %v232 = vpop.f32.mrb[0].mxu0
    %v233 = vadd.f32 0.0, %v232
    %v234 = vpop.f32.mrb[0].mxu0
    %235 = vmatprep.mubr.f32.mxu0 0.0
    %236 = vmatmul.mubr.f32.gmra.mrb[0].mxu0 %v164
    %v237 = vpop.f32.mrb[0].mxu0
    %v238 = vadd.f32 0.0, %v237
    %v239 = vpop.f32.mrb[0].mxu0
    %240 = vdwg.mxu0
    %v241 = vld [vmem:[%s9] sm:$0xff]
    %v242 = vld [vmem:[%s9 + $0x8] sm:$0xff]
    %v243 = vld [vmem:[%s9 + $0x10] sm:$0xff]
    %v244 = vld [vmem:[%s9 + $0x18] sm:$0xff]
    %245 = vmatprep.subr.mxu0 0.0
    %246 = vmatpush1.msra.mxu0 %v241
    %247 = vmatprep.subr.mxu0 0.0
    %248 = vmatpush1.msra.mxu0 %v242
    %249 = vmatprep.subr.mxu0 0.0
    %250 = vmatpush1.msra.mxu0 %v243
    %251 = vmatprep.subr.mxu0 0.0
    %252 = vmatpush1.msra.mxu0 %v244
    %253 = vmatprep.subr.mxu0 0.0
    %254 = vmatpush1.msra.mxu0 0.0
    %255 = vmatprep.subr.mxu0 0.0
    %256 = vmatpush1.msra.mxu0 0.0
    %257 = vmatprep.subr.mxu0 0.0
    %258 = vmatpush1.msra.mxu0 0.0
    %259 = vmatprep.subr.mxu0 0.0
    %260 = vmatpush1.msra.mxu0 0.0
    %261 = vmatprep.subr.mxu0 0.0
    %262 = vmatpush1.msra.mxu0 0.0
    %263 = vmatprep.subr.mxu0 0.0
    %264 = vmatpush1.msra.mxu0 0.0
    %265 = vmatprep.subr.mxu0 0.0
    %266 = vmatpush1.msra.mxu0 0.0
    %267 = vmatprep.subr.mxu0 0.0
    %268 = vmatpush1.msra.mxu0 0.0
    %269 = vmatprep.subr.mxu0 0.0
    %270 = vmatpush1.msra.mxu0 0.0
    %271 = vmatprep.subr.mxu0 0.0
    %272 = vmatpush1.msra.mxu0 0.0
    %273 = vmatprep.subr.mxu0 0.0
    %274 = vmatpush1.msra.mxu0 0.0
    %275 = vmatprep.subr.mxu0 0.0
    %276 = vmatpush1.msra.mxu0 0.0
    %277 = vmatprep.subr.mxu0 0.0
    %278 = vmatpush1.msra.mxu0 0.0
    %279 = vmatprep.subr.mxu0 0.0
    %280 = vmatpush1.msra.mxu0 0.0
    %281 = vmatprep.subr.mxu0 0.0
    %282 = vmatpush1.msra.mxu0 0.0
    %283 = vmatprep.subr.mxu0 0.0
    %284 = vmatpush1.msra.mxu0 0.0
    %285 = vmatprep.subr.mxu0 0.0
    %286 = vmatpush1.msra.mxu0 0.0
    %287 = vmatprep.subr.mxu0 0.0
    %288 = vmatpush1.msra.mxu0 0.0
    %289 = vmatprep.subr.mxu0 0.0
    %290 = vmatpush1.msra.mxu0 0.0
    %291 = vmatprep.subr.mxu0 0.0
    %292 = vmatpush1.msra.mxu0 0.0
    %293 = vmatprep.subr.mxu0 0.0
    %294 = vmatpush1.msra.mxu0 0.0
    %295 = vmatprep.subr.mxu0 0.0
    %296 = vmatpush1.msra.mxu0 0.0
    %297 = vmatprep.subr.mxu0 0.0
    %298 = vmatpush1.msra.mxu0 0.0
    %299 = vmatprep.subr.mxu0 0.0
    %300 = vmatpush1.msra.mxu0 0.0
    %301 = vmatprep.subr.mxu0 0.0
    %302 = vmatpush1.msra.mxu0 0.0
    %303 = vmatprep.subr.mxu0 0.0
    %304 = vmatpush1.msra.mxu0 0.0
    %305 = vmatprep.subr.mxu0 0.0
    %306 = vmatpush1.msra.mxu0 0.0
    %307 = vmatprep.subr.mxu0 0.0
    %308 = vmatpush1.msra.mxu0 0.0
    %309 = vmatprep.mubr.f32.mxu0 0.0
    %310 = vmatmul.mubr.f32.gmra.mrb[0].mxu0 %v161
    %v311 = vpop.f32.mrb[0].mxu0
    %v312 = vadd.f32 0.0, %v311
    %v313 = vpop.f32.mrb[0].mxu0
    %314 = vmatprep.mubr.f32.mxu0 0.0
    %315 = vmatmul.mubr.f32.gmra.mrb[0].mxu0 %v164
    %v316 = vpop.f32.mrb[0].mxu0
    %v317 = vadd.f32 0.0, %v316
    %v318 = vpop.f32.mrb[0].mxu0
    %319 = vdwg.mxu0
    %v320 = vld [vmem:[%s11] sm:$0xff]
    %v321 = vld [vmem:[%s11 + $0x8] sm:$0xff]
    %v322 = vld [vmem:[%s11 + $0x10] sm:$0xff]
    %v323 = vld [vmem:[%s11 + $0x18] sm:$0xff]
    %324 = vmatprep.subr.mxu0 0.0
    %325 = vmatpush1.msra.mxu0 %v320
    %326 = vmatprep.subr.mxu0 0.0
    %327 = vmatpush1.msra.mxu0 %v321
    %328 = vmatprep.subr.mxu0 0.0
    %329 = vmatpush1.msra.mxu0 %v322
    %330 = vmatprep.subr.mxu0 0.0
    %331 = vmatpush1.msra.mxu0 %v323
    %332 = vmatprep.subr.mxu0 0.0
    %333 = vmatpush1.msra.mxu0 0.0
    %334 = vmatprep.subr.mxu0 0.0
    %335 = vmatpush1.msra.mxu0 0.0
    %336 = vmatprep.subr.mxu0 0.0
    %337 = vmatpush1.msra.mxu0 0.0
    %338 = vmatprep.subr.mxu0 0.0
    %339 = vmatpush1.msra.mxu0 0.0
    %340 = vmatprep.subr.mxu0 0.0
    %341 = vmatpush1.msra.mxu0 0.0
    %342 = vmatprep.subr.mxu0 0.0
    %343 = vmatpush1.msra.mxu0 0.0
    %344 = vmatprep.subr.mxu0 0.0
    %345 = vmatpush1.msra.mxu0 0.0
    %346 = vmatprep.subr.mxu0 0.0
    %347 = vmatpush1.msra.mxu0 0.0
    %348 = vmatprep.subr.mxu0 0.0
    %349 = vmatpush1.msra.mxu0 0.0
    %350 = vmatprep.subr.mxu0 0.0
    %351 = vmatpush1.msra.mxu0 0.0
    %352 = vmatprep.subr.mxu0 0.0
    %353 = vmatpush1.msra.mxu0 0.0
    %354 = vmatprep.subr.mxu0 0.0
    %355 = vmatpush1.msra.mxu0 0.0
    %356 = vmatprep.subr.mxu0 0.0
    %357 = vmatpush1.msra.mxu0 0.0
    %358 = vmatprep.subr.mxu0 0.0
    %359 = vmatpush1.msra.mxu0 0.0
    %360 = vmatprep.subr.mxu0 0.0
    %361 = vmatpush1.msra.mxu0 0.0
    %362 = vmatprep.subr.mxu0 0.0
    %363 = vmatpush1.msra.mxu0 0.0
    %364 = vmatprep.subr.mxu0 0.0
    %365 = vmatpush1.msra.mxu0 0.0
    %366 = vmatprep.subr.mxu0 0.0
    %367 = vmatpush1.msra.mxu0 0.0
    %368 = vmatprep.subr.mxu0 0.0
    %369 = vmatpush1.msra.mxu0 0.0
    %370 = vmatprep.subr.mxu0 0.0
    %371 = vmatpush1.msra.mxu0 0.0
    %372 = vmatprep.subr.mxu0 0.0
    %373 = vmatpush1.msra.mxu0 0.0
    %374 = vmatprep.subr.mxu0 0.0
    %375 = vmatpush1.msra.mxu0 0.0
    %376 = vmatprep.subr.mxu0 0.0
    %377 = vmatpush1.msra.mxu0 0.0
    %378 = vmatprep.subr.mxu0 0.0
    %379 = vmatpush1.msra.mxu0 0.0
    %380 = vmatprep.subr.mxu0 0.0
    %381 = vmatpush1.msra.mxu0 0.0
    %382 = vmatprep.subr.mxu0 0.0
    %383 = vmatpush1.msra.mxu0 0.0
    %384 = vmatprep.subr.mxu0 0.0
    %385 = vmatpush1.msra.mxu0 0.0
    %386 = vmatprep.subr.mxu0 0.0
    %387 = vmatpush1.msra.mxu0 0.0
    %388 = vmatprep.mubr.f32.mxu0 0.0
    %389 = vmatmul.mubr.f32.gmra.mrb[0].mxu0 %v161
    %v390 = vpop.f32.mrb[0].mxu0
    %v391 = vadd.f32 0.0, %v390
    %v392 = vpop.f32.mrb[0].mxu0
    %393 = vmatprep.mubr.f32.mxu0 0.0
    %394 = vmatmul.mubr.f32.gmra.mrb[0].mxu0 %v164
    %v395 = vpop.f32.mrb[0].mxu0
    %v396 = vadd.f32 0.0, %v395
    %v397 = vpop.f32.mrb[0].mxu0
    %398 = vdwg.mxu0
    %vm399 = vcmask 130048
    %v401 = vsel %vm399, %v233, 0
    %v404 = vsel %vm399, %v312, 0
    %406 = vmatprep.subr.mxu0 0.0
    %407 = vmatpush1.xpose.msra.mxu0 %v404
    %408 = vmatprep.subr.mxu0 0.0
    %409 = vmatpush1.xpose.msra.mxu0 0.0
    %410 = vmatprep.subr.mxu0 0.0
    %411 = vmatpush1.xpose.msra.mxu0 0.0
    %412 = vmatprep.subr.mxu0 0.0
    %413 = vmatpush1.xpose.msra.mxu0 0.0
    %414 = vmatprep.subr.mxu0 0.0
    %415 = vmatpush1.xpose.msra.mxu0 0.0
    %416 = vmatprep.subr.mxu0 0.0
    %417 = vmatpush1.xpose.msra.mxu0 0.0
    %418 = vmatprep.subr.mxu0 0.0
    %419 = vmatpush1.xpose.msra.mxu0 0.0
    %420 = vmatprep.subr.mxu0 0.0
    %421 = vmatpush1.xpose.msra.mxu0 0.0
    %422 = vmatprep.subr.mxu0 0.0
    %423 = vmatpush1.xpose.msra.mxu0 0.0
    %424 = vmatprep.subr.mxu0 0.0
    %425 = vmatpush1.xpose.msra.mxu0 0.0
    %426 = vmatprep.subr.mxu0 0.0
    %427 = vmatpush1.xpose.msra.mxu0 0.0
    %428 = vmatprep.subr.mxu0 0.0
    %429 = vmatpush1.xpose.msra.mxu0 0.0
    %430 = vmatprep.subr.mxu0 0.0
    %431 = vmatpush1.xpose.msra.mxu0 0.0
    %432 = vmatprep.subr.mxu0 0.0
    %433 = vmatpush1.xpose.msra.mxu0 0.0
    %434 = vmatprep.subr.mxu0 0.0
    %435 = vmatpush1.xpose.msra.mxu0 0.0
    %436 = vmatprep.subr.mxu0 0.0
    %437 = vmatpush1.xpose.msra.mxu0 0.0
    %438 = vmatprep.subr.mxu0 0.0
    %439 = vmatpush1.xpose.msra.mxu0 0.0
    %440 = vmatprep.subr.mxu0 0.0
    %441 = vmatpush1.xpose.msra.mxu0 0.0
    %442 = vmatprep.subr.mxu0 0.0
    %443 = vmatpush1.xpose.msra.mxu0 0.0
    %444 = vmatprep.subr.mxu0 0.0
    %445 = vmatpush1.xpose.msra.mxu0 0.0
    %446 = vmatprep.subr.mxu0 0.0
    %447 = vmatpush1.xpose.msra.mxu0 0.0
    %448 = vmatprep.subr.mxu0 0.0
    %449 = vmatpush1.xpose.msra.mxu0 0.0
    %450 = vmatprep.subr.mxu0 0.0
    %451 = vmatpush1.xpose.msra.mxu0 0.0
    %452 = vmatprep.subr.mxu0 0.0
    %453 = vmatpush1.xpose.msra.mxu0 0.0
    %454 = vmatprep.subr.mxu0 0.0
    %455 = vmatpush1.xpose.msra.mxu0 0.0
    %456 = vmatprep.subr.mxu0 0.0
    %457 = vmatpush1.xpose.msra.mxu0 0.0
    %458 = vmatprep.subr.mxu0 0.0
    %459 = vmatpush1.xpose.msra.mxu0 0.0
    %460 = vmatprep.subr.mxu0 0.0
    %461 = vmatpush1.xpose.msra.mxu0 0.0
    %462 = vmatprep.subr.mxu0 0.0
    %463 = vmatpush1.xpose.msra.mxu0 0.0
    %464 = vmatprep.subr.mxu0 0.0
    %465 = vmatpush1.xpose.msra.mxu0 0.0
    %466 = vmatprep.subr.mxu0 0.0
    %467 = vmatpush1.xpose.msra.mxu0 0.0
    %468 = vmatprep.subr.mxu0 0.0
    %469 = vmatpush1.xpose.msra.mxu0 0.0
    %470 = vmatprep.mubr.f32.mxu0 0.0
    %471 = vmatmul.mubr.f32.gmra.mrb[0].mxu0 %v401
    %v472 = vpop.f32.mrb[0].mxu0
    %v473 = vadd.f32 0.0, %v472
    %v474 = vpop.f32.mrb[0].mxu0
    %475 = vdwg.mxu0
    %v477 = vsel %vm399, %v238, 0
    %v480 = vsel %vm399, %v317, 0
    %482 = vmatprep.subr.mxu0 0.0
    %483 = vmatpush1.xpose.msra.mxu0 %v480
    %484 = vmatprep.subr.mxu0 0.0
    %485 = vmatpush1.xpose.msra.mxu0 0.0
    %486 = vmatprep.subr.mxu0 0.0
    %487 = vmatpush1.xpose.msra.mxu0 0.0
    %488 = vmatprep.subr.mxu0 0.0
    %489 = vmatpush1.xpose.msra.mxu0 0.0
    %490 = vmatprep.subr.mxu0 0.0
    %491 = vmatpush1.xpose.msra.mxu0 0.0
    %492 = vmatprep.subr.mxu0 0.0
    %493 = vmatpush1.xpose.msra.mxu0 0.0
    %494 = vmatprep.subr.mxu0 0.0
    %495 = vmatpush1.xpose.msra.mxu0 0.0
    %496 = vmatprep.subr.mxu0 0.0
    %497 = vmatpush1.xpose.msra.mxu0 0.0
    %498 = vmatprep.subr.mxu0 0.0
    %499 = vmatpush1.xpose.msra.mxu0 0.0
    %500 = vmatprep.subr.mxu0 0.0
    %501 = vmatpush1.xpose.msra.mxu0 0.0
    %502 = vmatprep.subr.mxu0 0.0
    %503 = vmatpush1.xpose.msra.mxu0 0.0
    %504 = vmatprep.subr.mxu0 0.0
    %505 = vmatpush1.xpose.msra.mxu0 0.0
    %506 = vmatprep.subr.mxu0 0.0
    %507 = vmatpush1.xpose.msra.mxu0 0.0
    %508 = vmatprep.subr.mxu0 0.0
    %509 = vmatpush1.xpose.msra.mxu0 0.0
    %510 = vmatprep.subr.mxu0 0.0
    %511 = vmatpush1.xpose.msra.mxu0 0.0
    %512 = vmatprep.subr.mxu0 0.0
    %513 = vmatpush1.xpose.msra.mxu0 0.0
    %514 = vmatprep.subr.mxu0 0.0
    %515 = vmatpush1.xpose.msra.mxu0 0.0
    %516 = vmatprep.subr.mxu0 0.0
    %517 = vmatpush1.xpose.msra.mxu0 0.0
    %518 = vmatprep.subr.mxu0 0.0
    %519 = vmatpush1.xpose.msra.mxu0 0.0
    %520 = vmatprep.subr.mxu0 0.0
    %521 = vmatpush1.xpose.msra.mxu0 0.0
    %522 = vmatprep.subr.mxu0 0.0
    %523 = vmatpush1.xpose.msra.mxu0 0.0
    %524 = vmatprep.subr.mxu0 0.0
    %525 = vmatpush1.xpose.msra.mxu0 0.0
    %526 = vmatprep.subr.mxu0 0.0
    %527 = vmatpush1.xpose.msra.mxu0 0.0
    %528 = vmatprep.subr.mxu0 0.0
    %529 = vmatpush1.xpose.msra.mxu0 0.0
    %530 = vmatprep.subr.mxu0 0.0
    %531 = vmatpush1.xpose.msra.mxu0 0.0
    %532 = vmatprep.subr.mxu0 0.0
    %533 = vmatpush1.xpose.msra.mxu0 0.0
    %534 = vmatprep.subr.mxu0 0.0
    %535 = vmatpush1.xpose.msra.mxu0 0.0
    %536 = vmatprep.subr.mxu0 0.0
    %537 = vmatpush1.xpose.msra.mxu0 0.0
    %538 = vmatprep.subr.mxu0 0.0
    %539 = vmatpush1.xpose.msra.mxu0 0.0
    %540 = vmatprep.subr.mxu0 0.0
    %541 = vmatpush1.xpose.msra.mxu0 0.0
    %542 = vmatprep.subr.mxu0 0.0
    %543 = vmatpush1.xpose.msra.mxu0 0.0
    %544 = vmatprep.subr.mxu0 0.0
    %545 = vmatpush1.xpose.msra.mxu0 0.0
    %546 = vmatprep.mubr.f32.mxu0 0.0
    %547 = vmatmul.mubr.f32.gmra.mrb[0].mxu0 %v477
    %v548 = vpop.f32.mrb[0].mxu0
    %v549 = vadd.f32 0.0, %v548
    %v550 = vpop.f32.mrb[0].mxu0
    %551 = vdwg.mxu0
    %v552 = vmul.f32 %v473, 0.25
    %v553 = vmul.f32 %v549, 0.25
    %v556 = vlaneseq
    %v557 = vshrl.u32 %v556, 7
    %v558 = vsub.s32 0, %v557
    %v559 = vrot.slane %v147, %v558
    %v560 = vlaneseq
    %v561 = vshrl.u32 %v560, 7
    %v562 = vsub.s32 0, %v561
    %v563 = vrot.slane %v148, %v562
    %v566 = vadd.f32 %v552, %v559
    %v567 = vadd.f32 %v553, %v563
    %vm568 = vcmask 64512
    %v569 = vsel %vm568, %v566, -inf
    %570 = vmax.xlane.f32.xlu0 %v569
    %v571 = vpop.xlane.xlu0 %570
    %v572 = vsel %vm568, %v567, -inf
    %573 = vmax.xlane.f32.xlu0 %v572
    %v574 = vpop.xlane.xlu0 %573
    %v575 = vsub.f32 %v566, %v571
    %v576 = vsub.f32 %v567, %v574
    %v577 = vmul.f32 %v575, 1.442695
    %v578 = vpow.pop %v577
    %v579 = vmul.f32 %v576, 1.442695
    %v580 = vpow.pop %v579
    %v581 = vsel %vm568, %v578, 0.0
    %582 = vadd.xlane.f32.xlu0 %v581
    %v583 = vpop.xlane.xlu0 %582
    %v584 = vsel %vm568, %v580, 0.0
    %585 = vadd.xlane.f32.xlu0 %v584
    %v586 = vpop.xlane.xlu0 %585
    %v587 = vrcp.pop %v583
    %v588 = vrcp.pop %v586
    %v589 = vmul.f32 %v578, %v587
    %v590 = vmul.f32 %v580, %v588
    %v592 = vsel %vm568, %v589, 0
    %594 = vmatprep.subr.mxu0 0.0
    %595 = vmatpush1.msra.mxu0 %v391
    %596 = vmatprep.subr.mxu0 0.0
    %597 = vmatpush1.msra.mxu0 0.0
    %598 = vmatprep.subr.mxu0 0.0
    %599 = vmatpush1.msra.mxu0 0.0
    %600 = vmatprep.subr.mxu0 0.0
    %601 = vmatpush1.msra.mxu0 0.0
    %602 = vmatprep.subr.mxu0 0.0
    %603 = vmatpush1.msra.mxu0 0.0
    %604 = vmatprep.subr.mxu0 0.0
    %605 = vmatpush1.msra.mxu0 0.0
    %606 = vmatprep.subr.mxu0 0.0
    %607 = vmatpush1.msra.mxu0 0.0
    %608 = vmatprep.subr.mxu0 0.0
    %609 = vmatpush1.msra.mxu0 0.0
    %610 = vmatprep.subr.mxu0 0.0
    %611 = vmatpush1.msra.mxu0 0.0
    %612 = vmatprep.subr.mxu0 0.0
    %613 = vmatpush1.msra.mxu0 0.0
    %614 = vmatprep.subr.mxu0 0.0
    %615 = vmatpush1.msra.mxu0 0.0
    %616 = vmatprep.subr.mxu0 0.0
    %617 = vmatpush1.msra.mxu0 0.0
    %618 = vmatprep.subr.mxu0 0.0
    %619 = vmatpush1.msra.mxu0 0.0
    %620 = vmatprep.subr.mxu0 0.0
    %621 = vmatpush1.msra.mxu0 0.0
    %622 = vmatprep.subr.mxu0 0.0
    %623 = vmatpush1.msra.mxu0 0.0
    %624 = vmatprep.subr.mxu0 0.0
    %625 = vmatpush1.msra.mxu0 0.0
    %626 = vmatprep.subr.mxu0 0.0
    %627 = vmatpush1.msra.mxu0 0.0
    %628 = vmatprep.subr.mxu0 0.0
    %629 = vmatpush1.msra.mxu0 0.0
    %630 = vmatprep.subr.mxu0 0.0
    %631 = vmatpush1.msra.mxu0 0.0
    %632 = vmatprep.subr.mxu0 0.0
    %633 = vmatpush1.msra.mxu0 0.0
    %634 = vmatprep.subr.mxu0 0.0
    %635 = vmatpush1.msra.mxu0 0.0
    %636 = vmatprep.subr.mxu0 0.0
    %637 = vmatpush1.msra.mxu0 0.0
    %638 = vmatprep.subr.mxu0 0.0
    %639 = vmatpush1.msra.mxu0 0.0
    %640 = vmatprep.subr.mxu0 0.0
    %641 = vmatpush1.msra.mxu0 0.0
    %642 = vmatprep.subr.mxu0 0.0
    %643 = vmatpush1.msra.mxu0 0.0
    %644 = vmatprep.subr.mxu0 0.0
    %645 = vmatpush1.msra.mxu0 0.0
    %646 = vmatprep.subr.mxu0 0.0
    %647 = vmatpush1.msra.mxu0 0.0
    %648 = vmatprep.subr.mxu0 0.0
    %649 = vmatpush1.msra.mxu0 0.0
    %650 = vmatprep.subr.mxu0 0.0
    %651 = vmatpush1.msra.mxu0 0.0
    %652 = vmatprep.subr.mxu0 0.0
    %653 = vmatpush1.msra.mxu0 0.0
    %654 = vmatprep.subr.mxu0 0.0
    %655 = vmatpush1.msra.mxu0 0.0
    %656 = vmatprep.subr.mxu0 0.0
    %657 = vmatpush1.msra.mxu0 0.0
    %658 = vmatprep.mubr.f32.mxu0 0.0
    %659 = vmatmul.mubr.f32.gmra.mrb[0].mxu0 %v592
    %v660 = vpop.f32.mrb[0].mxu0
    %v661 = vadd.f32 0.0, %v660
    %v662 = vpop.f32.mrb[0].mxu0
    %663 = vdwg.mxu0
    %v665 = vsel %vm568, %v590, 0
    %667 = vmatprep.subr.mxu0 0.0
    %668 = vmatpush1.msra.mxu0 %v396
    %669 = vmatprep.subr.mxu0 0.0
    %670 = vmatpush1.msra.mxu0 0.0
    %671 = vmatprep.subr.mxu0 0.0
    %672 = vmatpush1.msra.mxu0 0.0
    %673 = vmatprep.subr.mxu0 0.0
    %674 = vmatpush1.msra.mxu0 0.0
    %675 = vmatprep.subr.mxu0 0.0
    %676 = vmatpush1.msra.mxu0 0.0
    %677 = vmatprep.subr.mxu0 0.0
    %678 = vmatpush1.msra.mxu0 0.0
    %679 = vmatprep.subr.mxu0 0.0
    %680 = vmatpush1.msra.mxu0 0.0
    %681 = vmatprep.subr.mxu0 0.0
    %682 = vmatpush1.msra.mxu0 0.0
    %683 = vmatprep.subr.mxu0 0.0
    %684 = vmatpush1.msra.mxu0 0.0
    %685 = vmatprep.subr.mxu0 0.0
    %686 = vmatpush1.msra.mxu0 0.0
    %687 = vmatprep.subr.mxu0 0.0
    %688 = vmatpush1.msra.mxu0 0.0
    %689 = vmatprep.subr.mxu0 0.0
    %690 = vmatpush1.msra.mxu0 0.0
    %691 = vmatprep.subr.mxu0 0.0
    %692 = vmatpush1.msra.mxu0 0.0
    %693 = vmatprep.subr.mxu0 0.0
    %694 = vmatpush1.msra.mxu0 0.0
    %695 = vmatprep.subr.mxu0 0.0
    %696 = vmatpush1.msra.mxu0 0.0
    %697 = vmatprep.subr.mxu0 0.0
    %698 = vmatpush1.msra.mxu0 0.0
    %699 = vmatprep.subr.mxu0 0.0
    %700 = vmatpush1.msra.mxu0 0.0
    %701 = vmatprep.subr.mxu0 0.0
    %702 = vmatpush1.msra.mxu0 0.0
    %703 = vmatprep.subr.mxu0 0.0
    %704 = vmatpush1.msra.mxu0 0.0
    %705 = vmatprep.subr.mxu0 0.0
    %706 = vmatpush1.msra.mxu0 0.0
    %707 = vmatprep.subr.mxu0 0.0
    %708 = vmatpush1.msra.mxu0 0.0
    %709 = vmatprep.subr.mxu0 0.0
    %710 = vmatpush1.msra.mxu0 0.0
    %711 = vmatprep.subr.mxu0 0.0
    %712 = vmatpush1.msra.mxu0 0.0
    %713 = vmatprep.subr.mxu0 0.0
    %714 = vmatpush1.msra.mxu0 0.0
    %715 = vmatprep.subr.mxu0 0.0
    %716 = vmatpush1.msra.mxu0 0.0
    %717 = vmatprep.subr.mxu0 0.0
    %718 = vmatpush1.msra.mxu0 0.0
    %719 = vmatprep.subr.mxu0 0.0
    %720 = vmatpush1.msra.mxu0 0.0
    %721 = vmatprep.subr.mxu0 0.0
    %722 = vmatpush1.msra.mxu0 0.0
    %723 = vmatprep.subr.mxu0 0.0
    %724 = vmatpush1.msra.mxu0 0.0
    %725 = vmatprep.subr.mxu0 0.0
    %726 = vmatpush1.msra.mxu0 0.0
    %727 = vmatprep.subr.mxu0 0.0
    %728 = vmatpush1.msra.mxu0 0.0
    %729 = vmatprep.subr.mxu0 0.0
    %730 = vmatpush1.msra.mxu0 0.0
    %731 = vmatprep.mubr.f32.mxu0 0.0
    %732 = vmatmul.mubr.f32.gmra.mrb[0].mxu0 %v665
    %v733 = vpop.f32.mrb[0].mxu0
    %v734 = vadd.f32 0.0, %v733
    %v735 = vpop.f32.mrb[0].mxu0
    %736 = vdwg.mxu0
    %v737 = vld [vmem:[%s13] sm:$0xff]
    %v738 = vld [vmem:[%s13 + $0x8] sm:$0xff]
    %s739 = scalar_lea.vmem %s7, 32
    %v740 = vld [vmem:[%s739] sm:$0xff]
    %v741 = vld [vmem:[%s739 + $0x8] sm:$0xff]
    %v742 = vld [vmem:[%s739 + $0x10] sm:$0xff]
    %v743 = vld [vmem:[%s739 + $0x18] sm:$0xff]
    %744 = vmatprep.subr.mxu0 0.0
    %745 = vmatpush1.msra.mxu0 %v740
    %746 = vmatprep.subr.mxu0 0.0
    %747 = vmatpush1.msra.mxu0 %v741
    %748 = vmatprep.subr.mxu0 0.0
    %749 = vmatpush1.msra.mxu0 %v742
    %750 = vmatprep.subr.mxu0 0.0
    %751 = vmatpush1.msra.mxu0 %v743
    %752 = vmatprep.subr.mxu0 0.0
    %753 = vmatpush1.msra.mxu0 0.0
    %754 = vmatprep.subr.mxu0 0.0
    %755 = vmatpush1.msra.mxu0 0.0
    %756 = vmatprep.subr.mxu0 0.0
    %757 = vmatpush1.msra.mxu0 0.0
    %758 = vmatprep.subr.mxu0 0.0
    %759 = vmatpush1.msra.mxu0 0.0
    %760 = vmatprep.subr.mxu0 0.0
    %761 = vmatpush1.msra.mxu0 0.0
    %762 = vmatprep.subr.mxu0 0.0
    %763 = vmatpush1.msra.mxu0 0.0
    %764 = vmatprep.subr.mxu0 0.0
    %765 = vmatpush1.msra.mxu0 0.0
    %766 = vmatprep.subr.mxu0 0.0
    %767 = vmatpush1.msra.mxu0 0.0
    %768 = vmatprep.subr.mxu0 0.0
    %769 = vmatpush1.msra.mxu0 0.0
    %770 = vmatprep.subr.mxu0 0.0
    %771 = vmatpush1.msra.mxu0 0.0
    %772 = vmatprep.subr.mxu0 0.0
    %773 = vmatpush1.msra.mxu0 0.0
    %774 = vmatprep.subr.mxu0 0.0
    %775 = vmatpush1.msra.mxu0 0.0
    %776 = vmatprep.subr.mxu0 0.0
    %777 = vmatpush1.msra.mxu0 0.0
    %778 = vmatprep.subr.mxu0 0.0
    %779 = vmatpush1.msra.mxu0 0.0
    %780 = vmatprep.subr.mxu0 0.0
    %781 = vmatpush1.msra.mxu0 0.0
    %782 = vmatprep.subr.mxu0 0.0
    %783 = vmatpush1.msra.mxu0 0.0
    %784 = vmatprep.subr.mxu0 0.0
    %785 = vmatpush1.msra.mxu0 0.0
    %786 = vmatprep.subr.mxu0 0.0
    %787 = vmatpush1.msra.mxu0 0.0
    %788 = vmatprep.subr.mxu0 0.0
    %789 = vmatpush1.msra.mxu0 0.0
    %790 = vmatprep.subr.mxu0 0.0
    %791 = vmatpush1.msra.mxu0 0.0
    %792 = vmatprep.subr.mxu0 0.0
    %793 = vmatpush1.msra.mxu0 0.0
    %794 = vmatprep.subr.mxu0 0.0
    %795 = vmatpush1.msra.mxu0 0.0
    %796 = vmatprep.subr.mxu0 0.0
    %797 = vmatpush1.msra.mxu0 0.0
    %798 = vmatprep.subr.mxu0 0.0
    %799 = vmatpush1.msra.mxu0 0.0
    %800 = vmatprep.subr.mxu0 0.0
    %801 = vmatpush1.msra.mxu0 0.0
    %802 = vmatprep.subr.mxu0 0.0
    %803 = vmatpush1.msra.mxu0 0.0
    %804 = vmatprep.subr.mxu0 0.0
    %805 = vmatpush1.msra.mxu0 0.0
    %806 = vmatprep.subr.mxu0 0.0
    %807 = vmatpush1.msra.mxu0 0.0
    %808 = vmatprep.mubr.f32.mxu0 0.0
    %809 = vmatmul.mubr.f32.gmra.mrb[0].mxu0 %v161
    %v810 = vpop.f32.mrb[0].mxu0
    %v811 = vadd.f32 0.0, %v810
    %v812 = vpop.f32.mrb[0].mxu0
    %813 = vmatprep.mubr.f32.mxu0 0.0
    %814 = vmatmul.mubr.f32.gmra.mrb[0].mxu0 %v164
    %v815 = vpop.f32.mrb[0].mxu0
    %v816 = vadd.f32 0.0, %v815
    %v817 = vpop.f32.mrb[0].mxu0
    %818 = vdwg.mxu0
    %s819 = scalar_lea.vmem %s9, 32
    %v820 = vld [vmem:[%s819] sm:$0xff]
    %v821 = vld [vmem:[%s819 + $0x8] sm:$0xff]
    %v822 = vld [vmem:[%s819 + $0x10] sm:$0xff]
    %v823 = vld [vmem:[%s819 + $0x18] sm:$0xff]
    %824 = vmatprep.subr.mxu0 0.0
    %825 = vmatpush1.msra.mxu0 %v820
    %826 = vmatprep.subr.mxu0 0.0
    %827 = vmatpush1.msra.mxu0 %v821
    %828 = vmatprep.subr.mxu0 0.0
    %829 = vmatpush1.msra.mxu0 %v822
    %830 = vmatprep.subr.mxu0 0.0
    %831 = vmatpush1.msra.mxu0 %v823
    %832 = vmatprep.subr.mxu0 0.0
    %833 = vmatpush1.msra.mxu0 0.0
    %834 = vmatprep.subr.mxu0 0.0
    %835 = vmatpush1.msra.mxu0 0.0
    %836 = vmatprep.subr.mxu0 0.0
    %837 = vmatpush1.msra.mxu0 0.0
    %838 = vmatprep.subr.mxu0 0.0
    %839 = vmatpush1.msra.mxu0 0.0
    %840 = vmatprep.subr.mxu0 0.0
    %841 = vmatpush1.msra.mxu0 0.0
    %842 = vmatprep.subr.mxu0 0.0
    %843 = vmatpush1.msra.mxu0 0.0
    %844 = vmatprep.subr.mxu0 0.0
    %845 = vmatpush1.msra.mxu0 0.0
    %846 = vmatprep.subr.mxu0 0.0
    %847 = vmatpush1.msra.mxu0 0.0
    %848 = vmatprep.subr.mxu0 0.0
    %849 = vmatpush1.msra.mxu0 0.0
    %850 = vmatprep.subr.mxu0 0.0
    %851 = vmatpush1.msra.mxu0 0.0
    %852 = vmatprep.subr.mxu0 0.0
    %853 = vmatpush1.msra.mxu0 0.0
    %854 = vmatprep.subr.mxu0 0.0
    %855 = vmatpush1.msra.mxu0 0.0
    %856 = vmatprep.subr.mxu0 0.0
    %857 = vmatpush1.msra.mxu0 0.0
    %858 = vmatprep.subr.mxu0 0.0
    %859 = vmatpush1.msra.mxu0 0.0
    %860 = vmatprep.subr.mxu0 0.0
    %861 = vmatpush1.msra.mxu0 0.0
    %862 = vmatprep.subr.mxu0 0.0
    %863 = vmatpush1.msra.mxu0 0.0
    %864 = vmatprep.subr.mxu0 0.0
    %865 = vmatpush1.msra.mxu0 0.0
    %866 = vmatprep.subr.mxu0 0.0
    %867 = vmatpush1.msra.mxu0 0.0
    %868 = vmatprep.subr.mxu0 0.0
    %869 = vmatpush1.msra.mxu0 0.0
    %870 = vmatprep.subr.mxu0 0.0
    %871 = vmatpush1.msra.mxu0 0.0
    %872 = vmatprep.subr.mxu0 0.0
    %873 = vmatpush1.msra.mxu0 0.0
    %874 = vmatprep.subr.mxu0 0.0
    %875 = vmatpush1.msra.mxu0 0.0
    %876 = vmatprep.subr.mxu0 0.0
    %877 = vmatpush1.msra.mxu0 0.0
    %878 = vmatprep.subr.mxu0 0.0
    %879 = vmatpush1.msra.mxu0 0.0
    %880 = vmatprep.subr.mxu0 0.0
    %881 = vmatpush1.msra.mxu0 0.0
    %882 = vmatprep.subr.mxu0 0.0
    %883 = vmatpush1.msra.mxu0 0.0
    %884 = vmatprep.subr.mxu0 0.0
    %885 = vmatpush1.msra.mxu0 0.0
    %886 = vmatprep.subr.mxu0 0.0
    %887 = vmatpush1.msra.mxu0 0.0
    %888 = vmatprep.mubr.f32.mxu0 0.0
    %889 = vmatmul.mubr.f32.gmra.mrb[0].mxu0 %v161
    %v890 = vpop.f32.mrb[0].mxu0
    %v891 = vadd.f32 0.0, %v890
    %v892 = vpop.f32.mrb[0].mxu0
    %893 = vmatprep.mubr.f32.mxu0 0.0
    %894 = vmatmul.mubr.f32.gmra.mrb[0].mxu0 %v164
    %v895 = vpop.f32.mrb[0].mxu0
    %v896 = vadd.f32 0.0, %v895
    %v897 = vpop.f32.mrb[0].mxu0
    %898 = vdwg.mxu0
    %s899 = scalar_lea.vmem %s11, 32
    %v900 = vld [vmem:[%s899] sm:$0xff]
    %v901 = vld [vmem:[%s899 + $0x8] sm:$0xff]
    %v902 = vld [vmem:[%s899 + $0x10] sm:$0xff]
    %v903 = vld [vmem:[%s899 + $0x18] sm:$0xff]
    %904 = vmatprep.subr.mxu0 0.0
    %905 = vmatpush1.msra.mxu0 %v900
    %906 = vmatprep.subr.mxu0 0.0
    %907 = vmatpush1.msra.mxu0 %v901
    %908 = vmatprep.subr.mxu0 0.0
    %909 = vmatpush1.msra.mxu0 %v902
    %910 = vmatprep.subr.mxu0 0.0
    %911 = vmatpush1.msra.mxu0 %v903
    %912 = vmatprep.subr.mxu0 0.0
    %913 = vmatpush1.msra.mxu0 0.0
    %914 = vmatprep.subr.mxu0 0.0
    %915 = vmatpush1.msra.mxu0 0.0
    %916 = vmatprep.subr.mxu0 0.0
    %917 = vmatpush1.msra.mxu0 0.0
    %918 = vmatprep.subr.mxu0 0.0
    %919 = vmatpush1.msra.mxu0 0.0
    %920 = vmatprep.subr.mxu0 0.0
    %921 = vmatpush1.msra.mxu0 0.0
    %922 = vmatprep.subr.mxu0 0.0
    %923 = vmatpush1.msra.mxu0 0.0
    %924 = vmatprep.subr.mxu0 0.0
    %925 = vmatpush1.msra.mxu0 0.0
    %926 = vmatprep.subr.mxu0 0.0
    %927 = vmatpush1.msra.mxu0 0.0
    %928 = vmatprep.subr.mxu0 0.0
    %929 = vmatpush1.msra.mxu0 0.0
    %930 = vmatprep.subr.mxu0 0.0
    %931 = vmatpush1.msra.mxu0 0.0
    %932 = vmatprep.subr.mxu0 0.0
    %933 = vmatpush1.msra.mxu0 0.0
    %934 = vmatprep.subr.mxu0 0.0
    %935 = vmatpush1.msra.mxu0 0.0
    %936 = vmatprep.subr.mxu0 0.0
    %937 = vmatpush1.msra.mxu0 0.0
    %938 = vmatprep.subr.mxu0 0.0
    %939 = vmatpush1.msra.mxu0 0.0
    %940 = vmatprep.subr.mxu0 0.0
    %941 = vmatpush1.msra.mxu0 0.0
    %942 = vmatprep.subr.mxu0 0.0
    %943 = vmatpush1.msra.mxu0 0.0
    %944 = vmatprep.subr.mxu0 0.0
    %945 = vmatpush1.msra.mxu0 0.0
    %946 = vmatprep.subr.mxu0 0.0
    %947 = vmatpush1.msra.mxu0 0.0
    %948 = vmatprep.subr.mxu0 0.0
    %949 = vmatpush1.msra.mxu0 0.0
    %950 = vmatprep.subr.mxu0 0.0
    %951 = vmatpush1.msra.mxu0 0.0
    %952 = vmatprep.subr.mxu0 0.0
    %953 = vmatpush1.msra.mxu0 0.0
    %954 = vmatprep.subr.mxu0 0.0
    %955 = vmatpush1.msra.mxu0 0.0
    %956 = vmatprep.subr.mxu0 0.0
    %957 = vmatpush1.msra.mxu0 0.0
    %958 = vmatprep.subr.mxu0 0.0
    %959 = vmatpush1.msra.mxu0 0.0
    %960 = vmatprep.subr.mxu0 0.0
    %961 = vmatpush1.msra.mxu0 0.0
    %962 = vmatprep.subr.mxu0 0.0
    %963 = vmatpush1.msra.mxu0 0.0
    %964 = vmatprep.subr.mxu0 0.0
    %965 = vmatpush1.msra.mxu0 0.0
    %966 = vmatprep.subr.mxu0 0.0
    %967 = vmatpush1.msra.mxu0 0.0
    %968 = vmatprep.mubr.f32.mxu0 0.0
    %969 = vmatmul.mubr.f32.gmra.mrb[0].mxu0 %v161
    %v970 = vpop.f32.mrb[0].mxu0
    %v971 = vadd.f32 0.0, %v970
    %v972 = vpop.f32.mrb[0].mxu0
    %973 = vmatprep.mubr.f32.mxu0 0.0
    %974 = vmatmul.mubr.f32.gmra.mrb[0].mxu0 %v164
    %v975 = vpop.f32.mrb[0].mxu0
    %v976 = vadd.f32 0.0, %v975
    %v977 = vpop.f32.mrb[0].mxu0
    %978 = vdwg.mxu0
    %v980 = vsel %vm399, %v811, 0
    %v983 = vsel %vm399, %v891, 0
    %985 = vmatprep.subr.mxu0 0.0
    %986 = vmatpush1.xpose.msra.mxu0 %v983
    %987 = vmatprep.subr.mxu0 0.0
    %988 = vmatpush1.xpose.msra.mxu0 0.0
    %989 = vmatprep.subr.mxu0 0.0
    %990 = vmatpush1.xpose.msra.mxu0 0.0
    %991 = vmatprep.subr.mxu0 0.0
    %992 = vmatpush1.xpose.msra.mxu0 0.0
    %993 = vmatprep.subr.mxu0 0.0
    %994 = vmatpush1.xpose.msra.mxu0 0.0
    %995 = vmatprep.subr.mxu0 0.0
    %996 = vmatpush1.xpose.msra.mxu0 0.0
    %997 = vmatprep.subr.mxu0 0.0
    %998 = vmatpush1.xpose.msra.mxu0 0.0
    %999 = vmatprep.subr.mxu0 0.0
    %1000 = vmatpush1.xpose.msra.mxu0 0.0
    %1001 = vmatprep.subr.mxu0 0.0
    %1002 = vmatpush1.xpose.msra.mxu0 0.0
    %1003 = vmatprep.subr.mxu0 0.0
    %1004 = vmatpush1.xpose.msra.mxu0 0.0
    %1005 = vmatprep.subr.mxu0 0.0
    %1006 = vmatpush1.xpose.msra.mxu0 0.0
    %1007 = vmatprep.subr.mxu0 0.0
    %1008 = vmatpush1.xpose.msra.mxu0 0.0
    %1009 = vmatprep.subr.mxu0 0.0
    %1010 = vmatpush1.xpose.msra.mxu0 0.0
    %1011 = vmatprep.subr.mxu0 0.0
    %1012 = vmatpush1.xpose.msra.mxu0 0.0
    %1013 = vmatprep.subr.mxu0 0.0
    %1014 = vmatpush1.xpose.msra.mxu0 0.0
    %1015 = vmatprep.subr.mxu0 0.0
    %1016 = vmatpush1.xpose.msra.mxu0 0.0
    %1017 = vmatprep.subr.mxu0 0.0
    %1018 = vmatpush1.xpose.msra.mxu0 0.0
    %1019 = vmatprep.subr.mxu0 0.0
    %1020 = vmatpush1.xpose.msra.mxu0 0.0
    %1021 = vmatprep.subr.mxu0 0.0
    %1022 = vmatpush1.xpose.msra.mxu0 0.0
    %1023 = vmatprep.subr.mxu0 0.0
    %1024 = vmatpush1.xpose.msra.mxu0 0.0
    %1025 = vmatprep.subr.mxu0 0.0
    %1026 = vmatpush1.xpose.msra.mxu0 0.0
    %1027 = vmatprep.subr.mxu0 0.0
    %1028 = vmatpush1.xpose.msra.mxu0 0.0
    %1029 = vmatprep.subr.mxu0 0.0
    %1030 = vmatpush1.xpose.msra.mxu0 0.0
    %1031 = vmatprep.subr.mxu0 0.0
    %1032 = vmatpush1.xpose.msra.mxu0 0.0
    %1033 = vmatprep.subr.mxu0 0.0
    %1034 = vmatpush1.xpose.msra.mxu0 0.0
    %1035 = vmatprep.subr.mxu0 0.0
    %1036 = vmatpush1.xpose.msra.mxu0 0.0
    %1037 = vmatprep.subr.mxu0 0.0
    %1038 = vmatpush1.xpose.msra.mxu0 0.0
    %1039 = vmatprep.subr.mxu0 0.0
    %1040 = vmatpush1.xpose.msra.mxu0 0.0
    %1041 = vmatprep.subr.mxu0 0.0
    %1042 = vmatpush1.xpose.msra.mxu0 0.0
    %1043 = vmatprep.subr.mxu0 0.0
    %1044 = vmatpush1.xpose.msra.mxu0 0.0
    %1045 = vmatprep.subr.mxu0 0.0
    %1046 = vmatpush1.xpose.msra.mxu0 0.0
    %1047 = vmatprep.subr.mxu0 0.0
    %1048 = vmatpush1.xpose.msra.mxu0 0.0
    %1049 = vmatprep.mubr.f32.mxu0 0.0
    %1050 = vmatmul.mubr.f32.gmra.mrb[0].mxu0 %v980
    %v1051 = vpop.f32.mrb[0].mxu0
    %v1052 = vadd.f32 0.0, %v1051
    %v1053 = vpop.f32.mrb[0].mxu0
    %1054 = vdwg.mxu0
    %v1056 = vsel %vm399, %v816, 0
    %v1059 = vsel %vm399, %v896, 0
    %1061 = vmatprep.subr.mxu0 0.0
    %1062 = vmatpush1.xpose.msra.mxu0 %v1059
    %1063 = vmatprep.subr.mxu0 0.0
    %1064 = vmatpush1.xpose.msra.mxu0 0.0
    %1065 = vmatprep.subr.mxu0 0.0
    %1066 = vmatpush1.xpose.msra.mxu0 0.0
    %1067 = vmatprep.subr.mxu0 0.0
    %1068 = vmatpush1.xpose.msra.mxu0 0.0
    %1069 = vmatprep.subr.mxu0 0.0
    %1070 = vmatpush1.xpose.msra.mxu0 0.0
    %1071 = vmatprep.subr.mxu0 0.0
    %1072 = vmatpush1.xpose.msra.mxu0 0.0
    %1073 = vmatprep.subr.mxu0 0.0
    %1074 = vmatpush1.xpose.msra.mxu0 0.0
    %1075 = vmatprep.subr.mxu0 0.0
    %1076 = vmatpush1.xpose.msra.mxu0 0.0
    %1077 = vmatprep.subr.mxu0 0.0
    %1078 = vmatpush1.xpose.msra.mxu0 0.0
    %1079 = vmatprep.subr.mxu0 0.0
    %1080 = vmatpush1.xpose.msra.mxu0 0.0
    %1081 = vmatprep.subr.mxu0 0.0
    %1082 = vmatpush1.xpose.msra.mxu0 0.0
    %1083 = vmatprep.subr.mxu0 0.0
    %1084 = vmatpush1.xpose.msra.mxu0 0.0
    %1085 = vmatprep.subr.mxu0 0.0
    %1086 = vmatpush1.xpose.msra.mxu0 0.0
    %1087 = vmatprep.subr.mxu0 0.0
    %1088 = vmatpush1.xpose.msra.mxu0 0.0
    %1089 = vmatprep.subr.mxu0 0.0
    %1090 = vmatpush1.xpose.msra.mxu0 0.0
    %1091 = vmatprep.subr.mxu0 0.0
    %1092 = vmatpush1.xpose.msra.mxu0 0.0
    %1093 = vmatprep.subr.mxu0 0.0
    %1094 = vmatpush1.xpose.msra.mxu0 0.0
    %1095 = vmatprep.subr.mxu0 0.0
    %1096 = vmatpush1.xpose.msra.mxu0 0.0
    %1097 = vmatprep.subr.mxu0 0.0
    %1098 = vmatpush1.xpose.msra.mxu0 0.0
    %1099 = vmatprep.subr.mxu0 0.0
    %1100 = vmatpush1.xpose.msra.mxu0 0.0
    %1101 = vmatprep.subr.mxu0 0.0
    %1102 = vmatpush1.xpose.msra.mxu0 0.0
    %1103 = vmatprep.subr.mxu0 0.0
    %1104 = vmatpush1.xpose.msra.mxu0 0.0
    %1105 = vmatprep.subr.mxu0 0.0
    %1106 = vmatpush1.xpose.msra.mxu0 0.0
    %1107 = vmatprep.subr.mxu0 0.0
    %1108 = vmatpush1.xpose.msra.mxu0 0.0
    %1109 = vmatprep.subr.mxu0 0.0
    %1110 = vmatpush1.xpose.msra.mxu0 0.0
    %1111 = vmatprep.subr.mxu0 0.0
    %1112 = vmatpush1.xpose.msra.mxu0 0.0
    %1113 = vmatprep.subr.mxu0 0.0
    %1114 = vmatpush1.xpose.msra.mxu0 0.0
    %1115 = vmatprep.subr.mxu0 0.0
    %1116 = vmatpush1.xpose.msra.mxu0 0.0
    %1117 = vmatprep.subr.mxu0 0.0
    %1118 = vmatpush1.xpose.msra.mxu0 0.0
    %1119 = vmatprep.subr.mxu0 0.0
    %1120 = vmatpush1.xpose.msra.mxu0 0.0
    %1121 = vmatprep.subr.mxu0 0.0
    %1122 = vmatpush1.xpose.msra.mxu0 0.0
    %1123 = vmatprep.subr.mxu0 0.0
    %1124 = vmatpush1.xpose.msra.mxu0 0.0
    %1125 = vmatprep.mubr.f32.mxu0 0.0
    %1126 = vmatmul.mubr.f32.gmra.mrb[0].mxu0 %v1056
    %v1127 = vpop.f32.mrb[0].mxu0
    %v1128 = vadd.f32 0.0, %v1127
    %v1129 = vpop.f32.mrb[0].mxu0
    %1130 = vdwg.mxu0
    %v1131 = vmul.f32 %v1052, 0.25
    %v1132 = vmul.f32 %v1128, 0.25
    %v1133 = vadd.f32 %v1131, %v559
    %v1134 = vadd.f32 %v1132, %v563
    %v1135 = vsel %vm568, %v1133, -inf
    %1136 = vmax.xlane.f32.xlu0 %v1135
    %v1137 = vpop.xlane.xlu0 %1136
    %v1138 = vsel %vm568, %v1134, -inf
    %1139 = vmax.xlane.f32.xlu0 %v1138
    %v1140 = vpop.xlane.xlu0 %1139
    %v1141 = vsub.f32 %v1133, %v1137
    %v1142 = vsub.f32 %v1134, %v1140
    %v1143 = vmul.f32 %v1141, 1.442695
    %v1144 = vpow.pop %v1143
    %v1145 = vmul.f32 %v1142, 1.442695
    %v1146 = vpow.pop %v1145
    %v1147 = vsel %vm568, %v1144, 0.0
    %1148 = vadd.xlane.f32.xlu0 %v1147
    %v1149 = vpop.xlane.xlu0 %1148
    %v1150 = vsel %vm568, %v1146, 0.0
    %1151 = vadd.xlane.f32.xlu0 %v1150
    %v1152 = vpop.xlane.xlu0 %1151
    %v1153 = vrcp.pop %v1149
    %v1154 = vrcp.pop %v1152
    %v1155 = vmul.f32 %v1144, %v1153
    %v1156 = vmul.f32 %v1146, %v1154
    %v1158 = vsel %vm568, %v1155, 0
    %1160 = vmatprep.subr.mxu0 0.0
    %1161 = vmatpush1.msra.mxu0 %v971
    %1162 = vmatprep.subr.mxu0 0.0
    %1163 = vmatpush1.msra.mxu0 0.0
    %1164 = vmatprep.subr.mxu0 0.0
    %1165 = vmatpush1.msra.mxu0 0.0
    %1166 = vmatprep.subr.mxu0 0.0
    %1167 = vmatpush1.msra.mxu0 0.0
    %1168 = vmatprep.subr.mxu0 0.0
    %1169 = vmatpush1.msra.mxu0 0.0
    %1170 = vmatprep.subr.mxu0 0.0
    %1171 = vmatpush1.msra.mxu0 0.0
    %1172 = vmatprep.subr.mxu0 0.0
    %1173 = vmatpush1.msra.mxu0 0.0
    %1174 = vmatprep.subr.mxu0 0.0
    %1175 = vmatpush1.msra.mxu0 0.0
    %1176 = vmatprep.subr.mxu0 0.0
    %1177 = vmatpush1.msra.mxu0 0.0
    %1178 = vmatprep.subr.mxu0 0.0
    %1179 = vmatpush1.msra.mxu0 0.0
    %1180 = vmatprep.subr.mxu0 0.0
    %1181 = vmatpush1.msra.mxu0 0.0
    %1182 = vmatprep.subr.mxu0 0.0
    %1183 = vmatpush1.msra.mxu0 0.0
    %1184 = vmatprep.subr.mxu0 0.0
    %1185 = vmatpush1.msra.mxu0 0.0
    %1186 = vmatprep.subr.mxu0 0.0
    %1187 = vmatpush1.msra.mxu0 0.0
    %1188 = vmatprep.subr.mxu0 0.0
    %1189 = vmatpush1.msra.mxu0 0.0
    %1190 = vmatprep.subr.mxu0 0.0
    %1191 = vmatpush1.msra.mxu0 0.0
    %1192 = vmatprep.subr.mxu0 0.0
    %1193 = vmatpush1.msra.mxu0 0.0
    %1194 = vmatprep.subr.mxu0 0.0
    %1195 = vmatpush1.msra.mxu0 0.0
    %1196 = vmatprep.subr.mxu0 0.0
    %1197 = vmatpush1.msra.mxu0 0.0
    %1198 = vmatprep.subr.mxu0 0.0
    %1199 = vmatpush1.msra.mxu0 0.0
    %1200 = vmatprep.subr.mxu0 0.0
    %1201 = vmatpush1.msra.mxu0 0.0
    %1202 = vmatprep.subr.mxu0 0.0
    %1203 = vmatpush1.msra.mxu0 0.0
    %1204 = vmatprep.subr.mxu0 0.0
    %1205 = vmatpush1.msra.mxu0 0.0
    %1206 = vmatprep.subr.mxu0 0.0
    %1207 = vmatpush1.msra.mxu0 0.0
    %1208 = vmatprep.subr.mxu0 0.0
    %1209 = vmatpush1.msra.mxu0 0.0
    %1210 = vmatprep.subr.mxu0 0.0
    %1211 = vmatpush1.msra.mxu0 0.0
    %1212 = vmatprep.subr.mxu0 0.0
    %1213 = vmatpush1.msra.mxu0 0.0
    %1214 = vmatprep.subr.mxu0 0.0
    %1215 = vmatpush1.msra.mxu0 0.0
    %1216 = vmatprep.subr.mxu0 0.0
    %1217 = vmatpush1.msra.mxu0 0.0
    %1218 = vmatprep.subr.mxu0 0.0
    %1219 = vmatpush1.msra.mxu0 0.0
    %1220 = vmatprep.subr.mxu0 0.0
    %1221 = vmatpush1.msra.mxu0 0.0
    %1222 = vmatprep.subr.mxu0 0.0
    %1223 = vmatpush1.msra.mxu0 0.0
    %1224 = vmatprep.mubr.f32.mxu0 0.0
    %1225 = vmatmul.mubr.f32.gmra.mrb[0].mxu0 %v1158
    %v1226 = vpop.f32.mrb[0].mxu0
    %v1227 = vadd.f32 0.0, %v1226
    %v1228 = vpop.f32.mrb[0].mxu0
    %1229 = vdwg.mxu0
    %v1231 = vsel %vm568, %v1156, 0
    %1233 = vmatprep.subr.mxu0 0.0
    %1234 = vmatpush1.msra.mxu0 %v976
    %1235 = vmatprep.subr.mxu0 0.0
    %1236 = vmatpush1.msra.mxu0 0.0
    %1237 = vmatprep.subr.mxu0 0.0
    %1238 = vmatpush1.msra.mxu0 0.0
    %1239 = vmatprep.subr.mxu0 0.0
    %1240 = vmatpush1.msra.mxu0 0.0
    %1241 = vmatprep.subr.mxu0 0.0
    %1242 = vmatpush1.msra.mxu0 0.0
    %1243 = vmatprep.subr.mxu0 0.0
    %1244 = vmatpush1.msra.mxu0 0.0
    %1245 = vmatprep.subr.mxu0 0.0
    %1246 = vmatpush1.msra.mxu0 0.0
    %1247 = vmatprep.subr.mxu0 0.0
    %1248 = vmatpush1.msra.mxu0 0.0
    %1249 = vmatprep.subr.mxu0 0.0
    %1250 = vmatpush1.msra.mxu0 0.0
    %1251 = vmatprep.subr.mxu0 0.0
    %1252 = vmatpush1.msra.mxu0 0.0
    %1253 = vmatprep.subr.mxu0 0.0
    %1254 = vmatpush1.msra.mxu0 0.0
    %1255 = vmatprep.subr.mxu0 0.0
    %1256 = vmatpush1.msra.mxu0 0.0
    %1257 = vmatprep.subr.mxu0 0.0
    %1258 = vmatpush1.msra.mxu0 0.0
    %1259 = vmatprep.subr.mxu0 0.0
    %1260 = vmatpush1.msra.mxu0 0.0
    %1261 = vmatprep.subr.mxu0 0.0
    %1262 = vmatpush1.msra.mxu0 0.0
    %1263 = vmatprep.subr.mxu0 0.0
    %1264 = vmatpush1.msra.mxu0 0.0
    %1265 = vmatprep.subr.mxu0 0.0
    %1266 = vmatpush1.msra.mxu0 0.0
    %1267 = vmatprep.subr.mxu0 0.0
    %1268 = vmatpush1.msra.mxu0 0.0
    %1269 = vmatprep.subr.mxu0 0.0
    %1270 = vmatpush1.msra.mxu0 0.0
    %1271 = vmatprep.subr.mxu0 0.0
    %1272 = vmatpush1.msra.mxu0 0.0
    %1273 = vmatprep.subr.mxu0 0.0
    %1274 = vmatpush1.msra.mxu0 0.0
    %1275 = vmatprep.subr.mxu0 0.0
    %1276 = vmatpush1.msra.mxu0 0.0
    %1277 = vmatprep.subr.mxu0 0.0
    %1278 = vmatpush1.msra.mxu0 0.0
    %1279 = vmatprep.subr.mxu0 0.0
    %1280 = vmatpush1.msra.mxu0 0.0
    %1281 = vmatprep.subr.mxu0 0.0
    %1282 = vmatpush1.msra.mxu0 0.0
    %1283 = vmatprep.subr.mxu0 0.0
    %1284 = vmatpush1.msra.mxu0 0.0
    %1285 = vmatprep.subr.mxu0 0.0
    %1286 = vmatpush1.msra.mxu0 0.0
    %1287 = vmatprep.subr.mxu0 0.0
    %1288 = vmatpush1.msra.mxu0 0.0
    %1289 = vmatprep.subr.mxu0 0.0
    %1290 = vmatpush1.msra.mxu0 0.0
    %1291 = vmatprep.subr.mxu0 0.0
    %1292 = vmatpush1.msra.mxu0 0.0
    %1293 = vmatprep.subr.mxu0 0.0
    %1294 = vmatpush1.msra.mxu0 0.0
    %1295 = vmatprep.subr.mxu0 0.0
    %1296 = vmatpush1.msra.mxu0 0.0
    %1297 = vmatprep.mubr.f32.mxu0 0.0
    %1298 = vmatmul.mubr.f32.gmra.mrb[0].mxu0 %v1231
    %v1299 = vpop.f32.mrb[0].mxu0
    %v1300 = vadd.f32 0.0, %v1299
    %v1301 = vpop.f32.mrb[0].mxu0
    %1302 = vdwg.mxu0
    %s1303 = scalar_lea.vmem %s13, 16
    %v1304 = vld [vmem:[%s1303] sm:$0xff]
    %v1305 = vld [vmem:[%s1303 + $0x8] sm:$0xff]
    %v1307 = vsel %vm399, %v1227, 0
    %v1310 = vsel %vm399, %v1300, 0
    %1312 = vmatprep.subr.mxu0 0.0
    %1313 = vmatpush1.msra.mxu0 %v1304
    %1314 = vmatprep.subr.mxu0 0.0
    %1315 = vmatpush1.msra.mxu0 %v1305
    %1316 = vmatprep.subr.mxu0 0.0
    %1317 = vmatpush1.msra.mxu0 0.0
    %1318 = vmatprep.subr.mxu0 0.0
    %1319 = vmatpush1.msra.mxu0 0.0
    %1320 = vmatprep.subr.mxu0 0.0
    %1321 = vmatpush1.msra.mxu0 0.0
    %1322 = vmatprep.subr.mxu0 0.0
    %1323 = vmatpush1.msra.mxu0 0.0
    %1324 = vmatprep.subr.mxu0 0.0
    %1325 = vmatpush1.msra.mxu0 0.0
    %1326 = vmatprep.subr.mxu0 0.0
    %1327 = vmatpush1.msra.mxu0 0.0
    %1328 = vmatprep.subr.mxu0 0.0
    %1329 = vmatpush1.msra.mxu0 0.0
    %1330 = vmatprep.subr.mxu0 0.0
    %1331 = vmatpush1.msra.mxu0 0.0
    %1332 = vmatprep.subr.mxu0 0.0
    %1333 = vmatpush1.msra.mxu0 0.0
    %1334 = vmatprep.subr.mxu0 0.0
    %1335 = vmatpush1.msra.mxu0 0.0
    %1336 = vmatprep.subr.mxu0 0.0
    %1337 = vmatpush1.msra.mxu0 0.0
    %1338 = vmatprep.subr.mxu0 0.0
    %1339 = vmatpush1.msra.mxu0 0.0
    %1340 = vmatprep.subr.mxu0 0.0
    %1341 = vmatpush1.msra.mxu0 0.0
    %1342 = vmatprep.subr.mxu0 0.0
    %1343 = vmatpush1.msra.mxu0 0.0
    %1344 = vmatprep.subr.mxu0 0.0
    %1345 = vmatpush1.msra.mxu0 0.0
    %1346 = vmatprep.subr.mxu0 0.0
    %1347 = vmatpush1.msra.mxu0 0.0
    %1348 = vmatprep.subr.mxu0 0.0
    %1349 = vmatpush1.msra.mxu0 0.0
    %1350 = vmatprep.subr.mxu0 0.0
    %1351 = vmatpush1.msra.mxu0 0.0
    %1352 = vmatprep.subr.mxu0 0.0
    %1353 = vmatpush1.msra.mxu0 0.0
    %1354 = vmatprep.subr.mxu0 0.0
    %1355 = vmatpush1.msra.mxu0 0.0
    %1356 = vmatprep.subr.mxu0 0.0
    %1357 = vmatpush1.msra.mxu0 0.0
    %1358 = vmatprep.subr.mxu0 0.0
    %1359 = vmatpush1.msra.mxu0 0.0
    %1360 = vmatprep.subr.mxu0 0.0
    %1361 = vmatpush1.msra.mxu0 0.0
    %1362 = vmatprep.subr.mxu0 0.0
    %1363 = vmatpush1.msra.mxu0 0.0
    %1364 = vmatprep.subr.mxu0 0.0
    %1365 = vmatpush1.msra.mxu0 0.0
    %1366 = vmatprep.subr.mxu0 0.0
    %1367 = vmatpush1.msra.mxu0 0.0
    %1368 = vmatprep.subr.mxu0 0.0
    %1369 = vmatpush1.msra.mxu0 0.0
    %1370 = vmatprep.subr.mxu0 0.0
    %1371 = vmatpush1.msra.mxu0 0.0
    %1372 = vmatprep.subr.mxu0 0.0
    %1373 = vmatpush1.msra.mxu0 0.0
    %1374 = vmatprep.subr.mxu0 0.0
    %1375 = vmatpush1.msra.mxu0 0.0
    %1376 = vmatprep.mubr.f32.mxu0 0.0
    %1377 = vmatmul.mubr.f32.gmra.mrb[0].mxu0 %v1307
    %v1378 = vpop.f32.mrb[0].mxu0
    %v1379 = vadd.f32 0.0, %v1378
    %v1380 = vpop.f32.mrb[0].mxu0
    %1381 = vmatprep.mubr.f32.mxu0 0.0
    %1382 = vmatmul.mubr.f32.gmra.mrb[0].mxu0 %v1310
    %v1383 = vpop.f32.mrb[0].mxu0
    %v1384 = vadd.f32 0.0, %v1383
    %v1385 = vpop.f32.mrb[0].mxu0
    %1386 = vdwg.mxu0
    %v1388 = vsel %vm399, %v661, 0
    %v1391 = vsel %vm399, %v734, 0
    %1393 = vmatprep.subr.mxu0 0.0
    %1394 = vmatpush1.msra.mxu0 %v737
    %1395 = vmatprep.subr.mxu0 0.0
    %1396 = vmatpush1.msra.mxu0 %v738
    %1397 = vmatprep.subr.mxu0 0.0
    %1398 = vmatpush1.msra.mxu0 0.0
    %1399 = vmatprep.subr.mxu0 0.0
    %1400 = vmatpush1.msra.mxu0 0.0
    %1401 = vmatprep.subr.mxu0 0.0
    %1402 = vmatpush1.msra.mxu0 0.0
    %1403 = vmatprep.subr.mxu0 0.0
    %1404 = vmatpush1.msra.mxu0 0.0
    %1405 = vmatprep.subr.mxu0 0.0
    %1406 = vmatpush1.msra.mxu0 0.0
    %1407 = vmatprep.subr.mxu0 0.0
    %1408 = vmatpush1.msra.mxu0 0.0
    %1409 = vmatprep.subr.mxu0 0.0
    %1410 = vmatpush1.msra.mxu0 0.0
    %1411 = vmatprep.subr.mxu0 0.0
    %1412 = vmatpush1.msra.mxu0 0.0
    %1413 = vmatprep.subr.mxu0 0.0
    %1414 = vmatpush1.msra.mxu0 0.0
    %1415 = vmatprep.subr.mxu0 0.0
    %1416 = vmatpush1.msra.mxu0 0.0
    %1417 = vmatprep.subr.mxu0 0.0
    %1418 = vmatpush1.msra.mxu0 0.0
    %1419 = vmatprep.subr.mxu0 0.0
    %1420 = vmatpush1.msra.mxu0 0.0
    %1421 = vmatprep.subr.mxu0 0.0
    %1422 = vmatpush1.msra.mxu0 0.0
    %1423 = vmatprep.subr.mxu0 0.0
    %1424 = vmatpush1.msra.mxu0 0.0
    %1425 = vmatprep.subr.mxu0 0.0
    %1426 = vmatpush1.msra.mxu0 0.0
    %1427 = vmatprep.subr.mxu0 0.0
    %1428 = vmatpush1.msra.mxu0 0.0
    %1429 = vmatprep.subr.mxu0 0.0
    %1430 = vmatpush1.msra.mxu0 0.0
    %1431 = vmatprep.subr.mxu0 0.0
    %1432 = vmatpush1.msra.mxu0 0.0
    %1433 = vmatprep.subr.mxu0 0.0
    %1434 = vmatpush1.msra.mxu0 0.0
    %1435 = vmatprep.subr.mxu0 0.0
    %1436 = vmatpush1.msra.mxu0 0.0
    %1437 = vmatprep.subr.mxu0 0.0
    %1438 = vmatpush1.msra.mxu0 0.0
    %1439 = vmatprep.subr.mxu0 0.0
    %1440 = vmatpush1.msra.mxu0 0.0
    %1441 = vmatprep.subr.mxu0 0.0
    %1442 = vmatpush1.msra.mxu0 0.0
    %1443 = vmatprep.subr.mxu0 0.0
    %1444 = vmatpush1.msra.mxu0 0.0
    %1445 = vmatprep.subr.mxu0 0.0
    %1446 = vmatpush1.msra.mxu0 0.0
    %1447 = vmatprep.subr.mxu0 0.0
    %1448 = vmatpush1.msra.mxu0 0.0
    %1449 = vmatprep.subr.mxu0 0.0
    %1450 = vmatpush1.msra.mxu0 0.0
    %1451 = vmatprep.subr.mxu0 0.0
    %1452 = vmatpush1.msra.mxu0 0.0
    %1453 = vmatprep.subr.mxu0 0.0
    %1454 = vmatpush1.msra.mxu0 0.0
    %1455 = vmatprep.subr.mxu0 0.0
    %1456 = vmatpush1.msra.mxu0 0.0
    %1457 = vmatprep.mubr.f32.mxu0 0.0
    %1458 = vmatmul.mubr.f32.gmra.mrb[0].mxu0 %v1388
    %v1459 = vpop.f32.mrb[0].mxu0
    %v1460 = vadd.f32 %v1379, %v1459
    %v1461 = vpop.f32.mrb[0].mxu0
    %1462 = vmatprep.mubr.f32.mxu0 0.0
    %1463 = vmatmul.mubr.f32.gmra.mrb[0].mxu0 %v1391
    %v1464 = vpop.f32.mrb[0].mxu0
    %v1465 = vadd.f32 %v1384, %v1464
    %v1466 = vpop.f32.mrb[0].mxu0
    %1467 = vdwg.mxu0
    %v1468 = vadd.f32 %v139, %v1460
    %v1469 = vadd.f32 %v140, %v1465
    %v1470 = vld [vmem:[%s15] sm:$0x1]
    %v1471 = vld [vmem:[%s17] sm:$0x1]
    %v1472 = vsel %vm159, %v1468, 0.0
    %1473 = vadd.xlane.f32.xlu0 %v1472
    %v1474 = vpop.xlane.xlu0 %1473
    %v1475 = vsel %vm159, %v1469, 0.0
    %1476 = vadd.xlane.f32.xlu0 %v1475
    %v1477 = vpop.xlane.xlu0 %1476
    %v1478 = vrcp.pop 32.0
    %v1479 = vmul.f32 %v1474, %v1478
    %v1480 = vmul.f32 %v1477, %v1478
    %v1481 = vsub.f32 %v1468, %v1479
    %v1482 = vsub.f32 %v1469, %v1480
    %v1483 = vmul.f32 %v1481, %v1481
    %v1484 = vmul.f32 %v1482, %v1482
    %v1485 = vsel %vm159, %v1483, 0.0
    %1486 = vadd.xlane.f32.xlu0 %v1485
    %v1487 = vpop.xlane.xlu0 %1486
    %v1488 = vsel %vm159, %v1484, 0.0
    %1489 = vadd.xlane.f32.xlu0 %v1488
    %v1490 = vpop.xlane.xlu0 %1489
    %v1491 = vmul.f32 %v1487, %v1478
    %v1492 = vmul.f32 %v1490, %v1478
    %v1493 = vadd.f32 %v1491, 1e-05
    %v1494 = vadd.f32 %v1492, 1e-05
    %v1495 = vrsqrt.pop %v1493
    %v1496 = vrsqrt.pop %v1494
    %v1497 = vmul.f32 %v1481, %v1495
    %v1498 = vmul.f32 %v1482, %v1496
    %v1500 = vlaneseq
    %v1501 = vshrl.u32 %v1500, 7
    %v1502 = vsub.s32 0, %v1501
    %v1503 = vrot.slane %v1470, %v1502
    %v1505 = vmul.f32 %v1497, %v1503
    %v1506 = vmul.f32 %v1498, %v1503
    %v1508 = vlaneseq
    %v1509 = vshrl.u32 %v1508, 7
    %v1510 = vsub.s32 0, %v1509
    %v1511 = vrot.slane %v1471, %v1510
    %v1513 = vadd.f32 %v1505, %v1511
    %v1514 = vadd.f32 %v1506, %v1511
    %v1515 = vld [vmem:[%s19] sm:$0xff]
    %v1516 = vld [vmem:[%s19 + $0x8] sm:$0xff]
    %v1517 = vld [vmem:[%s19 + $0x10] sm:$0xff]
    %v1518 = vld [vmem:[%s19 + $0x18] sm:$0xff]
    %v1519 = vld [vmem:[%s21] sm:$0x1]
    %v1521 = vlaneseq
    %v1522 = vshrl.u32 %v1521, 7
    %v1523 = vsub.s32 0, %v1522
    %v1524 = vrot.slane %v1519, %v1523
    %v1527 = vsel %vm159, %v1513, 0
    %v1530 = vsel %vm159, %v1514, 0
    %1532 = vmatprep.subr.mxu0 0.0
    %1533 = vmatpush1.msra.mxu0 %v1515
    %1534 = vmatprep.subr.mxu0 0.0
    %1535 = vmatpush1.msra.mxu0 %v1516
    %1536 = vmatprep.subr.mxu0 0.0
    %1537 = vmatpush1.msra.mxu0 %v1517
    %1538 = vmatprep.subr.mxu0 0.0
    %1539 = vmatpush1.msra.mxu0 %v1518
    %1540 = vmatprep.subr.mxu0 0.0
    %1541 = vmatpush1.msra.mxu0 0.0
    %1542 = vmatprep.subr.mxu0 0.0
    %1543 = vmatpush1.msra.mxu0 0.0
    %1544 = vmatprep.subr.mxu0 0.0
    %1545 = vmatpush1.msra.mxu0 0.0
    %1546 = vmatprep.subr.mxu0 0.0
    %1547 = vmatpush1.msra.mxu0 0.0
    %1548 = vmatprep.subr.mxu0 0.0
    %1549 = vmatpush1.msra.mxu0 0.0
    %1550 = vmatprep.subr.mxu0 0.0
    %1551 = vmatpush1.msra.mxu0 0.0
    %1552 = vmatprep.subr.mxu0 0.0
    %1553 = vmatpush1.msra.mxu0 0.0
    %1554 = vmatprep.subr.mxu0 0.0
    %1555 = vmatpush1.msra.mxu0 0.0
    %1556 = vmatprep.subr.mxu0 0.0
    %1557 = vmatpush1.msra.mxu0 0.0
    %1558 = vmatprep.subr.mxu0 0.0
    %1559 = vmatpush1.msra.mxu0 0.0
    %1560 = vmatprep.subr.mxu0 0.0
    %1561 = vmatpush1.msra.mxu0 0.0
    %1562 = vmatprep.subr.mxu0 0.0
    %1563 = vmatpush1.msra.mxu0 0.0
    %1564 = vmatprep.subr.mxu0 0.0
    %1565 = vmatpush1.msra.mxu0 0.0
    %1566 = vmatprep.subr.mxu0 0.0
    %1567 = vmatpush1.msra.mxu0 0.0
    %1568 = vmatprep.subr.mxu0 0.0
    %1569 = vmatpush1.msra.mxu0 0.0
    %1570 = vmatprep.subr.mxu0 0.0
    %1571 = vmatpush1.msra.mxu0 0.0
    %1572 = vmatprep.subr.mxu0 0.0
    %1573 = vmatpush1.msra.mxu0 0.0
    %1574 = vmatprep.subr.mxu0 0.0
    %1575 = vmatpush1.msra.mxu0 0.0
    %1576 = vmatprep.subr.mxu0 0.0
    %1577 = vmatpush1.msra.mxu0 0.0
    %1578 = vmatprep.subr.mxu0 0.0
    %1579 = vmatpush1.msra.mxu0 0.0
    %1580 = vmatprep.subr.mxu0 0.0
    %1581 = vmatpush1.msra.mxu0 0.0
    %1582 = vmatprep.subr.mxu0 0.0
    %1583 = vmatpush1.msra.mxu0 0.0
    %1584 = vmatprep.subr.mxu0 0.0
    %1585 = vmatpush1.msra.mxu0 0.0
    %1586 = vmatprep.subr.mxu0 0.0
    %1587 = vmatpush1.msra.mxu0 0.0
    %1588 = vmatprep.subr.mxu0 0.0
    %1589 = vmatpush1.msra.mxu0 0.0
    %1590 = vmatprep.subr.mxu0 0.0
    %1591 = vmatpush1.msra.mxu0 0.0
    %1592 = vmatprep.subr.mxu0 0.0
    %1593 = vmatpush1.msra.mxu0 0.0
    %1594 = vmatprep.subr.mxu0 0.0
    %1595 = vmatpush1.msra.mxu0 0.0
    %1596 = vmatprep.mubr.f32.mxu0 0.0
    %1597 = vmatmul.mubr.f32.gmra.mrb[0].mxu0 %v1527
    %v1598 = vpop.f32.mrb[0].mxu0
    %v1599 = vadd.f32 %v1524, %v1598
    %v1600 = vpop.f32.mrb[0].mxu0
    %1601 = vmatprep.mubr.f32.mxu0 0.0
    %1602 = vmatmul.mubr.f32.gmra.mrb[0].mxu0 %v1530
    %v1603 = vpop.f32.mrb[0].mxu0
    %v1604 = vadd.f32 %v1524, %v1603
    %v1605 = vpop.f32.mrb[0].mxu0
    %1606 = vdwg.mxu0
    %v1607 = vmax.f32 %v1599, 0.0
    %v1608 = vmax.f32 %v1604, 0.0
    %v1609 = vld [vmem:[%s23] sm:$0xff]
    %v1610 = vld [vmem:[%s23 + $0x8] sm:$0xff]
    %v1611 = vld [vmem:[%s23 + $0x10] sm:$0xff]
    %v1612 = vld [vmem:[%s23 + $0x18] sm:$0xff]
    %v1613 = vld [vmem:[%s23 + $0x20] sm:$0xff]
    %v1614 = vld [vmem:[%s23 + $0x28] sm:$0xff]
    %v1615 = vld [vmem:[%s23 + $0x30] sm:$0xff]
    %v1616 = vld [vmem:[%s23 + $0x38] sm:$0xff]
    %v1617 = vld [vmem:[%s25] sm:$0x1]
    %v1619 = vlaneseq
    %v1620 = vshrl.u32 %v1619, 7
    %v1621 = vsub.s32 0, %v1620
    %v1622 = vrot.slane %v1617, %v1621
    %vm1624 = vcmask 523264
    %v1626 = vsel %vm1624, %v1607, 0
    %v1629 = vsel %vm1624, %v1608, 0
    %1631 = vmatprep.subr.mxu0 0.0
    %1632 = vmatpush1.msra.mxu0 %v1609
    %1633 = vmatprep.subr.mxu0 0.0
    %1634 = vmatpush1.msra.mxu0 %v1610
    %1635 = vmatprep.subr.mxu0 0.0
    %1636 = vmatpush1.msra.mxu0 %v1611
    %1637 = vmatprep.subr.mxu0 0.0
    %1638 = vmatpush1.msra.mxu0 %v1612
    %1639 = vmatprep.subr.mxu0 0.0
    %1640 = vmatpush1.msra.mxu0 %v1613
    %1641 = vmatprep.subr.mxu0 0.0
    %1642 = vmatpush1.msra.mxu0 %v1614
    %1643 = vmatprep.subr.mxu0 0.0
    %1644 = vmatpush1.msra.mxu0 %v1615
    %1645 = vmatprep.subr.mxu0 0.0
    %1646 = vmatpush1.msra.mxu0 %v1616
    %1647 = vmatprep.subr.mxu0 0.0
    %1648 = vmatpush1.msra.mxu0 0.0
    %1649 = vmatprep.subr.mxu0 0.0
    %1650 = vmatpush1.msra.mxu0 0.0
    %1651 = vmatprep.subr.mxu0 0.0
    %1652 = vmatpush1.msra.mxu0 0.0
    %1653 = vmatprep.subr.mxu0 0.0
    %1654 = vmatpush1.msra.mxu0 0.0
    %1655 = vmatprep.subr.mxu0 0.0
    %1656 = vmatpush1.msra.mxu0 0.0
    %1657 = vmatprep.subr.mxu0 0.0
    %1658 = vmatpush1.msra.mxu0 0.0
    %1659 = vmatprep.subr.mxu0 0.0
    %1660 = vmatpush1.msra.mxu0 0.0
    %1661 = vmatprep.subr.mxu0 0.0
    %1662 = vmatpush1.msra.mxu0 0.0
    %1663 = vmatprep.subr.mxu0 0.0
    %1664 = vmatpush1.msra.mxu0 0.0
    %1665 = vmatprep.subr.mxu0 0.0
    %1666 = vmatpush1.msra.mxu0 0.0
    %1667 = vmatprep.subr.mxu0 0.0
    %1668 = vmatpush1.msra.mxu0 0.0
    %1669 = vmatprep.subr.mxu0 0.0
    %1670 = vmatpush1.msra.mxu0 0.0
    %1671 = vmatprep.subr.mxu0 0.0
    %1672 = vmatpush1.msra.mxu0 0.0
    %1673 = vmatprep.subr.mxu0 0.0
    %1674 = vmatpush1.msra.mxu0 0.0
    %1675 = vmatprep.subr.mxu0 0.0
    %1676 = vmatpush1.msra.mxu0 0.0
    %1677 = vmatprep.subr.mxu0 0.0
    %1678 = vmatpush1.msra.mxu0 0.0
    %1679 = vmatprep.subr.mxu0 0.0
    %1680 = vmatpush1.msra.mxu0 0.0
    %1681 = vmatprep.subr.mxu0 0.0
    %1682 = vmatpush1.msra.mxu0 0.0
    %1683 = vmatprep.subr.mxu0 0.0
    %1684 = vmatpush1.msra.mxu0 0.0
    %1685 = vmatprep.subr.mxu0 0.0
    %1686 = vmatpush1.msra.mxu0 0.0
    %1687 = vmatprep.subr.mxu0 0.0
    %1688 = vmatpush1.msra.mxu0 0.0
    %1689 = vmatprep.subr.mxu0 0.0
    %1690 = vmatpush1.msra.mxu0 0.0
    %1691 = vmatprep.subr.mxu0 0.0
    %1692 = vmatpush1.msra.mxu0 0.0
    %1693 = vmatprep.subr.mxu0 0.0
    %1694 = vmatpush1.msra.mxu0 0.0
    %1695 = vmatprep.mubr.f32.mxu0 0.0
    %1696 = vmatmul.mubr.f32.gmra.mrb[0].mxu0 %v1626
    %v1697 = vpop.f32.mrb[0].mxu0
    %v1698 = vadd.f32 %v1622, %v1697
    %v1699 = vpop.f32.mrb[0].mxu0
    %1700 = vmatprep.mubr.f32.mxu0 0.0
    %1701 = vmatmul.mubr.f32.gmra.mrb[0].mxu0 %v1629
    %v1702 = vpop.f32.mrb[0].mxu0
    %v1703 = vadd.f32 %v1622, %v1702
    %v1704 = vpop.f32.mrb[0].mxu0
    %1705 = vdwg.mxu0
    %v1706 = vadd.f32 %v1513, %v1698
    %v1707 = vadd.f32 %v1514, %v1703
    %v1708 = vld [vmem:[%s27] sm:$0x1]
    %v1709 = vld [vmem:[%s29] sm:$0x1]
    %v1710 = vsel %vm159, %v1706, 0.0
    %1711 = vadd.xlane.f32.xlu0 %v1710
    %v1712 = vpop.xlane.xlu0 %1711
    %v1713 = vsel %vm159, %v1707, 0.0
    %1714 = vadd.xlane.f32.xlu0 %v1713
    %v1715 = vpop.xlane.xlu0 %1714
    %v1716 = vmul.f32 %v1712, %v1478
    %v1717 = vmul.f32 %v1715, %v1478
    %v1718 = vsub.f32 %v1706, %v1716
    %v1719 = vsub.f32 %v1707, %v1717
    %v1720 = vmul.f32 %v1718, %v1718
    %v1721 = vmul.f32 %v1719, %v1719
    %v1722 = vsel %vm159, %v1720, 0.0
    %1723 = vadd.xlane.f32.xlu0 %v1722
    %v1724 = vpop.xlane.xlu0 %1723
    %v1725 = vsel %vm159, %v1721, 0.0
    %1726 = vadd.xlane.f32.xlu0 %v1725
    %v1727 = vpop.xlane.xlu0 %1726
    %v1728 = vmul.f32 %v1724, %v1478
    %v1729 = vmul.f32 %v1727, %v1478
    %v1730 = vadd.f32 %v1728, 1e-05
    %v1731 = vadd.f32 %v1729, 1e-05
    %v1732 = vrsqrt.pop %v1730
    %v1733 = vrsqrt.pop %v1731
    %v1734 = vmul.f32 %v1718, %v1732
    %v1735 = vmul.f32 %v1719, %v1733
    %v1737 = vlaneseq
    %v1738 = vshrl.u32 %v1737, 7
    %v1739 = vsub.s32 0, %v1738
    %v1740 = vrot.slane %v1708, %v1739
    %v1742 = vmul.f32 %v1734, %v1740
    %v1743 = vmul.f32 %v1735, %v1740
    %v1745 = vlaneseq
    %v1746 = vshrl.u32 %v1745, 7
    %v1747 = vsub.s32 0, %v1746
    %v1748 = vrot.slane %v1709, %v1747
    %v1750 = vadd.f32 %v1742, %v1748
    %v1751 = vadd.f32 %v1743, %v1748
    %v1752 = vld [vmem:[%s31] sm:$0xff]
    %v1753 = vld [vmem:[%s31 + $0x8] sm:$0xff]
    %v1754 = vld [vmem:[%s31 + $0x10] sm:$0xff]
    %v1755 = vld [vmem:[%s31 + $0x18] sm:$0xff]
    %v1757 = vsel %vm159, %v141, 0
    %v1760 = vsel %vm159, %v142, 0
    %1762 = vmatprep.subr.mxu0 0.0
    %1763 = vmatpush1.msra.mxu0 %v1752
    %1764 = vmatprep.subr.mxu0 0.0
    %1765 = vmatpush1.msra.mxu0 %v1753
    %1766 = vmatprep.subr.mxu0 0.0
    %1767 = vmatpush1.msra.mxu0 %v1754
    %1768 = vmatprep.subr.mxu0 0.0
    %1769 = vmatpush1.msra.mxu0 %v1755
    %1770 = vmatprep.subr.mxu0 0.0
    %1771 = vmatpush1.msra.mxu0 0.0
    %1772 = vmatprep.subr.mxu0 0.0
    %1773 = vmatpush1.msra.mxu0 0.0
    %1774 = vmatprep.subr.mxu0 0.0
    %1775 = vmatpush1.msra.mxu0 0.0
    %1776 = vmatprep.subr.mxu0 0.0
    %1777 = vmatpush1.msra.mxu0 0.0
    %1778 = vmatprep.subr.mxu0 0.0
    %1779 = vmatpush1.msra.mxu0 0.0
    %1780 = vmatprep.subr.mxu0 0.0
    %1781 = vmatpush1.msra.mxu0 0.0
    %1782 = vmatprep.subr.mxu0 0.0
    %1783 = vmatpush1.msra.mxu0 0.0
    %1784 = vmatprep.subr.mxu0 0.0
    %1785 = vmatpush1.msra.mxu0 0.0
    %1786 = vmatprep.subr.mxu0 0.0
    %1787 = vmatpush1.msra.mxu0 0.0
    %1788 = vmatprep.subr.mxu0 0.0
    %1789 = vmatpush1.msra.mxu0 0.0
    %1790 = vmatprep.subr.mxu0 0.0
    %1791 = vmatpush1.msra.mxu0 0.0
    %1792 = vmatprep.subr.mxu0 0.0
    %1793 = vmatpush1.msra.mxu0 0.0
    %1794 = vmatprep.subr.mxu0 0.0
    %1795 = vmatpush1.msra.mxu0 0.0
    %1796 = vmatprep.subr.mxu0 0.0
    %1797 = vmatpush1.msra.mxu0 0.0
    %1798 = vmatprep.subr.mxu0 0.0
    %1799 = vmatpush1.msra.mxu0 0.0
    %1800 = vmatprep.subr.mxu0 0.0
    %1801 = vmatpush1.msra.mxu0 0.0
    %1802 = vmatprep.subr.mxu0 0.0
    %1803 = vmatpush1.msra.mxu0 0.0
    %1804 = vmatprep.subr.mxu0 0.0
    %1805 = vmatpush1.msra.mxu0 0.0
    %1806 = vmatprep.subr.mxu0 0.0
    %1807 = vmatpush1.msra.mxu0 0.0
    %1808 = vmatprep.subr.mxu0 0.0
    %1809 = vmatpush1.msra.mxu0 0.0
    %1810 = vmatprep.subr.mxu0 0.0
    %1811 = vmatpush1.msra.mxu0 0.0
    %1812 = vmatprep.subr.mxu0 0.0
    %1813 = vmatpush1.msra.mxu0 0.0
    %1814 = vmatprep.subr.mxu0 0.0
    %1815 = vmatpush1.msra.mxu0 0.0
    %1816 = vmatprep.subr.mxu0 0.0
    %1817 = vmatpush1.msra.mxu0 0.0
    %1818 = vmatprep.subr.mxu0 0.0
    %1819 = vmatpush1.msra.mxu0 0.0
    %1820 = vmatprep.subr.mxu0 0.0
    %1821 = vmatpush1.msra.mxu0 0.0
    %1822 = vmatprep.subr.mxu0 0.0
    %1823 = vmatpush1.msra.mxu0 0.0
    %1824 = vmatprep.subr.mxu0 0.0
    %1825 = vmatpush1.msra.mxu0 0.0
    %1826 = vmatprep.mubr.f32.mxu0 0.0
    %1827 = vmatmul.mubr.f32.gmra.mrb[0].mxu0 %v1757
    %v1828 = vpop.f32.mrb[0].mxu0
    %v1829 = vadd.f32 0.0, %v1828
    %v1830 = vpop.f32.mrb[0].mxu0
    %1831 = vmatprep.mubr.f32.mxu0 0.0
    %1832 = vmatmul.mubr.f32.gmra.mrb[0].mxu0 %v1760
    %v1833 = vpop.f32.mrb[0].mxu0
    %v1834 = vadd.f32 0.0, %v1833
    %v1835 = vpop.f32.mrb[0].mxu0
    %1836 = vdwg.mxu0
    %v1837 = vld [vmem:[%s33] sm:$0xff]
    %v1838 = vld [vmem:[%s33 + $0x8] sm:$0xff]
    %v1839 = vld [vmem:[%s33 + $0x10] sm:$0xff]
    %v1840 = vld [vmem:[%s33 + $0x18] sm:$0xff]
    %1841 = vmatprep.subr.mxu0 0.0
    %1842 = vmatpush1.msra.mxu0 %v1837
    %1843 = vmatprep.subr.mxu0 0.0
    %1844 = vmatpush1.msra.mxu0 %v1838
    %1845 = vmatprep.subr.mxu0 0.0
    %1846 = vmatpush1.msra.mxu0 %v1839
    %1847 = vmatprep.subr.mxu0 0.0
    %1848 = vmatpush1.msra.mxu0 %v1840
    %1849 = vmatprep.subr.mxu0 0.0
    %1850 = vmatpush1.msra.mxu0 0.0
    %1851 = vmatprep.subr.mxu0 0.0
    %1852 = vmatpush1.msra.mxu0 0.0
    %1853 = vmatprep.subr.mxu0 0.0
    %1854 = vmatpush1.msra.mxu0 0.0
    %1855 = vmatprep.subr.mxu0 0.0
    %1856 = vmatpush1.msra.mxu0 0.0
    %1857 = vmatprep.subr.mxu0 0.0
    %1858 = vmatpush1.msra.mxu0 0.0
    %1859 = vmatprep.subr.mxu0 0.0
    %1860 = vmatpush1.msra.mxu0 0.0
    %1861 = vmatprep.subr.mxu0 0.0
    %1862 = vmatpush1.msra.mxu0 0.0
    %1863 = vmatprep.subr.mxu0 0.0
    %1864 = vmatpush1.msra.mxu0 0.0
    %1865 = vmatprep.subr.mxu0 0.0
    %1866 = vmatpush1.msra.mxu0 0.0
    %1867 = vmatprep.subr.mxu0 0.0
    %1868 = vmatpush1.msra.mxu0 0.0
    %1869 = vmatprep.subr.mxu0 0.0
    %1870 = vmatpush1.msra.mxu0 0.0
    %1871 = vmatprep.subr.mxu0 0.0
    %1872 = vmatpush1.msra.mxu0 0.0
    %1873 = vmatprep.subr.mxu0 0.0
    %1874 = vmatpush1.msra.mxu0 0.0
    %1875 = vmatprep.subr.mxu0 0.0
    %1876 = vmatpush1.msra.mxu0 0.0
    %1877 = vmatprep.subr.mxu0 0.0
    %1878 = vmatpush1.msra.mxu0 0.0
    %1879 = vmatprep.subr.mxu0 0.0
    %1880 = vmatpush1.msra.mxu0 0.0
    %1881 = vmatprep.subr.mxu0 0.0
    %1882 = vmatpush1.msra.mxu0 0.0
    %1883 = vmatprep.subr.mxu0 0.0
    %1884 = vmatpush1.msra.mxu0 0.0
    %1885 = vmatprep.subr.mxu0 0.0
    %1886 = vmatpush1.msra.mxu0 0.0
    %1887 = vmatprep.subr.mxu0 0.0
    %1888 = vmatpush1.msra.mxu0 0.0
    %1889 = vmatprep.subr.mxu0 0.0
    %1890 = vmatpush1.msra.mxu0 0.0
    %1891 = vmatprep.subr.mxu0 0.0
    %1892 = vmatpush1.msra.mxu0 0.0
    %1893 = vmatprep.subr.mxu0 0.0
    %1894 = vmatpush1.msra.mxu0 0.0
    %1895 = vmatprep.subr.mxu0 0.0
    %1896 = vmatpush1.msra.mxu0 0.0
    %1897 = vmatprep.subr.mxu0 0.0
    %1898 = vmatpush1.msra.mxu0 0.0
    %1899 = vmatprep.subr.mxu0 0.0
    %1900 = vmatpush1.msra.mxu0 0.0
    %1901 = vmatprep.subr.mxu0 0.0
    %1902 = vmatpush1.msra.mxu0 0.0
    %1903 = vmatprep.subr.mxu0 0.0
    %1904 = vmatpush1.msra.mxu0 0.0
    %1905 = vmatprep.mubr.f32.mxu0 0.0
    %1906 = vmatmul.mubr.f32.gmra.mrb[0].mxu0 %v1757
    %v1907 = vpop.f32.mrb[0].mxu0
    %v1908 = vadd.f32 0.0, %v1907
    %v1909 = vpop.f32.mrb[0].mxu0
    %1910 = vmatprep.mubr.f32.mxu0 0.0
    %1911 = vmatmul.mubr.f32.gmra.mrb[0].mxu0 %v1760
    %v1912 = vpop.f32.mrb[0].mxu0
    %v1913 = vadd.f32 0.0, %v1912
    %v1914 = vpop.f32.mrb[0].mxu0
    %1915 = vdwg.mxu0
    %v1916 = vld [vmem:[%s35] sm:$0xff]
    %v1917 = vld [vmem:[%s35 + $0x8] sm:$0xff]
    %v1918 = vld [vmem:[%s35 + $0x10] sm:$0xff]
    %v1919 = vld [vmem:[%s35 + $0x18] sm:$0xff]
    %1920 = vmatprep.subr.mxu0 0.0
    %1921 = vmatpush1.msra.mxu0 %v1916
    %1922 = vmatprep.subr.mxu0 0.0
    %1923 = vmatpush1.msra.mxu0 %v1917
    %1924 = vmatprep.subr.mxu0 0.0
    %1925 = vmatpush1.msra.mxu0 %v1918
    %1926 = vmatprep.subr.mxu0 0.0
    %1927 = vmatpush1.msra.mxu0 %v1919
    %1928 = vmatprep.subr.mxu0 0.0
    %1929 = vmatpush1.msra.mxu0 0.0
    %1930 = vmatprep.subr.mxu0 0.0
    %1931 = vmatpush1.msra.mxu0 0.0
    %1932 = vmatprep.subr.mxu0 0.0
    %1933 = vmatpush1.msra.mxu0 0.0
    %1934 = vmatprep.subr.mxu0 0.0
    %1935 = vmatpush1.msra.mxu0 0.0
    %1936 = vmatprep.subr.mxu0 0.0
    %1937 = vmatpush1.msra.mxu0 0.0
    %1938 = vmatprep.subr.mxu0 0.0
    %1939 = vmatpush1.msra.mxu0 0.0
    %1940 = vmatprep.subr.mxu0 0.0
    %1941 = vmatpush1.msra.mxu0 0.0
    %1942 = vmatprep.subr.mxu0 0.0
    %1943 = vmatpush1.msra.mxu0 0.0
    %1944 = vmatprep.subr.mxu0 0.0
    %1945 = vmatpush1.msra.mxu0 0.0
    %1946 = vmatprep.subr.mxu0 0.0
    %1947 = vmatpush1.msra.mxu0 0.0
    %1948 = vmatprep.subr.mxu0 0.0
    %1949 = vmatpush1.msra.mxu0 0.0
    %1950 = vmatprep.subr.mxu0 0.0
    %1951 = vmatpush1.msra.mxu0 0.0
    %1952 = vmatprep.subr.mxu0 0.0
    %1953 = vmatpush1.msra.mxu0 0.0
    %1954 = vmatprep.subr.mxu0 0.0
    %1955 = vmatpush1.msra.mxu0 0.0
    %1956 = vmatprep.subr.mxu0 0.0
    %1957 = vmatpush1.msra.mxu0 0.0
    %1958 = vmatprep.subr.mxu0 0.0
    %1959 = vmatpush1.msra.mxu0 0.0
    %1960 = vmatprep.subr.mxu0 0.0
    %1961 = vmatpush1.msra.mxu0 0.0
    %1962 = vmatprep.subr.mxu0 0.0
    %1963 = vmatpush1.msra.mxu0 0.0
    %1964 = vmatprep.subr.mxu0 0.0
    %1965 = vmatpush1.msra.mxu0 0.0
    %1966 = vmatprep.subr.mxu0 0.0
    %1967 = vmatpush1.msra.mxu0 0.0
    %1968 = vmatprep.subr.mxu0 0.0
    %1969 = vmatpush1.msra.mxu0 0.0
    %1970 = vmatprep.subr.mxu0 0.0
    %1971 = vmatpush1.msra.mxu0 0.0
    %1972 = vmatprep.subr.mxu0 0.0
    %1973 = vmatpush1.msra.mxu0 0.0
    %1974 = vmatprep.subr.mxu0 0.0
    %1975 = vmatpush1.msra.mxu0 0.0
    %1976 = vmatprep.subr.mxu0 0.0
    %1977 = vmatpush1.msra.mxu0 0.0
    %1978 = vmatprep.subr.mxu0 0.0
    %1979 = vmatpush1.msra.mxu0 0.0
    %1980 = vmatprep.subr.mxu0 0.0
    %1981 = vmatpush1.msra.mxu0 0.0
    %1982 = vmatprep.subr.mxu0 0.0
    %1983 = vmatpush1.msra.mxu0 0.0
    %1984 = vmatprep.mubr.f32.mxu0 0.0
    %1985 = vmatmul.mubr.f32.gmra.mrb[0].mxu0 %v1757
    %v1986 = vpop.f32.mrb[0].mxu0
    %v1987 = vadd.f32 0.0, %v1986
    %v1988 = vpop.f32.mrb[0].mxu0
    %1989 = vmatprep.mubr.f32.mxu0 0.0
    %1990 = vmatmul.mubr.f32.gmra.mrb[0].mxu0 %v1760
    %v1991 = vpop.f32.mrb[0].mxu0
    %v1992 = vadd.f32 0.0, %v1991
    %v1993 = vpop.f32.mrb[0].mxu0
    %1994 = vdwg.mxu0
    %v1996 = vsel %vm399, %v1829, 0
    %v1999 = vsel %vm399, %v1908, 0
    %2001 = vmatprep.subr.mxu0 0.0
    %2002 = vmatpush1.xpose.msra.mxu0 %v1999
    %2003 = vmatprep.subr.mxu0 0.0
    %2004 = vmatpush1.xpose.msra.mxu0 0.0
    %2005 = vmatprep.subr.mxu0 0.0
    %2006 = vmatpush1.xpose.msra.mxu0 0.0
    %2007 = vmatprep.subr.mxu0 0.0
    %2008 = vmatpush1.xpose.msra.mxu0 0.0
    %2009 = vmatprep.subr.mxu0 0.0
    %2010 = vmatpush1.xpose.msra.mxu0 0.0
    %2011 = vmatprep.subr.mxu0 0.0
    %2012 = vmatpush1.xpose.msra.mxu0 0.0
    %2013 = vmatprep.subr.mxu0 0.0
    %2014 = vmatpush1.xpose.msra.mxu0 0.0
    %2015 = vmatprep.subr.mxu0 0.0
    %2016 = vmatpush1.xpose.msra.mxu0 0.0
    %2017 = vmatprep.subr.mxu0 0.0
    %2018 = vmatpush1.xpose.msra.mxu0 0.0
    %2019 = vmatprep.subr.mxu0 0.0
    %2020 = vmatpush1.xpose.msra.mxu0 0.0
    %2021 = vmatprep.subr.mxu0 0.0
    %2022 = vmatpush1.xpose.msra.mxu0 0.0
    %2023 = vmatprep.subr.mxu0 0.0
    %2024 = vmatpush1.xpose.msra.mxu0 0.0
    %2025 = vmatprep.subr.mxu0 0.0
    %2026 = vmatpush1.xpose.msra.mxu0 0.0
    %2027 = vmatprep.subr.mxu0 0.0
    %2028 = vmatpush1.xpose.msra.mxu0 0.0
    %2029 = vmatprep.subr.mxu0 0.0
    %2030 = vmatpush1.xpose.msra.mxu0 0.0
    %2031 = vmatprep.subr.mxu0 0.0
    %2032 = vmatpush1.xpose.msra.mxu0 0.0
    %2033 = vmatprep.subr.mxu0 0.0
    %2034 = vmatpush1.xpose.msra.mxu0 0.0
    %2035 = vmatprep.subr.mxu0 0.0
    %2036 = vmatpush1.xpose.msra.mxu0 0.0
    %2037 = vmatprep.subr.mxu0 0.0
    %2038 = vmatpush1.xpose.msra.mxu0 0.0
    %2039 = vmatprep.subr.mxu0 0.0
    %2040 = vmatpush1.xpose.msra.mxu0 0.0
    %2041 = vmatprep.subr.mxu0 0.0
    %2042 = vmatpush1.xpose.msra.mxu0 0.0
    %2043 = vmatprep.subr.mxu0 0.0
    %2044 = vmatpush1.xpose.msra.mxu0 0.0
    %2045 = vmatprep.subr.mxu0 0.0
    %2046 = vmatpush1.xpose.msra.mxu0 0.0
    %2047 = vmatprep.subr.mxu0 0.0
    %2048 = vmatpush1.xpose.msra.mxu0 0.0
    %2049 = vmatprep.subr.mxu0 0.0
    %2050 = vmatpush1.xpose.msra.mxu0 0.0
    %2051 = vmatprep.subr.mxu0 0.0
    %2052 = vmatpush1.xpose.msra.mxu0 0.0
    %2053 = vmatprep.subr.mxu0 0.0
    %2054 = vmatpush1.xpose.msra.mxu0 0.0
    %2055 = vmatprep.subr.mxu0 0.0
    %2056 = vmatpush1.xpose.msra.mxu0 0.0
    %2057 = vmatprep.subr.mxu0 0.0
    %2058 = vmatpush1.xpose.msra.mxu0 0.0
    %2059 = vmatprep.subr.mxu0 0.0
    %2060 = vmatpush1.xpose.msra.mxu0 0.0
    %2061 = vmatprep.subr.mxu0 0.0
    %2062 = vmatpush1.xpose.msra.mxu0 0.0
    %2063 = vmatprep.subr.mxu0 0.0
    %2064 = vmatpush1.xpose.msra.mxu0 0.0
    %2065 = vmatprep.mubr.f32.mxu0 0.0
    %2066 = vmatmul.mubr.f32.gmra.mrb[0].mxu0 %v1996
    %v2067 = vpop.f32.mrb[0].mxu0
    %v2068 = vadd.f32 0.0, %v2067
    %v2069 = vpop.f32.mrb[0].mxu0
    %2070 = vdwg.mxu0
    %v2072 = vsel %vm399, %v1834, 0
    %v2075 = vsel %vm399, %v1913, 0
    %2077 = vmatprep.subr.mxu0 0.0
    %2078 = vmatpush1.xpose.msra.mxu0 %v2075
    %2079 = vmatprep.subr.mxu0 0.0
    %2080 = vmatpush1.xpose.msra.mxu0 0.0
    %2081 = vmatprep.subr.mxu0 0.0
    %2082 = vmatpush1.xpose.msra.mxu0 0.0
    %2083 = vmatprep.subr.mxu0 0.0
    %2084 = vmatpush1.xpose.msra.mxu0 0.0
    %2085 = vmatprep.subr.mxu0 0.0
    %2086 = vmatpush1.xpose.msra.mxu0 0.0
    %2087 = vmatprep.subr.mxu0 0.0
    %2088 = vmatpush1.xpose.msra.mxu0 0.0
    %2089 = vmatprep.subr.mxu0 0.0
    %2090 = vmatpush1.xpose.msra.mxu0 0.0
    %2091 = vmatprep.subr.mxu0 0.0
    %2092 = vmatpush1.xpose.msra.mxu0 0.0
    %2093 = vmatprep.subr.mxu0 0.0
    %2094 = vmatpush1.xpose.msra.mxu0 0.0
    %2095 = vmatprep.subr.mxu0 0.0
    %2096 = vmatpush1.xpose.msra.mxu0 0.0
    %2097 = vmatprep.subr.mxu0 0.0
    %2098 = vmatpush1.xpose.msra.mxu0 0.0
    %2099 = vmatprep.subr.mxu0 0.0
    %2100 = vmatpush1.xpose.msra.mxu0 0.0
    %2101 = vmatprep.subr.mxu0 0.0
    %2102 = vmatpush1.xpose.msra.mxu0 0.0
    %2103 = vmatprep.subr.mxu0 0.0
    %2104 = vmatpush1.xpose.msra.mxu0 0.0
    %2105 = vmatprep.subr.mxu0 0.0
    %2106 = vmatpush1.xpose.msra.mxu0 0.0
    %2107 = vmatprep.subr.mxu0 0.0
    %2108 = vmatpush1.xpose.msra.mxu0 0.0
    %2109 = vmatprep.subr.mxu0 0.0
    %2110 = vmatpush1.xpose.msra.mxu0 0.0
    %2111 = vmatprep.subr.mxu0 0.0
    %2112 = vmatpush1.xpose.msra.mxu0 0.0
    %2113 = vmatprep.subr.mxu0 0.0
    %2114 = vmatpush1.xpose.msra.mxu0 0.0
    %2115 = vmatprep.subr.mxu0 0.0
    %2116 = vmatpush1.xpose.msra.mxu0 0.0
    %2117 = vmatprep.subr.mxu0 0.0
    %2118 = vmatpush1.xpose.msra.mxu0 0.0
    %2119 = vmatprep.subr.mxu0 0.0
    %2120 = vmatpush1.xpose.msra.mxu0 0.0
    %2121 = vmatprep.subr.mxu0 0.0
    %2122 = vmatpush1.xpose.msra.mxu0 0.0
    %2123 = vmatprep.subr.mxu0 0.0
    %2124 = vmatpush1.xpose.msra.mxu0 0.0
    %2125 = vmatprep.subr.mxu0 0.0
    %2126 = vmatpush1.xpose.msra.mxu0 0.0
    %2127 = vmatprep.subr.mxu0 0.0
    %2128 = vmatpush1.xpose.msra.mxu0 0.0
    %2129 = vmatprep.subr.mxu0 0.0
    %2130 = vmatpush1.xpose.msra.mxu0 0.0
    %2131 = vmatprep.subr.mxu0 0.0
    %2132 = vmatpush1.xpose.msra.mxu0 0.0
    %2133 = vmatprep.subr.mxu0 0.0
    %2134 = vmatpush1.xpose.msra.mxu0 0.0
    %2135 = vmatprep.subr.mxu0 0.0
    %2136 = vmatpush1.xpose.msra.mxu0 0.0
    %2137 = vmatprep.subr.mxu0 0.0
    %2138 = vmatpush1.xpose.msra.mxu0 0.0
    %2139 = vmatprep.subr.mxu0 0.0
    %2140 = vmatpush1.xpose.msra.mxu0 0.0
    %2141 = vmatprep.mubr.f32.mxu0 0.0
    %2142 = vmatmul.mubr.f32.gmra.mrb[0].mxu0 %v2072
    %v2143 = vpop.f32.mrb[0].mxu0
    %v2144 = vadd.f32 0.0, %v2143
    %v2145 = vpop.f32.mrb[0].mxu0
    %2146 = vdwg.mxu0
    %v2147 = vmul.f32 %v2068, 0.25
    %v2148 = vmul.f32 %v2144, 0.25
    %v2149 = vadd.f32 %v2147, %v154
    %v2150 = vadd.f32 %v2148, %v154
    %v2151 = vsel %vm568, %v2149, -inf
    %2152 = vmax.xlane.f32.xlu0 %v2151
    %v2153 = vpop.xlane.xlu0 %2152
    %v2154 = vsel %vm568, %v2150, -inf
    %2155 = vmax.xlane.f32.xlu0 %v2154
    %v2156 = vpop.xlane.xlu0 %2155
    %v2157 = vsub.f32 %v2149, %v2153
    %v2158 = vsub.f32 %v2150, %v2156
    %v2159 = vmul.f32 %v2157, 1.442695
    %v2160 = vpow.pop %v2159
    %v2161 = vmul.f32 %v2158, 1.442695
    %v2162 = vpow.pop %v2161
    %v2163 = vsel %vm568, %v2160, 0.0
    %2164 = vadd.xlane.f32.xlu0 %v2163
    %v2165 = vpop.xlane.xlu0 %2164
    %v2166 = vsel %vm568, %v2162, 0.0
    %2167 = vadd.xlane.f32.xlu0 %v2166
    %v2168 = vpop.xlane.xlu0 %2167
    %v2169 = vrcp.pop %v2165
    %v2170 = vrcp.pop %v2168
    %v2171 = vmul.f32 %v2160, %v2169
    %v2172 = vmul.f32 %v2162, %v2170
    %v2174 = vsel %vm568, %v2171, 0
    %2176 = vmatprep.subr.mxu0 0.0
    %2177 = vmatpush1.msra.mxu0 %v1987
    %2178 = vmatprep.subr.mxu0 0.0
    %2179 = vmatpush1.msra.mxu0 0.0
    %2180 = vmatprep.subr.mxu0 0.0
    %2181 = vmatpush1.msra.mxu0 0.0
    %2182 = vmatprep.subr.mxu0 0.0
    %2183 = vmatpush1.msra.mxu0 0.0
    %2184 = vmatprep.subr.mxu0 0.0
    %2185 = vmatpush1.msra.mxu0 0.0
    %2186 = vmatprep.subr.mxu0 0.0
    %2187 = vmatpush1.msra.mxu0 0.0
    %2188 = vmatprep.subr.mxu0 0.0
    %2189 = vmatpush1.msra.mxu0 0.0
    %2190 = vmatprep.subr.mxu0 0.0
    %2191 = vmatpush1.msra.mxu0 0.0
    %2192 = vmatprep.subr.mxu0 0.0
    %2193 = vmatpush1.msra.mxu0 0.0
    %2194 = vmatprep.subr.mxu0 0.0
    %2195 = vmatpush1.msra.mxu0 0.0
    %2196 = vmatprep.subr.mxu0 0.0
    %2197 = vmatpush1.msra.mxu0 0.0
    %2198 = vmatprep.subr.mxu0 0.0
    %2199 = vmatpush1.msra.mxu0 0.0
    %2200 = vmatprep.subr.mxu0 0.0
    %2201 = vmatpush1.msra.mxu0 0.0
    %2202 = vmatprep.subr.mxu0 0.0
    %2203 = vmatpush1.msra.mxu0 0.0
    %2204 = vmatprep.subr.mxu0 0.0
    %2205 = vmatpush1.msra.mxu0 0.0
    %2206 = vmatprep.subr.mxu0 0.0
    %2207 = vmatpush1.msra.mxu0 0.0
    %2208 = vmatprep.subr.mxu0 0.0
    %2209 = vmatpush1.msra.mxu0 0.0
    %2210 = vmatprep.subr.mxu0 0.0
    %2211 = vmatpush1.msra.mxu0 0.0
    %2212 = vmatprep.subr.mxu0 0.0
    %2213 = vmatpush1.msra.mxu0 0.0
    %2214 = vmatprep.subr.mxu0 0.0
    %2215 = vmatpush1.msra.mxu0 0.0
    %2216 = vmatprep.subr.mxu0 0.0
    %2217 = vmatpush1.msra.mxu0 0.0
    %2218 = vmatprep.subr.mxu0 0.0
    %2219 = vmatpush1.msra.mxu0 0.0
    %2220 = vmatprep.subr.mxu0 0.0
    %2221 = vmatpush1.msra.mxu0 0.0
    %2222 = vmatprep.subr.mxu0 0.0
    %2223 = vmatpush1.msra.mxu0 0.0
    %2224 = vmatprep.subr.mxu0 0.0
    %2225 = vmatpush1.msra.mxu0 0.0
    %2226 = vmatprep.subr.mxu0 0.0
    %2227 = vmatpush1.msra.mxu0 0.0
    %2228 = vmatprep.subr.mxu0 0.0
    %2229 = vmatpush1.msra.mxu0 0.0
    %2230 = vmatprep.subr.mxu0 0.0
    %2231 = vmatpush1.msra.mxu0 0.0
    %2232 = vmatprep.subr.mxu0 0.0
    %2233 = vmatpush1.msra.mxu0 0.0
    %2234 = vmatprep.subr.mxu0 0.0
    %2235 = vmatpush1.msra.mxu0 0.0
    %2236 = vmatprep.subr.mxu0 0.0
    %2237 = vmatpush1.msra.mxu0 0.0
    %2238 = vmatprep.subr.mxu0 0.0
    %2239 = vmatpush1.msra.mxu0 0.0
    %2240 = vmatprep.mubr.f32.mxu0 0.0
    %2241 = vmatmul.mubr.f32.gmra.mrb[0].mxu0 %v2174
    %v2242 = vpop.f32.mrb[0].mxu0
    %v2243 = vadd.f32 0.0, %v2242
    %v2244 = vpop.f32.mrb[0].mxu0
    %2245 = vdwg.mxu0
    %v2247 = vsel %vm568, %v2172, 0
    %2249 = vmatprep.subr.mxu0 0.0
    %2250 = vmatpush1.msra.mxu0 %v1992
    %2251 = vmatprep.subr.mxu0 0.0
    %2252 = vmatpush1.msra.mxu0 0.0
    %2253 = vmatprep.subr.mxu0 0.0
    %2254 = vmatpush1.msra.mxu0 0.0
    %2255 = vmatprep.subr.mxu0 0.0
    %2256 = vmatpush1.msra.mxu0 0.0
    %2257 = vmatprep.subr.mxu0 0.0
    %2258 = vmatpush1.msra.mxu0 0.0
    %2259 = vmatprep.subr.mxu0 0.0
    %2260 = vmatpush1.msra.mxu0 0.0
    %2261 = vmatprep.subr.mxu0 0.0
    %2262 = vmatpush1.msra.mxu0 0.0
    %2263 = vmatprep.subr.mxu0 0.0
    %2264 = vmatpush1.msra.mxu0 0.0
    %2265 = vmatprep.subr.mxu0 0.0
    %2266 = vmatpush1.msra.mxu0 0.0
    %2267 = vmatprep.subr.mxu0 0.0
    %2268 = vmatpush1.msra.mxu0 0.0
    %2269 = vmatprep.subr.mxu0 0.0
    %2270 = vmatpush1.msra.mxu0 0.0
    %2271 = vmatprep.subr.mxu0 0.0
    %2272 = vmatpush1.msra.mxu0 0.0
    %2273 = vmatprep.subr.mxu0 0.0
    %2274 = vmatpush1.msra.mxu0 0.0
    %2275 = vmatprep.subr.mxu0 0.0
    %2276 = vmatpush1.msra.mxu0 0.0
    %2277 = vmatprep.subr.mxu0 0.0
    %2278 = vmatpush1.msra.mxu0 0.0
    %2279 = vmatprep.subr.mxu0 0.0
    %2280 = vmatpush1.msra.mxu0 0.0
    %2281 = vmatprep.subr.mxu0 0.0
    %2282 = vmatpush1.msra.mxu0 0.0
    %2283 = vmatprep.subr.mxu0 0.0
    %2284 = vmatpush1.msra.mxu0 0.0
    %2285 = vmatprep.subr.mxu0 0.0
    %2286 = vmatpush1.msra.mxu0 0.0
    %2287 = vmatprep.subr.mxu0 0.0
    %2288 = vmatpush1.msra.mxu0 0.0
    %2289 = vmatprep.subr.mxu0 0.0
    %2290 = vmatpush1.msra.mxu0 0.0
    %2291 = vmatprep.subr.mxu0 0.0
    %2292 = vmatpush1.msra.mxu0 0.0
    %2293 = vmatprep.subr.mxu0 0.0
    %2294 = vmatpush1.msra.mxu0 0.0
    %2295 = vmatprep.subr.mxu0 0.0
    %2296 = vmatpush1.msra.mxu0 0.0
    %2297 = vmatprep.subr.mxu0 0.0
    %2298 = vmatpush1.msra.mxu0 0.0
    %2299 = vmatprep.subr.mxu0 0.0
    %2300 = vmatpush1.msra.mxu0 0.0
    %2301 = vmatprep.subr.mxu0 0.0
    %2302 = vmatpush1.msra.mxu0 0.0
    %2303 = vmatprep.subr.mxu0 0.0
    %2304 = vmatpush1.msra.mxu0 0.0
    %2305 = vmatprep.subr.mxu0 0.0
    %2306 = vmatpush1.msra.mxu0 0.0
    %2307 = vmatprep.subr.mxu0 0.0
    %2308 = vmatpush1.msra.mxu0 0.0
    %2309 = vmatprep.subr.mxu0 0.0
    %2310 = vmatpush1.msra.mxu0 0.0
    %2311 = vmatprep.subr.mxu0 0.0
    %2312 = vmatpush1.msra.mxu0 0.0
    %2313 = vmatprep.mubr.f32.mxu0 0.0
    %2314 = vmatmul.mubr.f32.gmra.mrb[0].mxu0 %v2247
    %v2315 = vpop.f32.mrb[0].mxu0
    %v2316 = vadd.f32 0.0, %v2315
    %v2317 = vpop.f32.mrb[0].mxu0
    %2318 = vdwg.mxu0
    %v2319 = vld [vmem:[%s37] sm:$0xff]
    %v2320 = vld [vmem:[%s37 + $0x8] sm:$0xff]
    %s2321 = scalar_lea.vmem %s31, 32
    %v2322 = vld [vmem:[%s2321] sm:$0xff]
    %v2323 = vld [vmem:[%s2321 + $0x8] sm:$0xff]
    %v2324 = vld [vmem:[%s2321 + $0x10] sm:$0xff]
    %v2325 = vld [vmem:[%s2321 + $0x18] sm:$0xff]
    %2326 = vmatprep.subr.mxu0 0.0
    %2327 = vmatpush1.msra.mxu0 %v2322
    %2328 = vmatprep.subr.mxu0 0.0
    %2329 = vmatpush1.msra.mxu0 %v2323
    %2330 = vmatprep.subr.mxu0 0.0
    %2331 = vmatpush1.msra.mxu0 %v2324
    %2332 = vmatprep.subr.mxu0 0.0
    %2333 = vmatpush1.msra.mxu0 %v2325
    %2334 = vmatprep.subr.mxu0 0.0
    %2335 = vmatpush1.msra.mxu0 0.0
    %2336 = vmatprep.subr.mxu0 0.0
    %2337 = vmatpush1.msra.mxu0 0.0
    %2338 = vmatprep.subr.mxu0 0.0
    %2339 = vmatpush1.msra.mxu0 0.0
    %2340 = vmatprep.subr.mxu0 0.0
    %2341 = vmatpush1.msra.mxu0 0.0
    %2342 = vmatprep.subr.mxu0 0.0
    %2343 = vmatpush1.msra.mxu0 0.0
    %2344 = vmatprep.subr.mxu0 0.0
    %2345 = vmatpush1.msra.mxu0 0.0
    %2346 = vmatprep.subr.mxu0 0.0
    %2347 = vmatpush1.msra.mxu0 0.0
    %2348 = vmatprep.subr.mxu0 0.0
    %2349 = vmatpush1.msra.mxu0 0.0
    %2350 = vmatprep.subr.mxu0 0.0
    %2351 = vmatpush1.msra.mxu0 0.0
    %2352 = vmatprep.subr.mxu0 0.0
    %2353 = vmatpush1.msra.mxu0 0.0
    %2354 = vmatprep.subr.mxu0 0.0
    %2355 = vmatpush1.msra.mxu0 0.0
    %2356 = vmatprep.subr.mxu0 0.0
    %2357 = vmatpush1.msra.mxu0 0.0
    %2358 = vmatprep.subr.mxu0 0.0
    %2359 = vmatpush1.msra.mxu0 0.0
    %2360 = vmatprep.subr.mxu0 0.0
    %2361 = vmatpush1.msra.mxu0 0.0
    %2362 = vmatprep.subr.mxu0 0.0
    %2363 = vmatpush1.msra.mxu0 0.0
    %2364 = vmatprep.subr.mxu0 0.0
    %2365 = vmatpush1.msra.mxu0 0.0
    %2366 = vmatprep.subr.mxu0 0.0
    %2367 = vmatpush1.msra.mxu0 0.0
    %2368 = vmatprep.subr.mxu0 0.0
    %2369 = vmatpush1.msra.mxu0 0.0
    %2370 = vmatprep.subr.mxu0 0.0
    %2371 = vmatpush1.msra.mxu0 0.0
    %2372 = vmatprep.subr.mxu0 0.0
    %2373 = vmatpush1.msra.mxu0 0.0
    %2374 = vmatprep.subr.mxu0 0.0
    %2375 = vmatpush1.msra.mxu0 0.0
    %2376 = vmatprep.subr.mxu0 0.0
    %2377 = vmatpush1.msra.mxu0 0.0
    %2378 = vmatprep.subr.mxu0 0.0
    %2379 = vmatpush1.msra.mxu0 0.0
    %2380 = vmatprep.subr.mxu0 0.0
    %2381 = vmatpush1.msra.mxu0 0.0
    %2382 = vmatprep.subr.mxu0 0.0
    %2383 = vmatpush1.msra.mxu0 0.0
    %2384 = vmatprep.subr.mxu0 0.0
    %2385 = vmatpush1.msra.mxu0 0.0
    %2386 = vmatprep.subr.mxu0 0.0
    %2387 = vmatpush1.msra.mxu0 0.0
    %2388 = vmatprep.subr.mxu0 0.0
    %2389 = vmatpush1.msra.mxu0 0.0
    %2390 = vmatprep.mubr.f32.mxu0 0.0
    %2391 = vmatmul.mubr.f32.gmra.mrb[0].mxu0 %v1757
    %v2392 = vpop.f32.mrb[0].mxu0
    %v2393 = vadd.f32 0.0, %v2392
    %v2394 = vpop.f32.mrb[0].mxu0
    %2395 = vmatprep.mubr.f32.mxu0 0.0
    %2396 = vmatmul.mubr.f32.gmra.mrb[0].mxu0 %v1760
    %v2397 = vpop.f32.mrb[0].mxu0
    %v2398 = vadd.f32 0.0, %v2397
    %v2399 = vpop.f32.mrb[0].mxu0
    %2400 = vdwg.mxu0
    %s2401 = scalar_lea.vmem %s33, 32
    %v2402 = vld [vmem:[%s2401] sm:$0xff]
    %v2403 = vld [vmem:[%s2401 + $0x8] sm:$0xff]
    %v2404 = vld [vmem:[%s2401 + $0x10] sm:$0xff]
    %v2405 = vld [vmem:[%s2401 + $0x18] sm:$0xff]
    %2406 = vmatprep.subr.mxu0 0.0
    %2407 = vmatpush1.msra.mxu0 %v2402
    %2408 = vmatprep.subr.mxu0 0.0
    %2409 = vmatpush1.msra.mxu0 %v2403
    %2410 = vmatprep.subr.mxu0 0.0
    %2411 = vmatpush1.msra.mxu0 %v2404
    %2412 = vmatprep.subr.mxu0 0.0
    %2413 = vmatpush1.msra.mxu0 %v2405
    %2414 = vmatprep.subr.mxu0 0.0
    %2415 = vmatpush1.msra.mxu0 0.0
    %2416 = vmatprep.subr.mxu0 0.0
    %2417 = vmatpush1.msra.mxu0 0.0
    %2418 = vmatprep.subr.mxu0 0.0
    %2419 = vmatpush1.msra.mxu0 0.0
    %2420 = vmatprep.subr.mxu0 0.0
    %2421 = vmatpush1.msra.mxu0 0.0
    %2422 = vmatprep.subr.mxu0 0.0
    %2423 = vmatpush1.msra.mxu0 0.0
    %2424 = vmatprep.subr.mxu0 0.0
    %2425 = vmatpush1.msra.mxu0 0.0
    %2426 = vmatprep.subr.mxu0 0.0
    %2427 = vmatpush1.msra.mxu0 0.0
    %2428 = vmatprep.subr.mxu0 0.0
    %2429 = vmatpush1.msra.mxu0 0.0
    %2430 = vmatprep.subr.mxu0 0.0
    %2431 = vmatpush1.msra.mxu0 0.0
    %2432 = vmatprep.subr.mxu0 0.0
    %2433 = vmatpush1.msra.mxu0 0.0
    %2434 = vmatprep.subr.mxu0 0.0
    %2435 = vmatpush1.msra.mxu0 0.0
    %2436 = vmatprep.subr.mxu0 0.0
    %2437 = vmatpush1.msra.mxu0 0.0
    %2438 = vmatprep.subr.mxu0 0.0
    %2439 = vmatpush1.msra.mxu0 0.0
    %2440 = vmatprep.subr.mxu0 0.0
    %2441 = vmatpush1.msra.mxu0 0.0
    %2442 = vmatprep.subr.mxu0 0.0
    %2443 = vmatpush1.msra.mxu0 0.0
    %2444 = vmatprep.subr.mxu0 0.0
    %2445 = vmatpush1.msra.mxu0 0.0
    %2446 = vmatprep.subr.mxu0 0.0
    %2447 = vmatpush1.msra.mxu0 0.0
    %2448 = vmatprep.subr.mxu0 0.0
    %2449 = vmatpush1.msra.mxu0 0.0
    %2450 = vmatprep.subr.mxu0 0.0
    %2451 = vmatpush1.msra.mxu0 0.0
    %2452 = vmatprep.subr.mxu0 0.0
    %2453 = vmatpush1.msra.mxu0 0.0
    %2454 = vmatprep.subr.mxu0 0.0
    %2455 = vmatpush1.msra.mxu0 0.0
    %2456 = vmatprep.subr.mxu0 0.0
    %2457 = vmatpush1.msra.mxu0 0.0
    %2458 = vmatprep.subr.mxu0 0.0
    %2459 = vmatpush1.msra.mxu0 0.0
    %2460 = vmatprep.subr.mxu0 0.0
    %2461 = vmatpush1.msra.mxu0 0.0
    %2462 = vmatprep.subr.mxu0 0.0
    %2463 = vmatpush1.msra.mxu0 0.0
    %2464 = vmatprep.subr.mxu0 0.0
    %2465 = vmatpush1.msra.mxu0 0.0
    %2466 = vmatprep.subr.mxu0 0.0
    %2467 = vmatpush1.msra.mxu0 0.0
    %2468 = vmatprep.subr.mxu0 0.0
    %2469 = vmatpush1.msra.mxu0 0.0
    %2470 = vmatprep.mubr.f32.mxu0 0.0
    %2471 = vmatmul.mubr.f32.gmra.mrb[0].mxu0 %v1757
    %v2472 = vpop.f32.mrb[0].mxu0
    %v2473 = vadd.f32 0.0, %v2472
    %v2474 = vpop.f32.mrb[0].mxu0
    %2475 = vmatprep.mubr.f32.mxu0 0.0
    %2476 = vmatmul.mubr.f32.gmra.mrb[0].mxu0 %v1760
    %v2477 = vpop.f32.mrb[0].mxu0
    %v2478 = vadd.f32 0.0, %v2477
    %v2479 = vpop.f32.mrb[0].mxu0
    %2480 = vdwg.mxu0
    %s2481 = scalar_lea.vmem %s35, 32
    %v2482 = vld [vmem:[%s2481] sm:$0xff]
    %v2483 = vld [vmem:[%s2481 + $0x8] sm:$0xff]
    %v2484 = vld [vmem:[%s2481 + $0x10] sm:$0xff]
    %v2485 = vld [vmem:[%s2481 + $0x18] sm:$0xff]
    %2486 = vmatprep.subr.mxu0 0.0
    %2487 = vmatpush1.msra.mxu0 %v2482
    %2488 = vmatprep.subr.mxu0 0.0
    %2489 = vmatpush1.msra.mxu0 %v2483
    %2490 = vmatprep.subr.mxu0 0.0
    %2491 = vmatpush1.msra.mxu0 %v2484
    %2492 = vmatprep.subr.mxu0 0.0
    %2493 = vmatpush1.msra.mxu0 %v2485
    %2494 = vmatprep.subr.mxu0 0.0
    %2495 = vmatpush1.msra.mxu0 0.0
    %2496 = vmatprep.subr.mxu0 0.0
    %2497 = vmatpush1.msra.mxu0 0.0
    %2498 = vmatprep.subr.mxu0 0.0
    %2499 = vmatpush1.msra.mxu0 0.0
    %2500 = vmatprep.subr.mxu0 0.0
    %2501 = vmatpush1.msra.mxu0 0.0
    %2502 = vmatprep.subr.mxu0 0.0
    %2503 = vmatpush1.msra.mxu0 0.0
    %2504 = vmatprep.subr.mxu0 0.0
    %2505 = vmatpush1.msra.mxu0 0.0
    %2506 = vmatprep.subr.mxu0 0.0
    %2507 = vmatpush1.msra.mxu0 0.0
    %2508 = vmatprep.subr.mxu0 0.0
    %2509 = vmatpush1.msra.mxu0 0.0
    %2510 = vmatprep.subr.mxu0 0.0
    %2511 = vmatpush1.msra.mxu0 0.0
    %2512 = vmatprep.subr.mxu0 0.0
    %2513 = vmatpush1.msra.mxu0 0.0
    %2514 = vmatprep.subr.mxu0 0.0
    %2515 = vmatpush1.msra.mxu0 0.0
    %2516 = vmatprep.subr.mxu0 0.0
    %2517 = vmatpush1.msra.mxu0 0.0
    %2518 = vmatprep.subr.mxu0 0.0
    %2519 = vmatpush1.msra.mxu0 0.0
    %2520 = vmatprep.subr.mxu0 0.0
    %2521 = vmatpush1.msra.mxu0 0.0
    %2522 = vmatprep.subr.mxu0 0.0
    %2523 = vmatpush1.msra.mxu0 0.0
    %2524 = vmatprep.subr.mxu0 0.0
    %2525 = vmatpush1.msra.mxu0 0.0
    %2526 = vmatprep.subr.mxu0 0.0
    %2527 = vmatpush1.msra.mxu0 0.0
    %2528 = vmatprep.subr.mxu0 0.0
    %2529 = vmatpush1.msra.mxu0 0.0
    %2530 = vmatprep.subr.mxu0 0.0
    %2531 = vmatpush1.msra.mxu0 0.0
    %2532 = vmatprep.subr.mxu0 0.0
    %2533 = vmatpush1.msra.mxu0 0.0
    %2534 = vmatprep.subr.mxu0 0.0
    %2535 = vmatpush1.msra.mxu0 0.0
    %2536 = vmatprep.subr.mxu0 0.0
    %2537 = vmatpush1.msra.mxu0 0.0
    %2538 = vmatprep.subr.mxu0 0.0
    %2539 = vmatpush1.msra.mxu0 0.0
    %2540 = vmatprep.subr.mxu0 0.0
    %2541 = vmatpush1.msra.mxu0 0.0
    %2542 = vmatprep.subr.mxu0 0.0
    %2543 = vmatpush1.msra.mxu0 0.0
    %2544 = vmatprep.subr.mxu0 0.0
    %2545 = vmatpush1.msra.mxu0 0.0
    %2546 = vmatprep.subr.mxu0 0.0
    %2547 = vmatpush1.msra.mxu0 0.0
    %2548 = vmatprep.subr.mxu0 0.0
    %2549 = vmatpush1.msra.mxu0 0.0
    %2550 = vmatprep.mubr.f32.mxu0 0.0
    %2551 = vmatmul.mubr.f32.gmra.mrb[0].mxu0 %v1757
    %v2552 = vpop.f32.mrb[0].mxu0
    %v2553 = vadd.f32 0.0, %v2552
    %v2554 = vpop.f32.mrb[0].mxu0
    %2555 = vmatprep.mubr.f32.mxu0 0.0
    %2556 = vmatmul.mubr.f32.gmra.mrb[0].mxu0 %v1760
    %v2557 = vpop.f32.mrb[0].mxu0
    %v2558 = vadd.f32 0.0, %v2557
    %v2559 = vpop.f32.mrb[0].mxu0
    %2560 = vdwg.mxu0
    %v2562 = vsel %vm399, %v2393, 0
    %v2565 = vsel %vm399, %v2473, 0
    %2567 = vmatprep.subr.mxu0 0.0
    %2568 = vmatpush1.xpose.msra.mxu0 %v2565
    %2569 = vmatprep.subr.mxu0 0.0
    %2570 = vmatpush1.xpose.msra.mxu0 0.0
    %2571 = vmatprep.subr.mxu0 0.0
    %2572 = vmatpush1.xpose.msra.mxu0 0.0
    %2573 = vmatprep.subr.mxu0 0.0
    %2574 = vmatpush1.xpose.msra.mxu0 0.0
    %2575 = vmatprep.subr.mxu0 0.0
    %2576 = vmatpush1.xpose.msra.mxu0 0.0
    %2577 = vmatprep.subr.mxu0 0.0
    %2578 = vmatpush1.xpose.msra.mxu0 0.0
    %2579 = vmatprep.subr.mxu0 0.0
    %2580 = vmatpush1.xpose.msra.mxu0 0.0
    %2581 = vmatprep.subr.mxu0 0.0
    %2582 = vmatpush1.xpose.msra.mxu0 0.0
    %2583 = vmatprep.subr.mxu0 0.0
    %2584 = vmatpush1.xpose.msra.mxu0 0.0
    %2585 = vmatprep.subr.mxu0 0.0
    %2586 = vmatpush1.xpose.msra.mxu0 0.0
    %2587 = vmatprep.subr.mxu0 0.0
    %2588 = vmatpush1.xpose.msra.mxu0 0.0
    %2589 = vmatprep.subr.mxu0 0.0
    %2590 = vmatpush1.xpose.msra.mxu0 0.0
    %2591 = vmatprep.subr.mxu0 0.0
    %2592 = vmatpush1.xpose.msra.mxu0 0.0
    %2593 = vmatprep.subr.mxu0 0.0
    %2594 = vmatpush1.xpose.msra.mxu0 0.0
    %2595 = vmatprep.subr.mxu0 0.0
    %2596 = vmatpush1.xpose.msra.mxu0 0.0
    %2597 = vmatprep.subr.mxu0 0.0
    %2598 = vmatpush1.xpose.msra.mxu0 0.0
    %2599 = vmatprep.subr.mxu0 0.0
    %2600 = vmatpush1.xpose.msra.mxu0 0.0
    %2601 = vmatprep.subr.mxu0 0.0
    %2602 = vmatpush1.xpose.msra.mxu0 0.0
    %2603 = vmatprep.subr.mxu0 0.0
    %2604 = vmatpush1.xpose.msra.mxu0 0.0
    %2605 = vmatprep.subr.mxu0 0.0
    %2606 = vmatpush1.xpose.msra.mxu0 0.0
    %2607 = vmatprep.subr.mxu0 0.0
    %2608 = vmatpush1.xpose.msra.mxu0 0.0
    %2609 = vmatprep.subr.mxu0 0.0
    %2610 = vmatpush1.xpose.msra.mxu0 0.0
    %2611 = vmatprep.subr.mxu0 0.0
    %2612 = vmatpush1.xpose.msra.mxu0 0.0
    %2613 = vmatprep.subr.mxu0 0.0
    %2614 = vmatpush1.xpose.msra.mxu0 0.0
    %2615 = vmatprep.subr.mxu0 0.0
    %2616 = vmatpush1.xpose.msra.mxu0 0.0
    %2617 = vmatprep.subr.mxu0 0.0
    %2618 = vmatpush1.xpose.msra.mxu0 0.0
    %2619 = vmatprep.subr.mxu0 0.0
    %2620 = vmatpush1.xpose.msra.mxu0 0.0
    %2621 = vmatprep.subr.mxu0 0.0
    %2622 = vmatpush1.xpose.msra.mxu0 0.0
    %2623 = vmatprep.subr.mxu0 0.0
    %2624 = vmatpush1.xpose.msra.mxu0 0.0
    %2625 = vmatprep.subr.mxu0 0.0
    %2626 = vmatpush1.xpose.msra.mxu0 0.0
    %2627 = vmatprep.subr.mxu0 0.0
    %2628 = vmatpush1.xpose.msra.mxu0 0.0
    %2629 = vmatprep.subr.mxu0 0.0
    %2630 = vmatpush1.xpose.msra.mxu0 0.0
    %2631 = vmatprep.mubr.f32.mxu0 0.0
    %2632 = vmatmul.mubr.f32.gmra.mrb[0].mxu0 %v2562
    %v2633 = vpop.f32.mrb[0].mxu0
    %v2634 = vadd.f32 0.0, %v2633
    %v2635 = vpop.f32.mrb[0].mxu0
    %2636 = vdwg.mxu0
    %v2638 = vsel %vm399, %v2398, 0
    %v2641 = vsel %vm399, %v2478, 0
    %2643 = vmatprep.subr.mxu0 0.0
    %2644 = vmatpush1.xpose.msra.mxu0 %v2641
    %2645 = vmatprep.subr.mxu0 0.0
    %2646 = vmatpush1.xpose.msra.mxu0 0.0
    %2647 = vmatprep.subr.mxu0 0.0
    %2648 = vmatpush1.xpose.msra.mxu0 0.0
    %2649 = vmatprep.subr.mxu0 0.0
    %2650 = vmatpush1.xpose.msra.mxu0 0.0
    %2651 = vmatprep.subr.mxu0 0.0
    %2652 = vmatpush1.xpose.msra.mxu0 0.0
    %2653 = vmatprep.subr.mxu0 0.0
    %2654 = vmatpush1.xpose.msra.mxu0 0.0
    %2655 = vmatprep.subr.mxu0 0.0
    %2656 = vmatpush1.xpose.msra.mxu0 0.0
    %2657 = vmatprep.subr.mxu0 0.0
    %2658 = vmatpush1.xpose.msra.mxu0 0.0
    %2659 = vmatprep.subr.mxu0 0.0
    %2660 = vmatpush1.xpose.msra.mxu0 0.0
    %2661 = vmatprep.subr.mxu0 0.0
    %2662 = vmatpush1.xpose.msra.mxu0 0.0
    %2663 = vmatprep.subr.mxu0 0.0
    %2664 = vmatpush1.xpose.msra.mxu0 0.0
    %2665 = vmatprep.subr.mxu0 0.0
    %2666 = vmatpush1.xpose.msra.mxu0 0.0
    %2667 = vmatprep.subr.mxu0 0.0
    %2668 = vmatpush1.xpose.msra.mxu0 0.0
    %2669 = vmatprep.subr.mxu0 0.0
    %2670 = vmatpush1.xpose.msra.mxu0 0.0
    %2671 = vmatprep.subr.mxu0 0.0
    %2672 = vmatpush1.xpose.msra.mxu0 0.0
    %2673 = vmatprep.subr.mxu0 0.0
    %2674 = vmatpush1.xpose.msra.mxu0 0.0
    %2675 = vmatprep.subr.mxu0 0.0
    %2676 = vmatpush1.xpose.msra.mxu0 0.0
    %2677 = vmatprep.subr.mxu0 0.0
    %2678 = vmatpush1.xpose.msra.mxu0 0.0
    %2679 = vmatprep.subr.mxu0 0.0
    %2680 = vmatpush1.xpose.msra.mxu0 0.0
    %2681 = vmatprep.subr.mxu0 0.0
    %2682 = vmatpush1.xpose.msra.mxu0 0.0
    %2683 = vmatprep.subr.mxu0 0.0
    %2684 = vmatpush1.xpose.msra.mxu0 0.0
    %2685 = vmatprep.subr.mxu0 0.0
    %2686 = vmatpush1.xpose.msra.mxu0 0.0
    %2687 = vmatprep.subr.mxu0 0.0
    %2688 = vmatpush1.xpose.msra.mxu0 0.0
    %2689 = vmatprep.subr.mxu0 0.0
    %2690 = vmatpush1.xpose.msra.mxu0 0.0
    %2691 = vmatprep.subr.mxu0 0.0
    %2692 = vmatpush1.xpose.msra.mxu0 0.0
    %2693 = vmatprep.subr.mxu0 0.0
    %2694 = vmatpush1.xpose.msra.mxu0 0.0
    %2695 = vmatprep.subr.mxu0 0.0
    %2696 = vmatpush1.xpose.msra.mxu0 0.0
    %2697 = vmatprep.subr.mxu0 0.0
    %2698 = vmatpush1.xpose.msra.mxu0 0.0
    %2699 = vmatprep.subr.mxu0 0.0
    %2700 = vmatpush1.xpose.msra.mxu0 0.0
    %2701 = vmatprep.subr.mxu0 0.0
    %2702 = vmatpush1.xpose.msra.mxu0 0.0
    %2703 = vmatprep.subr.mxu0 0.0
    %2704 = vmatpush1.xpose.msra.mxu0 0.0
    %2705 = vmatprep.subr.mxu0 0.0
    %2706 = vmatpush1.xpose.msra.mxu0 0.0
    %2707 = vmatprep.mubr.f32.mxu0 0.0
    %2708 = vmatmul.mubr.f32.gmra.mrb[0].mxu0 %v2638
    %v2709 = vpop.f32.mrb[0].mxu0
    %v2710 = vadd.f32 0.0, %v2709
    %v2711 = vpop.f32.mrb[0].mxu0
    %2712 = vdwg.mxu0
    %v2713 = vmul.f32 %v2634, 0.25
    %v2714 = vmul.f32 %v2710, 0.25
    %v2715 = vadd.f32 %v2713, %v154
    %v2716 = vadd.f32 %v2714, %v154
    %v2717 = vsel %vm568, %v2715, -inf
    %2718 = vmax.xlane.f32.xlu0 %v2717
    %v2719 = vpop.xlane.xlu0 %2718
    %v2720 = vsel %vm568, %v2716, -inf
    %2721 = vmax.xlane.f32.xlu0 %v2720
    %v2722 = vpop.xlane.xlu0 %2721
    %v2723 = vsub.f32 %v2715, %v2719
    %v2724 = vsub.f32 %v2716, %v2722
    %v2725 = vmul.f32 %v2723, 1.442695
    %v2726 = vpow.pop %v2725
    %v2727 = vmul.f32 %v2724, 1.442695
    %v2728 = vpow.pop %v2727
    %v2729 = vsel %vm568, %v2726, 0.0
    %2730 = vadd.xlane.f32.xlu0 %v2729
    %v2731 = vpop.xlane.xlu0 %2730
    %v2732 = vsel %vm568, %v2728, 0.0
    %2733 = vadd.xlane.f32.xlu0 %v2732
    %v2734 = vpop.xlane.xlu0 %2733
    %v2735 = vrcp.pop %v2731
    %v2736 = vrcp.pop %v2734
    %v2737 = vmul.f32 %v2726, %v2735
    %v2738 = vmul.f32 %v2728, %v2736
    %v2740 = vsel %vm568, %v2737, 0
    %2742 = vmatprep.subr.mxu0 0.0
    %2743 = vmatpush1.msra.mxu0 %v2553
    %2744 = vmatprep.subr.mxu0 0.0
    %2745 = vmatpush1.msra.mxu0 0.0
    %2746 = vmatprep.subr.mxu0 0.0
    %2747 = vmatpush1.msra.mxu0 0.0
    %2748 = vmatprep.subr.mxu0 0.0
    %2749 = vmatpush1.msra.mxu0 0.0
    %2750 = vmatprep.subr.mxu0 0.0
    %2751 = vmatpush1.msra.mxu0 0.0
    %2752 = vmatprep.subr.mxu0 0.0
    %2753 = vmatpush1.msra.mxu0 0.0
    %2754 = vmatprep.subr.mxu0 0.0
    %2755 = vmatpush1.msra.mxu0 0.0
    %2756 = vmatprep.subr.mxu0 0.0
    %2757 = vmatpush1.msra.mxu0 0.0
    %2758 = vmatprep.subr.mxu0 0.0
    %2759 = vmatpush1.msra.mxu0 0.0
    %2760 = vmatprep.subr.mxu0 0.0
    %2761 = vmatpush1.msra.mxu0 0.0
    %2762 = vmatprep.subr.mxu0 0.0
    %2763 = vmatpush1.msra.mxu0 0.0
    %2764 = vmatprep.subr.mxu0 0.0
    %2765 = vmatpush1.msra.mxu0 0.0
    %2766 = vmatprep.subr.mxu0 0.0
    %2767 = vmatpush1.msra.mxu0 0.0
    %2768 = vmatprep.subr.mxu0 0.0
    %2769 = vmatpush1.msra.mxu0 0.0
    %2770 = vmatprep.subr.mxu0 0.0
    %2771 = vmatpush1.msra.mxu0 0.0
    %2772 = vmatprep.subr.mxu0 0.0
    %2773 = vmatpush1.msra.mxu0 0.0
    %2774 = vmatprep.subr.mxu0 0.0
    %2775 = vmatpush1.msra.mxu0 0.0
    %2776 = vmatprep.subr.mxu0 0.0
    %2777 = vmatpush1.msra.mxu0 0.0
    %2778 = vmatprep.subr.mxu0 0.0
    %2779 = vmatpush1.msra.mxu0 0.0
    %2780 = vmatprep.subr.mxu0 0.0
    %2781 = vmatpush1.msra.mxu0 0.0
    %2782 = vmatprep.subr.mxu0 0.0
    %2783 = vmatpush1.msra.mxu0 0.0
    %2784 = vmatprep.subr.mxu0 0.0
    %2785 = vmatpush1.msra.mxu0 0.0
    %2786 = vmatprep.subr.mxu0 0.0
    %2787 = vmatpush1.msra.mxu0 0.0
    %2788 = vmatprep.subr.mxu0 0.0
    %2789 = vmatpush1.msra.mxu0 0.0
    %2790 = vmatprep.subr.mxu0 0.0
    %2791 = vmatpush1.msra.mxu0 0.0
    %2792 = vmatprep.subr.mxu0 0.0
    %2793 = vmatpush1.msra.mxu0 0.0
    %2794 = vmatprep.subr.mxu0 0.0
    %2795 = vmatpush1.msra.mxu0 0.0
    %2796 = vmatprep.subr.mxu0 0.0
    %2797 = vmatpush1.msra.mxu0 0.0
    %2798 = vmatprep.subr.mxu0 0.0
    %2799 = vmatpush1.msra.mxu0 0.0
    %2800 = vmatprep.subr.mxu0 0.0
    %2801 = vmatpush1.msra.mxu0 0.0
    %2802 = vmatprep.subr.mxu0 0.0
    %2803 = vmatpush1.msra.mxu0 0.0
    %2804 = vmatprep.subr.mxu0 0.0
    %2805 = vmatpush1.msra.mxu0 0.0
    %2806 = vmatprep.mubr.f32.mxu0 0.0
    %2807 = vmatmul.mubr.f32.gmra.mrb[0].mxu0 %v2740
    %v2808 = vpop.f32.mrb[0].mxu0
    %v2809 = vadd.f32 0.0, %v2808
    %v2810 = vpop.f32.mrb[0].mxu0
    %2811 = vdwg.mxu0
    %v2813 = vsel %vm568, %v2738, 0
    %2815 = vmatprep.subr.mxu0 0.0
    %2816 = vmatpush1.msra.mxu0 %v2558
    %2817 = vmatprep.subr.mxu0 0.0
    %2818 = vmatpush1.msra.mxu0 0.0
    %2819 = vmatprep.subr.mxu0 0.0
    %2820 = vmatpush1.msra.mxu0 0.0
    %2821 = vmatprep.subr.mxu0 0.0
    %2822 = vmatpush1.msra.mxu0 0.0
    %2823 = vmatprep.subr.mxu0 0.0
    %2824 = vmatpush1.msra.mxu0 0.0
    %2825 = vmatprep.subr.mxu0 0.0
    %2826 = vmatpush1.msra.mxu0 0.0
    %2827 = vmatprep.subr.mxu0 0.0
    %2828 = vmatpush1.msra.mxu0 0.0
    %2829 = vmatprep.subr.mxu0 0.0
    %2830 = vmatpush1.msra.mxu0 0.0
    %2831 = vmatprep.subr.mxu0 0.0
    %2832 = vmatpush1.msra.mxu0 0.0
    %2833 = vmatprep.subr.mxu0 0.0
    %2834 = vmatpush1.msra.mxu0 0.0
    %2835 = vmatprep.subr.mxu0 0.0
    %2836 = vmatpush1.msra.mxu0 0.0
    %2837 = vmatprep.subr.mxu0 0.0
    %2838 = vmatpush1.msra.mxu0 0.0
    %2839 = vmatprep.subr.mxu0 0.0
    %2840 = vmatpush1.msra.mxu0 0.0
    %2841 = vmatprep.subr.mxu0 0.0
    %2842 = vmatpush1.msra.mxu0 0.0
    %2843 = vmatprep.subr.mxu0 0.0
    %2844 = vmatpush1.msra.mxu0 0.0
    %2845 = vmatprep.subr.mxu0 0.0
    %2846 = vmatpush1.msra.mxu0 0.0
    %2847 = vmatprep.subr.mxu0 0.0
    %2848 = vmatpush1.msra.mxu0 0.0
    %2849 = vmatprep.subr.mxu0 0.0
    %2850 = vmatpush1.msra.mxu0 0.0
    %2851 = vmatprep.subr.mxu0 0.0
    %2852 = vmatpush1.msra.mxu0 0.0
    %2853 = vmatprep.subr.mxu0 0.0
    %2854 = vmatpush1.msra.mxu0 0.0
    %2855 = vmatprep.subr.mxu0 0.0
    %2856 = vmatpush1.msra.mxu0 0.0
    %2857 = vmatprep.subr.mxu0 0.0
    %2858 = vmatpush1.msra.mxu0 0.0
    %2859 = vmatprep.subr.mxu0 0.0
    %2860 = vmatpush1.msra.mxu0 0.0
    %2861 = vmatprep.subr.mxu0 0.0
    %2862 = vmatpush1.msra.mxu0 0.0
    %2863 = vmatprep.subr.mxu0 0.0
    %2864 = vmatpush1.msra.mxu0 0.0
    %2865 = vmatprep.subr.mxu0 0.0
    %2866 = vmatpush1.msra.mxu0 0.0
    %2867 = vmatprep.subr.mxu0 0.0
    %2868 = vmatpush1.msra.mxu0 0.0
    %2869 = vmatprep.subr.mxu0 0.0
    %2870 = vmatpush1.msra.mxu0 0.0
    %2871 = vmatprep.subr.mxu0 0.0
    %2872 = vmatpush1.msra.mxu0 0.0
    %2873 = vmatprep.subr.mxu0 0.0
    %2874 = vmatpush1.msra.mxu0 0.0
    %2875 = vmatprep.subr.mxu0 0.0
    %2876 = vmatpush1.msra.mxu0 0.0
    %2877 = vmatprep.subr.mxu0 0.0
    %2878 = vmatpush1.msra.mxu0 0.0
    %2879 = vmatprep.mubr.f32.mxu0 0.0
    %2880 = vmatmul.mubr.f32.gmra.mrb[0].mxu0 %v2813
    %v2881 = vpop.f32.mrb[0].mxu0
    %v2882 = vadd.f32 0.0, %v2881
    %v2883 = vpop.f32.mrb[0].mxu0
    %2884 = vdwg.mxu0
    %s2885 = scalar_lea.vmem %s37, 16
    %v2886 = vld [vmem:[%s2885] sm:$0xff]
    %v2887 = vld [vmem:[%s2885 + $0x8] sm:$0xff]
    %v2889 = vsel %vm399, %v2809, 0
    %v2892 = vsel %vm399, %v2882, 0
    %2894 = vmatprep.subr.mxu0 0.0
    %2895 = vmatpush1.msra.mxu0 %v2886
    %2896 = vmatprep.subr.mxu0 0.0
    %2897 = vmatpush1.msra.mxu0 %v2887
    %2898 = vmatprep.subr.mxu0 0.0
    %2899 = vmatpush1.msra.mxu0 0.0
    %2900 = vmatprep.subr.mxu0 0.0
    %2901 = vmatpush1.msra.mxu0 0.0
    %2902 = vmatprep.subr.mxu0 0.0
    %2903 = vmatpush1.msra.mxu0 0.0
    %2904 = vmatprep.subr.mxu0 0.0
    %2905 = vmatpush1.msra.mxu0 0.0
    %2906 = vmatprep.subr.mxu0 0.0
    %2907 = vmatpush1.msra.mxu0 0.0
    %2908 = vmatprep.subr.mxu0 0.0
    %2909 = vmatpush1.msra.mxu0 0.0
    %2910 = vmatprep.subr.mxu0 0.0
    %2911 = vmatpush1.msra.mxu0 0.0
    %2912 = vmatprep.subr.mxu0 0.0
    %2913 = vmatpush1.msra.mxu0 0.0
    %2914 = vmatprep.subr.mxu0 0.0
    %2915 = vmatpush1.msra.mxu0 0.0
    %2916 = vmatprep.subr.mxu0 0.0
    %2917 = vmatpush1.msra.mxu0 0.0
    %2918 = vmatprep.subr.mxu0 0.0
    %2919 = vmatpush1.msra.mxu0 0.0
    %2920 = vmatprep.subr.mxu0 0.0
    %2921 = vmatpush1.msra.mxu0 0.0
    %2922 = vmatprep.subr.mxu0 0.0
    %2923 = vmatpush1.msra.mxu0 0.0
    %2924 = vmatprep.subr.mxu0 0.0
    %2925 = vmatpush1.msra.mxu0 0.0
    %2926 = vmatprep.subr.mxu0 0.0
    %2927 = vmatpush1.msra.mxu0 0.0
    %2928 = vmatprep.subr.mxu0 0.0
    %2929 = vmatpush1.msra.mxu0 0.0
    %2930 = vmatprep.subr.mxu0 0.0
    %2931 = vmatpush1.msra.mxu0 0.0
    %2932 = vmatprep.subr.mxu0 0.0
    %2933 = vmatpush1.msra.mxu0 0.0
    %2934 = vmatprep.subr.mxu0 0.0
    %2935 = vmatpush1.msra.mxu0 0.0
    %2936 = vmatprep.subr.mxu0 0.0
    %2937 = vmatpush1.msra.mxu0 0.0
    %2938 = vmatprep.subr.mxu0 0.0
    %2939 = vmatpush1.msra.mxu0 0.0
    %2940 = vmatprep.subr.mxu0 0.0
    %2941 = vmatpush1.msra.mxu0 0.0
    %2942 = vmatprep.subr.mxu0 0.0
    %2943 = vmatpush1.msra.mxu0 0.0
    %2944 = vmatprep.subr.mxu0 0.0
    %2945 = vmatpush1.msra.mxu0 0.0
    %2946 = vmatprep.subr.mxu0 0.0
    %2947 = vmatpush1.msra.mxu0 0.0
    %2948 = vmatprep.subr.mxu0 0.0
    %2949 = vmatpush1.msra.mxu0 0.0
    %2950 = vmatprep.subr.mxu0 0.0
    %2951 = vmatpush1.msra.mxu0 0.0
    %2952 = vmatprep.subr.mxu0 0.0
    %2953 = vmatpush1.msra.mxu0 0.0
    %2954 = vmatprep.subr.mxu0 0.0
    %2955 = vmatpush1.msra.mxu0 0.0
    %2956 = vmatprep.subr.mxu0 0.0
    %2957 = vmatpush1.msra.mxu0 0.0
    %2958 = vmatprep.mubr.f32.mxu0 0.0
    %2959 = vmatmul.mubr.f32.gmra.mrb[0].mxu0 %v2889
    %v2960 = vpop.f32.mrb[0].mxu0
    %v2961 = vadd.f32 0.0, %v2960
    %v2962 = vpop.f32.mrb[0].mxu0
    %2963 = vmatprep.mubr.f32.mxu0 0.0
    %2964 = vmatmul.mubr.f32.gmra.mrb[0].mxu0 %v2892
    %v2965 = vpop.f32.mrb[0].mxu0
    %v2966 = vadd.f32 0.0, %v2965
    %v2967 = vpop.f32.mrb[0].mxu0
    %2968 = vdwg.mxu0
    %v2970 = vsel %vm399, %v2243, 0
    %v2973 = vsel %vm399, %v2316, 0
    %2975 = vmatprep.subr.mxu0 0.0
    %2976 = vmatpush1.msra.mxu0 %v2319
    %2977 = vmatprep.subr.mxu0 0.0
    %2978 = vmatpush1.msra.mxu0 %v2320
    %2979 = vmatprep.subr.mxu0 0.0
    %2980 = vmatpush1.msra.mxu0 0.0
    %2981 = vmatprep.subr.mxu0 0.0
    %2982 = vmatpush1.msra.mxu0 0.0
    %2983 = vmatprep.subr.mxu0 0.0
    %2984 = vmatpush1.msra.mxu0 0.0
    %2985 = vmatprep.subr.mxu0 0.0
    %2986 = vmatpush1.msra.mxu0 0.0
    %2987 = vmatprep.subr.mxu0 0.0
    %2988 = vmatpush1.msra.mxu0 0.0
    %2989 = vmatprep.subr.mxu0 0.0
    %2990 = vmatpush1.msra.mxu0 0.0
    %2991 = vmatprep.subr.mxu0 0.0
    %2992 = vmatpush1.msra.mxu0 0.0
    %2993 = vmatprep.subr.mxu0 0.0
    %2994 = vmatpush1.msra.mxu0 0.0
    %2995 = vmatprep.subr.mxu0 0.0
    %2996 = vmatpush1.msra.mxu0 0.0
    %2997 = vmatprep.subr.mxu0 0.0
    %2998 = vmatpush1.msra.mxu0 0.0
    %2999 = vmatprep.subr.mxu0 0.0
    %3000 = vmatpush1.msra.mxu0 0.0
    %3001 = vmatprep.subr.mxu0 0.0
    %3002 = vmatpush1.msra.mxu0 0.0
    %3003 = vmatprep.subr.mxu0 0.0
    %3004 = vmatpush1.msra.mxu0 0.0
    %3005 = vmatprep.subr.mxu0 0.0
    %3006 = vmatpush1.msra.mxu0 0.0
    %3007 = vmatprep.subr.mxu0 0.0
    %3008 = vmatpush1.msra.mxu0 0.0
    %3009 = vmatprep.subr.mxu0 0.0
    %3010 = vmatpush1.msra.mxu0 0.0
    %3011 = vmatprep.subr.mxu0 0.0
    %3012 = vmatpush1.msra.mxu0 0.0
    %3013 = vmatprep.subr.mxu0 0.0
    %3014 = vmatpush1.msra.mxu0 0.0
    %3015 = vmatprep.subr.mxu0 0.0
    %3016 = vmatpush1.msra.mxu0 0.0
    %3017 = vmatprep.subr.mxu0 0.0
    %3018 = vmatpush1.msra.mxu0 0.0
    %3019 = vmatprep.subr.mxu0 0.0
    %3020 = vmatpush1.msra.mxu0 0.0
    %3021 = vmatprep.subr.mxu0 0.0
    %3022 = vmatpush1.msra.mxu0 0.0
    %3023 = vmatprep.subr.mxu0 0.0
    %3024 = vmatpush1.msra.mxu0 0.0
    %3025 = vmatprep.subr.mxu0 0.0
    %3026 = vmatpush1.msra.mxu0 0.0
    %3027 = vmatprep.subr.mxu0 0.0
    %3028 = vmatpush1.msra.mxu0 0.0
    %3029 = vmatprep.subr.mxu0 0.0
    %3030 = vmatpush1.msra.mxu0 0.0
    %3031 = vmatprep.subr.mxu0 0.0
    %3032 = vmatpush1.msra.mxu0 0.0
    %3033 = vmatprep.subr.mxu0 0.0
    %3034 = vmatpush1.msra.mxu0 0.0
    %3035 = vmatprep.subr.mxu0 0.0
    %3036 = vmatpush1.msra.mxu0 0.0
    %3037 = vmatprep.subr.mxu0 0.0
    %3038 = vmatpush1.msra.mxu0 0.0
    %3039 = vmatprep.mubr.f32.mxu0 0.0
    %3040 = vmatmul.mubr.f32.gmra.mrb[0].mxu0 %v2970
    %v3041 = vpop.f32.mrb[0].mxu0
    %v3042 = vadd.f32 %v2961, %v3041
    %v3043 = vpop.f32.mrb[0].mxu0
    %3044 = vmatprep.mubr.f32.mxu0 0.0
    %3045 = vmatmul.mubr.f32.gmra.mrb[0].mxu0 %v2973
    %v3046 = vpop.f32.mrb[0].mxu0
    %v3047 = vadd.f32 %v2966, %v3046
    %v3048 = vpop.f32.mrb[0].mxu0
    %3049 = vdwg.mxu0
    %v3050 = vadd.f32 %v141, %v3042
    %v3051 = vadd.f32 %v142, %v3047
    %v3052 = vld [vmem:[%s39] sm:$0x1]
    %v3053 = vld [vmem:[%s41] sm:$0x1]
    %v3054 = vsel %vm159, %v3050, 0.0
    %3055 = vadd.xlane.f32.xlu0 %v3054
    %v3056 = vpop.xlane.xlu0 %3055
    %v3057 = vsel %vm159, %v3051, 0.0
    %3058 = vadd.xlane.f32.xlu0 %v3057
    %v3059 = vpop.xlane.xlu0 %3058
    %v3060 = vmul.f32 %v3056, %v1478
    %v3061 = vmul.f32 %v3059, %v1478
    %v3062 = vsub.f32 %v3050, %v3060
    %v3063 = vsub.f32 %v3051, %v3061
    %v3064 = vmul.f32 %v3062, %v3062
    %v3065 = vmul.f32 %v3063, %v3063
    %v3066 = vsel %vm159, %v3064, 0.0
    %3067 = vadd.xlane.f32.xlu0 %v3066
    %v3068 = vpop.xlane.xlu0 %3067
    %v3069 = vsel %vm159, %v3065, 0.0
    %3070 = vadd.xlane.f32.xlu0 %v3069
    %v3071 = vpop.xlane.xlu0 %3070
    %v3072 = vmul.f32 %v3068, %v1478
    %v3073 = vmul.f32 %v3071, %v1478
    %v3074 = vadd.f32 %v3072, 1e-05
    %v3075 = vadd.f32 %v3073, 1e-05
    %v3076 = vrsqrt.pop %v3074
    %v3077 = vrsqrt.pop %v3075
    %v3078 = vmul.f32 %v3062, %v3076
    %v3079 = vmul.f32 %v3063, %v3077
    %v3081 = vlaneseq
    %v3082 = vshrl.u32 %v3081, 7
    %v3083 = vsub.s32 0, %v3082
    %v3084 = vrot.slane %v3052, %v3083
    %v3086 = vmul.f32 %v3078, %v3084
    %v3087 = vmul.f32 %v3079, %v3084
    %v3089 = vlaneseq
    %v3090 = vshrl.u32 %v3089, 7
    %v3091 = vsub.s32 0, %v3090
    %v3092 = vrot.slane %v3053, %v3091
    %v3094 = vadd.f32 %v3086, %v3092
    %v3095 = vadd.f32 %v3087, %v3092
    %v3096 = vld [vmem:[%s43] sm:$0xff]
    %v3097 = vld [vmem:[%s43 + $0x8] sm:$0xff]
    %v3098 = vld [vmem:[%s43 + $0x10] sm:$0xff]
    %v3099 = vld [vmem:[%s43 + $0x18] sm:$0xff]
    %v3101 = vsel %vm159, %v3094, 0
    %v3104 = vsel %vm159, %v3095, 0
    %3106 = vmatprep.subr.mxu0 0.0
    %3107 = vmatpush1.msra.mxu0 %v3096
    %3108 = vmatprep.subr.mxu0 0.0
    %3109 = vmatpush1.msra.mxu0 %v3097
    %3110 = vmatprep.subr.mxu0 0.0
    %3111 = vmatpush1.msra.mxu0 %v3098
    %3112 = vmatprep.subr.mxu0 0.0
    %3113 = vmatpush1.msra.mxu0 %v3099
    %3114 = vmatprep.subr.mxu0 0.0
    %3115 = vmatpush1.msra.mxu0 0.0
    %3116 = vmatprep.subr.mxu0 0.0
    %3117 = vmatpush1.msra.mxu0 0.0
    %3118 = vmatprep.subr.mxu0 0.0
    %3119 = vmatpush1.msra.mxu0 0.0
    %3120 = vmatprep.subr.mxu0 0.0
    %3121 = vmatpush1.msra.mxu0 0.0
    %3122 = vmatprep.subr.mxu0 0.0
    %3123 = vmatpush1.msra.mxu0 0.0
    %3124 = vmatprep.subr.mxu0 0.0
    %3125 = vmatpush1.msra.mxu0 0.0
    %3126 = vmatprep.subr.mxu0 0.0
    %3127 = vmatpush1.msra.mxu0 0.0
    %3128 = vmatprep.subr.mxu0 0.0
    %3129 = vmatpush1.msra.mxu0 0.0
    %3130 = vmatprep.subr.mxu0 0.0
    %3131 = vmatpush1.msra.mxu0 0.0
    %3132 = vmatprep.subr.mxu0 0.0
    %3133 = vmatpush1.msra.mxu0 0.0
    %3134 = vmatprep.subr.mxu0 0.0
    %3135 = vmatpush1.msra.mxu0 0.0
    %3136 = vmatprep.subr.mxu0 0.0
    %3137 = vmatpush1.msra.mxu0 0.0
    %3138 = vmatprep.subr.mxu0 0.0
    %3139 = vmatpush1.msra.mxu0 0.0
    %3140 = vmatprep.subr.mxu0 0.0
    %3141 = vmatpush1.msra.mxu0 0.0
    %3142 = vmatprep.subr.mxu0 0.0
    %3143 = vmatpush1.msra.mxu0 0.0
    %3144 = vmatprep.subr.mxu0 0.0
    %3145 = vmatpush1.msra.mxu0 0.0
    %3146 = vmatprep.subr.mxu0 0.0
    %3147 = vmatpush1.msra.mxu0 0.0
    %3148 = vmatprep.subr.mxu0 0.0
    %3149 = vmatpush1.msra.mxu0 0.0
    %3150 = vmatprep.subr.mxu0 0.0
    %3151 = vmatpush1.msra.mxu0 0.0
    %3152 = vmatprep.subr.mxu0 0.0
    %3153 = vmatpush1.msra.mxu0 0.0
    %3154 = vmatprep.subr.mxu0 0.0
    %3155 = vmatpush1.msra.mxu0 0.0
    %3156 = vmatprep.subr.mxu0 0.0
    %3157 = vmatpush1.msra.mxu0 0.0
    %3158 = vmatprep.subr.mxu0 0.0
    %3159 = vmatpush1.msra.mxu0 0.0
    %3160 = vmatprep.subr.mxu0 0.0
    %3161 = vmatpush1.msra.mxu0 0.0
    %3162 = vmatprep.subr.mxu0 0.0
    %3163 = vmatpush1.msra.mxu0 0.0
    %3164 = vmatprep.subr.mxu0 0.0
    %3165 = vmatpush1.msra.mxu0 0.0
    %3166 = vmatprep.subr.mxu0 0.0
    %3167 = vmatpush1.msra.mxu0 0.0
    %3168 = vmatprep.subr.mxu0 0.0
    %3169 = vmatpush1.msra.mxu0 0.0
    %3170 = vmatprep.mubr.f32.mxu0 0.0
    %3171 = vmatmul.mubr.f32.gmra.mrb[0].mxu0 %v3101
    %v3172 = vpop.f32.mrb[0].mxu0
    %v3173 = vadd.f32 0.0, %v3172
    %v3174 = vpop.f32.mrb[0].mxu0
    %3175 = vmatprep.mubr.f32.mxu0 0.0
    %3176 = vmatmul.mubr.f32.gmra.mrb[0].mxu0 %v3104
    %v3177 = vpop.f32.mrb[0].mxu0
    %v3178 = vadd.f32 0.0, %v3177
    %v3179 = vpop.f32.mrb[0].mxu0
    %3180 = vdwg.mxu0
    %v3181 = vld [vmem:[%s45] sm:$0xff]
    %v3182 = vld [vmem:[%s45 + $0x8] sm:$0xff]
    %v3183 = vld [vmem:[%s45 + $0x10] sm:$0xff]
    %v3184 = vld [vmem:[%s45 + $0x18] sm:$0xff]
    %v3186 = vsel %vm159, %v1750, 0
    %v3189 = vsel %vm159, %v1751, 0
    %3191 = vmatprep.subr.mxu0 0.0
    %3192 = vmatpush1.msra.mxu0 %v3181
    %3193 = vmatprep.subr.mxu0 0.0
    %3194 = vmatpush1.msra.mxu0 %v3182
    %3195 = vmatprep.subr.mxu0 0.0
    %3196 = vmatpush1.msra.mxu0 %v3183
    %3197 = vmatprep.subr.mxu0 0.0
    %3198 = vmatpush1.msra.mxu0 %v3184
    %3199 = vmatprep.subr.mxu0 0.0
    %3200 = vmatpush1.msra.mxu0 0.0
    %3201 = vmatprep.subr.mxu0 0.0
    %3202 = vmatpush1.msra.mxu0 0.0
    %3203 = vmatprep.subr.mxu0 0.0
    %3204 = vmatpush1.msra.mxu0 0.0
    %3205 = vmatprep.subr.mxu0 0.0
    %3206 = vmatpush1.msra.mxu0 0.0
    %3207 = vmatprep.subr.mxu0 0.0
    %3208 = vmatpush1.msra.mxu0 0.0
    %3209 = vmatprep.subr.mxu0 0.0
    %3210 = vmatpush1.msra.mxu0 0.0
    %3211 = vmatprep.subr.mxu0 0.0
    %3212 = vmatpush1.msra.mxu0 0.0
    %3213 = vmatprep.subr.mxu0 0.0
    %3214 = vmatpush1.msra.mxu0 0.0
    %3215 = vmatprep.subr.mxu0 0.0
    %3216 = vmatpush1.msra.mxu0 0.0
    %3217 = vmatprep.subr.mxu0 0.0
    %3218 = vmatpush1.msra.mxu0 0.0
    %3219 = vmatprep.subr.mxu0 0.0
    %3220 = vmatpush1.msra.mxu0 0.0
    %3221 = vmatprep.subr.mxu0 0.0
    %3222 = vmatpush1.msra.mxu0 0.0
    %3223 = vmatprep.subr.mxu0 0.0
    %3224 = vmatpush1.msra.mxu0 0.0
    %3225 = vmatprep.subr.mxu0 0.0
    %3226 = vmatpush1.msra.mxu0 0.0
    %3227 = vmatprep.subr.mxu0 0.0
    %3228 = vmatpush1.msra.mxu0 0.0
    %3229 = vmatprep.subr.mxu0 0.0
    %3230 = vmatpush1.msra.mxu0 0.0
    %3231 = vmatprep.subr.mxu0 0.0
    %3232 = vmatpush1.msra.mxu0 0.0
    %3233 = vmatprep.subr.mxu0 0.0
    %3234 = vmatpush1.msra.mxu0 0.0
    %3235 = vmatprep.subr.mxu0 0.0
    %3236 = vmatpush1.msra.mxu0 0.0
    %3237 = vmatprep.subr.mxu0 0.0
    %3238 = vmatpush1.msra.mxu0 0.0
    %3239 = vmatprep.subr.mxu0 0.0
    %3240 = vmatpush1.msra.mxu0 0.0
    %3241 = vmatprep.subr.mxu0 0.0
    %3242 = vmatpush1.msra.mxu0 0.0
    %3243 = vmatprep.subr.mxu0 0.0
    %3244 = vmatpush1.msra.mxu0 0.0
    %3245 = vmatprep.subr.mxu0 0.0
    %3246 = vmatpush1.msra.mxu0 0.0
    %3247 = vmatprep.subr.mxu0 0.0
    %3248 = vmatpush1.msra.mxu0 0.0
    %3249 = vmatprep.subr.mxu0 0.0
    %3250 = vmatpush1.msra.mxu0 0.0
    %3251 = vmatprep.subr.mxu0 0.0
    %3252 = vmatpush1.msra.mxu0 0.0
    %3253 = vmatprep.subr.mxu0 0.0
    %3254 = vmatpush1.msra.mxu0 0.0
    %3255 = vmatprep.mubr.f32.mxu0 0.0
    %3256 = vmatmul.mubr.f32.gmra.mrb[0].mxu0 %v3186
    %v3257 = vpop.f32.mrb[0].mxu0
    %v3258 = vadd.f32 0.0, %v3257
    %v3259 = vpop.f32.mrb[0].mxu0
    %3260 = vmatprep.mubr.f32.mxu0 0.0
    %3261 = vmatmul.mubr.f32.gmra.mrb[0].mxu0 %v3189
    %v3262 = vpop.f32.mrb[0].mxu0
    %v3263 = vadd.f32 0.0, %v3262
    %v3264 = vpop.f32.mrb[0].mxu0
    %3265 = vdwg.mxu0
    %v3266 = vld [vmem:[%s47] sm:$0xff]
    %v3267 = vld [vmem:[%s47 + $0x8] sm:$0xff]
    %v3268 = vld [vmem:[%s47 + $0x10] sm:$0xff]
    %v3269 = vld [vmem:[%s47 + $0x18] sm:$0xff]
    %3270 = vmatprep.subr.mxu0 0.0
    %3271 = vmatpush1.msra.mxu0 %v3266
    %3272 = vmatprep.subr.mxu0 0.0
    %3273 = vmatpush1.msra.mxu0 %v3267
    %3274 = vmatprep.subr.mxu0 0.0
    %3275 = vmatpush1.msra.mxu0 %v3268
    %3276 = vmatprep.subr.mxu0 0.0
    %3277 = vmatpush1.msra.mxu0 %v3269
    %3278 = vmatprep.subr.mxu0 0.0
    %3279 = vmatpush1.msra.mxu0 0.0
    %3280 = vmatprep.subr.mxu0 0.0
    %3281 = vmatpush1.msra.mxu0 0.0
    %3282 = vmatprep.subr.mxu0 0.0
    %3283 = vmatpush1.msra.mxu0 0.0
    %3284 = vmatprep.subr.mxu0 0.0
    %3285 = vmatpush1.msra.mxu0 0.0
    %3286 = vmatprep.subr.mxu0 0.0
    %3287 = vmatpush1.msra.mxu0 0.0
    %3288 = vmatprep.subr.mxu0 0.0
    %3289 = vmatpush1.msra.mxu0 0.0
    %3290 = vmatprep.subr.mxu0 0.0
    %3291 = vmatpush1.msra.mxu0 0.0
    %3292 = vmatprep.subr.mxu0 0.0
    %3293 = vmatpush1.msra.mxu0 0.0
    %3294 = vmatprep.subr.mxu0 0.0
    %3295 = vmatpush1.msra.mxu0 0.0
    %3296 = vmatprep.subr.mxu0 0.0
    %3297 = vmatpush1.msra.mxu0 0.0
    %3298 = vmatprep.subr.mxu0 0.0
    %3299 = vmatpush1.msra.mxu0 0.0
    %3300 = vmatprep.subr.mxu0 0.0
    %3301 = vmatpush1.msra.mxu0 0.0
    %3302 = vmatprep.subr.mxu0 0.0
    %3303 = vmatpush1.msra.mxu0 0.0
    %3304 = vmatprep.subr.mxu0 0.0
    %3305 = vmatpush1.msra.mxu0 0.0
    %3306 = vmatprep.subr.mxu0 0.0
    %3307 = vmatpush1.msra.mxu0 0.0
    %3308 = vmatprep.subr.mxu0 0.0
    %3309 = vmatpush1.msra.mxu0 0.0
    %3310 = vmatprep.subr.mxu0 0.0
    %3311 = vmatpush1.msra.mxu0 0.0
    %3312 = vmatprep.subr.mxu0 0.0
    %3313 = vmatpush1.msra.mxu0 0.0
    %3314 = vmatprep.subr.mxu0 0.0
    %3315 = vmatpush1.msra.mxu0 0.0
    %3316 = vmatprep.subr.mxu0 0.0
    %3317 = vmatpush1.msra.mxu0 0.0
    %3318 = vmatprep.subr.mxu0 0.0
    %3319 = vmatpush1.msra.mxu0 0.0
    %3320 = vmatprep.subr.mxu0 0.0
    %3321 = vmatpush1.msra.mxu0 0.0
    %3322 = vmatprep.subr.mxu0 0.0
    %3323 = vmatpush1.msra.mxu0 0.0
    %3324 = vmatprep.subr.mxu0 0.0
    %3325 = vmatpush1.msra.mxu0 0.0
    %3326 = vmatprep.subr.mxu0 0.0
    %3327 = vmatpush1.msra.mxu0 0.0
    %3328 = vmatprep.subr.mxu0 0.0
    %3329 = vmatpush1.msra.mxu0 0.0
    %3330 = vmatprep.subr.mxu0 0.0
    %3331 = vmatpush1.msra.mxu0 0.0
    %3332 = vmatprep.subr.mxu0 0.0
    %3333 = vmatpush1.msra.mxu0 0.0
    %3334 = vmatprep.mubr.f32.mxu0 0.0
    %3335 = vmatmul.mubr.f32.gmra.mrb[0].mxu0 %v3186
    %v3336 = vpop.f32.mrb[0].mxu0
    %v3337 = vadd.f32 0.0, %v3336
    %v3338 = vpop.f32.mrb[0].mxu0
    %3339 = vmatprep.mubr.f32.mxu0 0.0
    %3340 = vmatmul.mubr.f32.gmra.mrb[0].mxu0 %v3189
    %v3341 = vpop.f32.mrb[0].mxu0
    %v3342 = vadd.f32 0.0, %v3341
    %v3343 = vpop.f32.mrb[0].mxu0
    %3344 = vdwg.mxu0
    %v3346 = vsel %vm399, %v3173, 0
    %v3349 = vsel %vm399, %v3258, 0
    %3351 = vmatprep.subr.mxu0 0.0
    %3352 = vmatpush1.xpose.msra.mxu0 %v3349
    %3353 = vmatprep.subr.mxu0 0.0
    %3354 = vmatpush1.xpose.msra.mxu0 0.0
    %3355 = vmatprep.subr.mxu0 0.0
    %3356 = vmatpush1.xpose.msra.mxu0 0.0
    %3357 = vmatprep.subr.mxu0 0.0
    %3358 = vmatpush1.xpose.msra.mxu0 0.0
    %3359 = vmatprep.subr.mxu0 0.0
    %3360 = vmatpush1.xpose.msra.mxu0 0.0
    %3361 = vmatprep.subr.mxu0 0.0
    %3362 = vmatpush1.xpose.msra.mxu0 0.0
    %3363 = vmatprep.subr.mxu0 0.0
    %3364 = vmatpush1.xpose.msra.mxu0 0.0
    %3365 = vmatprep.subr.mxu0 0.0
    %3366 = vmatpush1.xpose.msra.mxu0 0.0
    %3367 = vmatprep.subr.mxu0 0.0
    %3368 = vmatpush1.xpose.msra.mxu0 0.0
    %3369 = vmatprep.subr.mxu0 0.0
    %3370 = vmatpush1.xpose.msra.mxu0 0.0
    %3371 = vmatprep.subr.mxu0 0.0
    %3372 = vmatpush1.xpose.msra.mxu0 0.0
    %3373 = vmatprep.subr.mxu0 0.0
    %3374 = vmatpush1.xpose.msra.mxu0 0.0
    %3375 = vmatprep.subr.mxu0 0.0
    %3376 = vmatpush1.xpose.msra.mxu0 0.0
    %3377 = vmatprep.subr.mxu0 0.0
    %3378 = vmatpush1.xpose.msra.mxu0 0.0
    %3379 = vmatprep.subr.mxu0 0.0
    %3380 = vmatpush1.xpose.msra.mxu0 0.0
    %3381 = vmatprep.subr.mxu0 0.0
    %3382 = vmatpush1.xpose.msra.mxu0 0.0
    %3383 = vmatprep.subr.mxu0 0.0
    %3384 = vmatpush1.xpose.msra.mxu0 0.0
    %3385 = vmatprep.subr.mxu0 0.0
    %3386 = vmatpush1.xpose.msra.mxu0 0.0
    %3387 = vmatprep.subr.mxu0 0.0
    %3388 = vmatpush1.xpose.msra.mxu0 0.0
    %3389 = vmatprep.subr.mxu0 0.0
    %3390 = vmatpush1.xpose.msra.mxu0 0.0
    %3391 = vmatprep.subr.mxu0 0.0
    %3392 = vmatpush1.xpose.msra.mxu0 0.0
    %3393 = vmatprep.subr.mxu0 0.0
    %3394 = vmatpush1.xpose.msra.mxu0 0.0
    %3395 = vmatprep.subr.mxu0 0.0
    %3396 = vmatpush1.xpose.msra.mxu0 0.0
    %3397 = vmatprep.subr.mxu0 0.0
    %3398 = vmatpush1.xpose.msra.mxu0 0.0
    %3399 = vmatprep.subr.mxu0 0.0
    %3400 = vmatpush1.xpose.msra.mxu0 0.0
    %3401 = vmatprep.subr.mxu0 0.0
    %3402 = vmatpush1.xpose.msra.mxu0 0.0
    %3403 = vmatprep.subr.mxu0 0.0
    %3404 = vmatpush1.xpose.msra.mxu0 0.0
    %3405 = vmatprep.subr.mxu0 0.0
    %3406 = vmatpush1.xpose.msra.mxu0 0.0
    %3407 = vmatprep.subr.mxu0 0.0
    %3408 = vmatpush1.xpose.msra.mxu0 0.0
    %3409 = vmatprep.subr.mxu0 0.0
    %3410 = vmatpush1.xpose.msra.mxu0 0.0
    %3411 = vmatprep.subr.mxu0 0.0
    %3412 = vmatpush1.xpose.msra.mxu0 0.0
    %3413 = vmatprep.subr.mxu0 0.0
    %3414 = vmatpush1.xpose.msra.mxu0 0.0
    %3415 = vmatprep.mubr.f32.mxu0 0.0
    %3416 = vmatmul.mubr.f32.gmra.mrb[0].mxu0 %v3346
    %v3417 = vpop.f32.mrb[0].mxu0
    %v3418 = vadd.f32 0.0, %v3417
    %v3419 = vpop.f32.mrb[0].mxu0
    %3420 = vdwg.mxu0
    %v3422 = vsel %vm399, %v3178, 0
    %v3425 = vsel %vm399, %v3263, 0
    %3427 = vmatprep.subr.mxu0 0.0
    %3428 = vmatpush1.xpose.msra.mxu0 %v3425
    %3429 = vmatprep.subr.mxu0 0.0
    %3430 = vmatpush1.xpose.msra.mxu0 0.0
    %3431 = vmatprep.subr.mxu0 0.0
    %3432 = vmatpush1.xpose.msra.mxu0 0.0
    %3433 = vmatprep.subr.mxu0 0.0
    %3434 = vmatpush1.xpose.msra.mxu0 0.0
    %3435 = vmatprep.subr.mxu0 0.0
    %3436 = vmatpush1.xpose.msra.mxu0 0.0
    %3437 = vmatprep.subr.mxu0 0.0
    %3438 = vmatpush1.xpose.msra.mxu0 0.0
    %3439 = vmatprep.subr.mxu0 0.0
    %3440 = vmatpush1.xpose.msra.mxu0 0.0
    %3441 = vmatprep.subr.mxu0 0.0
    %3442 = vmatpush1.xpose.msra.mxu0 0.0
    %3443 = vmatprep.subr.mxu0 0.0
    %3444 = vmatpush1.xpose.msra.mxu0 0.0
    %3445 = vmatprep.subr.mxu0 0.0
    %3446 = vmatpush1.xpose.msra.mxu0 0.0
    %3447 = vmatprep.subr.mxu0 0.0
    %3448 = vmatpush1.xpose.msra.mxu0 0.0
    %3449 = vmatprep.subr.mxu0 0.0
    %3450 = vmatpush1.xpose.msra.mxu0 0.0
    %3451 = vmatprep.subr.mxu0 0.0
    %3452 = vmatpush1.xpose.msra.mxu0 0.0
    %3453 = vmatprep.subr.mxu0 0.0
    %3454 = vmatpush1.xpose.msra.mxu0 0.0
    %3455 = vmatprep.subr.mxu0 0.0
    %3456 = vmatpush1.xpose.msra.mxu0 0.0
    %3457 = vmatprep.subr.mxu0 0.0
    %3458 = vmatpush1.xpose.msra.mxu0 0.0
    %3459 = vmatprep.subr.mxu0 0.0
    %3460 = vmatpush1.xpose.msra.mxu0 0.0
    %3461 = vmatprep.subr.mxu0 0.0
    %3462 = vmatpush1.xpose.msra.mxu0 0.0
    %3463 = vmatprep.subr.mxu0 0.0
    %3464 = vmatpush1.xpose.msra.mxu0 0.0
    %3465 = vmatprep.subr.mxu0 0.0
    %3466 = vmatpush1.xpose.msra.mxu0 0.0
    %3467 = vmatprep.subr.mxu0 0.0
    %3468 = vmatpush1.xpose.msra.mxu0 0.0
    %3469 = vmatprep.subr.mxu0 0.0
    %3470 = vmatpush1.xpose.msra.mxu0 0.0
    %3471 = vmatprep.subr.mxu0 0.0
    %3472 = vmatpush1.xpose.msra.mxu0 0.0
    %3473 = vmatprep.subr.mxu0 0.0
    %3474 = vmatpush1.xpose.msra.mxu0 0.0
    %3475 = vmatprep.subr.mxu0 0.0
    %3476 = vmatpush1.xpose.msra.mxu0 0.0
    %3477 = vmatprep.subr.mxu0 0.0
    %3478 = vmatpush1.xpose.msra.mxu0 0.0
    %3479 = vmatprep.subr.mxu0 0.0
    %3480 = vmatpush1.xpose.msra.mxu0 0.0
    %3481 = vmatprep.subr.mxu0 0.0
    %3482 = vmatpush1.xpose.msra.mxu0 0.0
    %3483 = vmatprep.subr.mxu0 0.0
    %3484 = vmatpush1.xpose.msra.mxu0 0.0
    %3485 = vmatprep.subr.mxu0 0.0
    %3486 = vmatpush1.xpose.msra.mxu0 0.0
    %3487 = vmatprep.subr.mxu0 0.0
    %3488 = vmatpush1.xpose.msra.mxu0 0.0
    %3489 = vmatprep.subr.mxu0 0.0
    %3490 = vmatpush1.xpose.msra.mxu0 0.0
    %3491 = vmatprep.mubr.f32.mxu0 0.0
    %3492 = vmatmul.mubr.f32.gmra.mrb[0].mxu0 %v3422
    %v3493 = vpop.f32.mrb[0].mxu0
    %v3494 = vadd.f32 0.0, %v3493
    %v3495 = vpop.f32.mrb[0].mxu0
    %3496 = vdwg.mxu0
    %v3497 = vmul.f32 %v3418, 0.25
    %v3498 = vmul.f32 %v3494, 0.25
    %v3499 = vadd.f32 %v3497, %v559
    %v3500 = vadd.f32 %v3498, %v563
    %v3501 = vsel %vm568, %v3499, -inf
    %3502 = vmax.xlane.f32.xlu0 %v3501
    %v3503 = vpop.xlane.xlu0 %3502
    %v3504 = vsel %vm568, %v3500, -inf
    %3505 = vmax.xlane.f32.xlu0 %v3504
    %v3506 = vpop.xlane.xlu0 %3505
    %v3507 = vsub.f32 %v3499, %v3503
    %v3508 = vsub.f32 %v3500, %v3506
    %v3509 = vmul.f32 %v3507, 1.442695
    %v3510 = vpow.pop %v3509
    %v3511 = vmul.f32 %v3508, 1.442695
    %v3512 = vpow.pop %v3511
    %v3513 = vsel %vm568, %v3510, 0.0
    %3514 = vadd.xlane.f32.xlu0 %v3513
    %v3515 = vpop.xlane.xlu0 %3514
    %v3516 = vsel %vm568, %v3512, 0.0
    %3517 = vadd.xlane.f32.xlu0 %v3516
    %v3518 = vpop.xlane.xlu0 %3517
    %v3519 = vrcp.pop %v3515
    %v3520 = vrcp.pop %v3518
    %v3521 = vmul.f32 %v3510, %v3519
    %v3522 = vmul.f32 %v3512, %v3520
    %v3524 = vsel %vm568, %v3521, 0
    %3526 = vmatprep.subr.mxu0 0.0
    %3527 = vmatpush1.msra.mxu0 %v3337
    %3528 = vmatprep.subr.mxu0 0.0
    %3529 = vmatpush1.msra.mxu0 0.0
    %3530 = vmatprep.subr.mxu0 0.0
    %3531 = vmatpush1.msra.mxu0 0.0
    %3532 = vmatprep.subr.mxu0 0.0
    %3533 = vmatpush1.msra.mxu0 0.0
    %3534 = vmatprep.subr.mxu0 0.0
    %3535 = vmatpush1.msra.mxu0 0.0
    %3536 = vmatprep.subr.mxu0 0.0
    %3537 = vmatpush1.msra.mxu0 0.0
    %3538 = vmatprep.subr.mxu0 0.0
    %3539 = vmatpush1.msra.mxu0 0.0
    %3540 = vmatprep.subr.mxu0 0.0
    %3541 = vmatpush1.msra.mxu0 0.0
    %3542 = vmatprep.subr.mxu0 0.0
    %3543 = vmatpush1.msra.mxu0 0.0
    %3544 = vmatprep.subr.mxu0 0.0
    %3545 = vmatpush1.msra.mxu0 0.0
    %3546 = vmatprep.subr.mxu0 0.0
    %3547 = vmatpush1.msra.mxu0 0.0
    %3548 = vmatprep.subr.mxu0 0.0
    %3549 = vmatpush1.msra.mxu0 0.0
    %3550 = vmatprep.subr.mxu0 0.0
    %3551 = vmatpush1.msra.mxu0 0.0
    %3552 = vmatprep.subr.mxu0 0.0
    %3553 = vmatpush1.msra.mxu0 0.0
    %3554 = vmatprep.subr.mxu0 0.0
    %3555 = vmatpush1.msra.mxu0 0.0
    %3556 = vmatprep.subr.mxu0 0.0
    %3557 = vmatpush1.msra.mxu0 0.0
    %3558 = vmatprep.subr.mxu0 0.0
    %3559 = vmatpush1.msra.mxu0 0.0
    %3560 = vmatprep.subr.mxu0 0.0
    %3561 = vmatpush1.msra.mxu0 0.0
    %3562 = vmatprep.subr.mxu0 0.0
    %3563 = vmatpush1.msra.mxu0 0.0
    %3564 = vmatprep.subr.mxu0 0.0
    %3565 = vmatpush1.msra.mxu0 0.0
    %3566 = vmatprep.subr.mxu0 0.0
    %3567 = vmatpush1.msra.mxu0 0.0
    %3568 = vmatprep.subr.mxu0 0.0
    %3569 = vmatpush1.msra.mxu0 0.0
    %3570 = vmatprep.subr.mxu0 0.0
    %3571 = vmatpush1.msra.mxu0 0.0
    %3572 = vmatprep.subr.mxu0 0.0
    %3573 = vmatpush1.msra.mxu0 0.0
    %3574 = vmatprep.subr.mxu0 0.0
    %3575 = vmatpush1.msra.mxu0 0.0
    %3576 = vmatprep.subr.mxu0 0.0
    %3577 = vmatpush1.msra.mxu0 0.0
    %3578 = vmatprep.subr.mxu0 0.0
    %3579 = vmatpush1.msra.mxu0 0.0
    %3580 = vmatprep.subr.mxu0 0.0
    %3581 = vmatpush1.msra.mxu0 0.0
    %3582 = vmatprep.subr.mxu0 0.0
    %3583 = vmatpush1.msra.mxu0 0.0
    %3584 = vmatprep.subr.mxu0 0.0
    %3585 = vmatpush1.msra.mxu0 0.0
    %3586 = vmatprep.subr.mxu0 0.0
    %3587 = vmatpush1.msra.mxu0 0.0
    %3588 = vmatprep.subr.mxu0 0.0
    %3589 = vmatpush1.msra.mxu0 0.0
    %3590 = vmatprep.mubr.f32.mxu0 0.0
    %3591 = vmatmul.mubr.f32.gmra.mrb[0].mxu0 %v3524
    %v3592 = vpop.f32.mrb[0].mxu0
    %v3593 = vadd.f32 0.0, %v3592
    %v3594 = vpop.f32.mrb[0].mxu0
    %3595 = vdwg.mxu0
    %v3597 = vsel %vm568, %v3522, 0
    %3599 = vmatprep.subr.mxu0 0.0
    %3600 = vmatpush1.msra.mxu0 %v3342
    %3601 = vmatprep.subr.mxu0 0.0
    %3602 = vmatpush1.msra.mxu0 0.0
    %3603 = vmatprep.subr.mxu0 0.0
    %3604 = vmatpush1.msra.mxu0 0.0
    %3605 = vmatprep.subr.mxu0 0.0
    %3606 = vmatpush1.msra.mxu0 0.0
    %3607 = vmatprep.subr.mxu0 0.0
    %3608 = vmatpush1.msra.mxu0 0.0
    %3609 = vmatprep.subr.mxu0 0.0
    %3610 = vmatpush1.msra.mxu0 0.0
    %3611 = vmatprep.subr.mxu0 0.0
    %3612 = vmatpush1.msra.mxu0 0.0
    %3613 = vmatprep.subr.mxu0 0.0
    %3614 = vmatpush1.msra.mxu0 0.0
    %3615 = vmatprep.subr.mxu0 0.0
    %3616 = vmatpush1.msra.mxu0 0.0
    %3617 = vmatprep.subr.mxu0 0.0
    %3618 = vmatpush1.msra.mxu0 0.0
    %3619 = vmatprep.subr.mxu0 0.0
    %3620 = vmatpush1.msra.mxu0 0.0
    %3621 = vmatprep.subr.mxu0 0.0
    %3622 = vmatpush1.msra.mxu0 0.0
    %3623 = vmatprep.subr.mxu0 0.0
    %3624 = vmatpush1.msra.mxu0 0.0
    %3625 = vmatprep.subr.mxu0 0.0
    %3626 = vmatpush1.msra.mxu0 0.0
    %3627 = vmatprep.subr.mxu0 0.0
    %3628 = vmatpush1.msra.mxu0 0.0
    %3629 = vmatprep.subr.mxu0 0.0
    %3630 = vmatpush1.msra.mxu0 0.0
    %3631 = vmatprep.subr.mxu0 0.0
    %3632 = vmatpush1.msra.mxu0 0.0
    %3633 = vmatprep.subr.mxu0 0.0
    %3634 = vmatpush1.msra.mxu0 0.0
    %3635 = vmatprep.subr.mxu0 0.0
    %3636 = vmatpush1.msra.mxu0 0.0
    %3637 = vmatprep.subr.mxu0 0.0
    %3638 = vmatpush1.msra.mxu0 0.0
    %3639 = vmatprep.subr.mxu0 0.0
    %3640 = vmatpush1.msra.mxu0 0.0
    %3641 = vmatprep.subr.mxu0 0.0
    %3642 = vmatpush1.msra.mxu0 0.0
    %3643 = vmatprep.subr.mxu0 0.0
    %3644 = vmatpush1.msra.mxu0 0.0
    %3645 = vmatprep.subr.mxu0 0.0
    %3646 = vmatpush1.msra.mxu0 0.0
    %3647 = vmatprep.subr.mxu0 0.0
    %3648 = vmatpush1.msra.mxu0 0.0
    %3649 = vmatprep.subr.mxu0 0.0
    %3650 = vmatpush1.msra.mxu0 0.0
    %3651 = vmatprep.subr.mxu0 0.0
    %3652 = vmatpush1.msra.mxu0 0.0
    %3653 = vmatprep.subr.mxu0 0.0
    %3654 = vmatpush1.msra.mxu0 0.0
    %3655 = vmatprep.subr.mxu0 0.0
    %3656 = vmatpush1.msra.mxu0 0.0
    %3657 = vmatprep.subr.mxu0 0.0
    %3658 = vmatpush1.msra.mxu0 0.0
    %3659 = vmatprep.subr.mxu0 0.0
    %3660 = vmatpush1.msra.mxu0 0.0
    %3661 = vmatprep.subr.mxu0 0.0
    %3662 = vmatpush1.msra.mxu0 0.0
    %3663 = vmatprep.mubr.f32.mxu0 0.0
    %3664 = vmatmul.mubr.f32.gmra.mrb[0].mxu0 %v3597
    %v3665 = vpop.f32.mrb[0].mxu0
    %v3666 = vadd.f32 0.0, %v3665
    %v3667 = vpop.f32.mrb[0].mxu0
    %3668 = vdwg.mxu0
    %v3669 = vld [vmem:[%s49] sm:$0xff]
    %v3670 = vld [vmem:[%s49 + $0x8] sm:$0xff]
    %s3671 = scalar_lea.vmem %s43, 32
    %v3672 = vld [vmem:[%s3671] sm:$0xff]
    %v3673 = vld [vmem:[%s3671 + $0x8] sm:$0xff]
    %v3674 = vld [vmem:[%s3671 + $0x10] sm:$0xff]
    %v3675 = vld [vmem:[%s3671 + $0x18] sm:$0xff]
    %3676 = vmatprep.subr.mxu0 0.0
    %3677 = vmatpush1.msra.mxu0 %v3672
    %3678 = vmatprep.subr.mxu0 0.0
    %3679 = vmatpush1.msra.mxu0 %v3673
    %3680 = vmatprep.subr.mxu0 0.0
    %3681 = vmatpush1.msra.mxu0 %v3674
    %3682 = vmatprep.subr.mxu0 0.0
    %3683 = vmatpush1.msra.mxu0 %v3675
    %3684 = vmatprep.subr.mxu0 0.0
    %3685 = vmatpush1.msra.mxu0 0.0
    %3686 = vmatprep.subr.mxu0 0.0
    %3687 = vmatpush1.msra.mxu0 0.0
    %3688 = vmatprep.subr.mxu0 0.0
    %3689 = vmatpush1.msra.mxu0 0.0
    %3690 = vmatprep.subr.mxu0 0.0
    %3691 = vmatpush1.msra.mxu0 0.0
    %3692 = vmatprep.subr.mxu0 0.0
    %3693 = vmatpush1.msra.mxu0 0.0
    %3694 = vmatprep.subr.mxu0 0.0
    %3695 = vmatpush1.msra.mxu0 0.0
    %3696 = vmatprep.subr.mxu0 0.0
    %3697 = vmatpush1.msra.mxu0 0.0
    %3698 = vmatprep.subr.mxu0 0.0
    %3699 = vmatpush1.msra.mxu0 0.0
    %3700 = vmatprep.subr.mxu0 0.0
    %3701 = vmatpush1.msra.mxu0 0.0
    %3702 = vmatprep.subr.mxu0 0.0
    %3703 = vmatpush1.msra.mxu0 0.0
    %3704 = vmatprep.subr.mxu0 0.0
    %3705 = vmatpush1.msra.mxu0 0.0
    %3706 = vmatprep.subr.mxu0 0.0
    %3707 = vmatpush1.msra.mxu0 0.0
    %3708 = vmatprep.subr.mxu0 0.0
    %3709 = vmatpush1.msra.mxu0 0.0
    %3710 = vmatprep.subr.mxu0 0.0
    %3711 = vmatpush1.msra.mxu0 0.0
    %3712 = vmatprep.subr.mxu0 0.0
    %3713 = vmatpush1.msra.mxu0 0.0
    %3714 = vmatprep.subr.mxu0 0.0
    %3715 = vmatpush1.msra.mxu0 0.0
    %3716 = vmatprep.subr.mxu0 0.0
    %3717 = vmatpush1.msra.mxu0 0.0
    %3718 = vmatprep.subr.mxu0 0.0
    %3719 = vmatpush1.msra.mxu0 0.0
    %3720 = vmatprep.subr.mxu0 0.0
    %3721 = vmatpush1.msra.mxu0 0.0
    %3722 = vmatprep.subr.mxu0 0.0
    %3723 = vmatpush1.msra.mxu0 0.0
    %3724 = vmatprep.subr.mxu0 0.0
    %3725 = vmatpush1.msra.mxu0 0.0
    %3726 = vmatprep.subr.mxu0 0.0
    %3727 = vmatpush1.msra.mxu0 0.0
    %3728 = vmatprep.subr.mxu0 0.0
    %3729 = vmatpush1.msra.mxu0 0.0
    %3730 = vmatprep.subr.mxu0 0.0
    %3731 = vmatpush1.msra.mxu0 0.0
    %3732 = vmatprep.subr.mxu0 0.0
    %3733 = vmatpush1.msra.mxu0 0.0
    %3734 = vmatprep.subr.mxu0 0.0
    %3735 = vmatpush1.msra.mxu0 0.0
    %3736 = vmatprep.subr.mxu0 0.0
    %3737 = vmatpush1.msra.mxu0 0.0
    %3738 = vmatprep.subr.mxu0 0.0
    %3739 = vmatpush1.msra.mxu0 0.0
    %3740 = vmatprep.mubr.f32.mxu0 0.0
    %3741 = vmatmul.mubr.f32.gmra.mrb[0].mxu0 %v3101
    %v3742 = vpop.f32.mrb[0].mxu0
    %v3743 = vadd.f32 0.0, %v3742
    %v3744 = vpop.f32.mrb[0].mxu0
    %3745 = vmatprep.mubr.f32.mxu0 0.0
    %3746 = vmatmul.mubr.f32.gmra.mrb[0].mxu0 %v3104
    %v3747 = vpop.f32.mrb[0].mxu0
    %v3748 = vadd.f32 0.0, %v3747
    %v3749 = vpop.f32.mrb[0].mxu0
    %3750 = vdwg.mxu0
    %s3751 = scalar_lea.vmem %s45, 32
    %v3752 = vld [vmem:[%s3751] sm:$0xff]
    %v3753 = vld [vmem:[%s3751 + $0x8] sm:$0xff]
    %v3754 = vld [vmem:[%s3751 + $0x10] sm:$0xff]
    %v3755 = vld [vmem:[%s3751 + $0x18] sm:$0xff]
    %3756 = vmatprep.subr.mxu0 0.0
    %3757 = vmatpush1.msra.mxu0 %v3752
    %3758 = vmatprep.subr.mxu0 0.0
    %3759 = vmatpush1.msra.mxu0 %v3753
    %3760 = vmatprep.subr.mxu0 0.0
    %3761 = vmatpush1.msra.mxu0 %v3754
    %3762 = vmatprep.subr.mxu0 0.0
    %3763 = vmatpush1.msra.mxu0 %v3755
    %3764 = vmatprep.subr.mxu0 0.0
    %3765 = vmatpush1.msra.mxu0 0.0
    %3766 = vmatprep.subr.mxu0 0.0
    %3767 = vmatpush1.msra.mxu0 0.0
    %3768 = vmatprep.subr.mxu0 0.0
    %3769 = vmatpush1.msra.mxu0 0.0
    %3770 = vmatprep.subr.mxu0 0.0
    %3771 = vmatpush1.msra.mxu0 0.0
    %3772 = vmatprep.subr.mxu0 0.0
    %3773 = vmatpush1.msra.mxu0 0.0
    %3774 = vmatprep.subr.mxu0 0.0
    %3775 = vmatpush1.msra.mxu0 0.0
    %3776 = vmatprep.subr.mxu0 0.0
    %3777 = vmatpush1.msra.mxu0 0.0
    %3778 = vmatprep.subr.mxu0 0.0
    %3779 = vmatpush1.msra.mxu0 0.0
    %3780 = vmatprep.subr.mxu0 0.0
    %3781 = vmatpush1.msra.mxu0 0.0
    %3782 = vmatprep.subr.mxu0 0.0
    %3783 = vmatpush1.msra.mxu0 0.0
    %3784 = vmatprep.subr.mxu0 0.0
    %3785 = vmatpush1.msra.mxu0 0.0
    %3786 = vmatprep.subr.mxu0 0.0
    %3787 = vmatpush1.msra.mxu0 0.0
    %3788 = vmatprep.subr.mxu0 0.0
    %3789 = vmatpush1.msra.mxu0 0.0
    %3790 = vmatprep.subr.mxu0 0.0
    %3791 = vmatpush1.msra.mxu0 0.0
    %3792 = vmatprep.subr.mxu0 0.0
    %3793 = vmatpush1.msra.mxu0 0.0
    %3794 = vmatprep.subr.mxu0 0.0
    %3795 = vmatpush1.msra.mxu0 0.0
    %3796 = vmatprep.subr.mxu0 0.0
    %3797 = vmatpush1.msra.mxu0 0.0
    %3798 = vmatprep.subr.mxu0 0.0
    %3799 = vmatpush1.msra.mxu0 0.0
    %3800 = vmatprep.subr.mxu0 0.0
    %3801 = vmatpush1.msra.mxu0 0.0
    %3802 = vmatprep.subr.mxu0 0.0
    %3803 = vmatpush1.msra.mxu0 0.0
    %3804 = vmatprep.subr.mxu0 0.0
    %3805 = vmatpush1.msra.mxu0 0.0
    %3806 = vmatprep.subr.mxu0 0.0
    %3807 = vmatpush1.msra.mxu0 0.0
    %3808 = vmatprep.subr.mxu0 0.0
    %3809 = vmatpush1.msra.mxu0 0.0
    %3810 = vmatprep.subr.mxu0 0.0
    %3811 = vmatpush1.msra.mxu0 0.0
    %3812 = vmatprep.subr.mxu0 0.0
    %3813 = vmatpush1.msra.mxu0 0.0
    %3814 = vmatprep.subr.mxu0 0.0
    %3815 = vmatpush1.msra.mxu0 0.0
    %3816 = vmatprep.subr.mxu0 0.0
    %3817 = vmatpush1.msra.mxu0 0.0
    %3818 = vmatprep.subr.mxu0 0.0
    %3819 = vmatpush1.msra.mxu0 0.0
    %3820 = vmatprep.mubr.f32.mxu0 0.0
    %3821 = vmatmul.mubr.f32.gmra.mrb[0].mxu0 %v3186
    %v3822 = vpop.f32.mrb[0].mxu0
    %v3823 = vadd.f32 0.0, %v3822
    %v3824 = vpop.f32.mrb[0].mxu0
    %3825 = vmatprep.mubr.f32.mxu0 0.0
    %3826 = vmatmul.mubr.f32.gmra.mrb[0].mxu0 %v3189
    %v3827 = vpop.f32.mrb[0].mxu0
    %v3828 = vadd.f32 0.0, %v3827
    %v3829 = vpop.f32.mrb[0].mxu0
    %3830 = vdwg.mxu0
    %s3831 = scalar_lea.vmem %s47, 32
    %v3832 = vld [vmem:[%s3831] sm:$0xff]
    %v3833 = vld [vmem:[%s3831 + $0x8] sm:$0xff]
    %v3834 = vld [vmem:[%s3831 + $0x10] sm:$0xff]
    %v3835 = vld [vmem:[%s3831 + $0x18] sm:$0xff]
    %3836 = vmatprep.subr.mxu0 0.0
    %3837 = vmatpush1.msra.mxu0 %v3832
    %3838 = vmatprep.subr.mxu0 0.0
    %3839 = vmatpush1.msra.mxu0 %v3833
    %3840 = vmatprep.subr.mxu0 0.0
    %3841 = vmatpush1.msra.mxu0 %v3834
    %3842 = vmatprep.subr.mxu0 0.0
    %3843 = vmatpush1.msra.mxu0 %v3835
    %3844 = vmatprep.subr.mxu0 0.0
    %3845 = vmatpush1.msra.mxu0 0.0
    %3846 = vmatprep.subr.mxu0 0.0
    %3847 = vmatpush1.msra.mxu0 0.0
    %3848 = vmatprep.subr.mxu0 0.0
    %3849 = vmatpush1.msra.mxu0 0.0
    %3850 = vmatprep.subr.mxu0 0.0
    %3851 = vmatpush1.msra.mxu0 0.0
    %3852 = vmatprep.subr.mxu0 0.0
    %3853 = vmatpush1.msra.mxu0 0.0
    %3854 = vmatprep.subr.mxu0 0.0
    %3855 = vmatpush1.msra.mxu0 0.0
    %3856 = vmatprep.subr.mxu0 0.0
    %3857 = vmatpush1.msra.mxu0 0.0
    %3858 = vmatprep.subr.mxu0 0.0
    %3859 = vmatpush1.msra.mxu0 0.0
    %3860 = vmatprep.subr.mxu0 0.0
    %3861 = vmatpush1.msra.mxu0 0.0
    %3862 = vmatprep.subr.mxu0 0.0
    %3863 = vmatpush1.msra.mxu0 0.0
    %3864 = vmatprep.subr.mxu0 0.0
    %3865 = vmatpush1.msra.mxu0 0.0
    %3866 = vmatprep.subr.mxu0 0.0
    %3867 = vmatpush1.msra.mxu0 0.0
    %3868 = vmatprep.subr.mxu0 0.0
    %3869 = vmatpush1.msra.mxu0 0.0
    %3870 = vmatprep.subr.mxu0 0.0
    %3871 = vmatpush1.msra.mxu0 0.0
    %3872 = vmatprep.subr.mxu0 0.0
    %3873 = vmatpush1.msra.mxu0 0.0
    %3874 = vmatprep.subr.mxu0 0.0
    %3875 = vmatpush1.msra.mxu0 0.0
    %3876 = vmatprep.subr.mxu0 0.0
    %3877 = vmatpush1.msra.mxu0 0.0
    %3878 = vmatprep.subr.mxu0 0.0
    %3879 = vmatpush1.msra.mxu0 0.0
    %3880 = vmatprep.subr.mxu0 0.0
    %3881 = vmatpush1.msra.mxu0 0.0
    %3882 = vmatprep.subr.mxu0 0.0
    %3883 = vmatpush1.msra.mxu0 0.0
    %3884 = vmatprep.subr.mxu0 0.0
    %3885 = vmatpush1.msra.mxu0 0.0
    %3886 = vmatprep.subr.mxu0 0.0
    %3887 = vmatpush1.msra.mxu0 0.0
    %3888 = vmatprep.subr.mxu0 0.0
    %3889 = vmatpush1.msra.mxu0 0.0
    %3890 = vmatprep.subr.mxu0 0.0
    %3891 = vmatpush1.msra.mxu0 0.0
    %3892 = vmatprep.subr.mxu0 0.0
    %3893 = vmatpush1.msra.mxu0 0.0
    %3894 = vmatprep.subr.mxu0 0.0
    %3895 = vmatpush1.msra.mxu0 0.0
    %3896 = vmatprep.subr.mxu0 0.0
    %3897 = vmatpush1.msra.mxu0 0.0
    %3898 = vmatprep.subr.mxu0 0.0
    %3899 = vmatpush1.msra.mxu0 0.0
    %3900 = vmatprep.mubr.f32.mxu0 0.0
    %3901 = vmatmul.mubr.f32.gmra.mrb[0].mxu0 %v3186
    %v3902 = vpop.f32.mrb[0].mxu0
    %v3903 = vadd.f32 0.0, %v3902
    %v3904 = vpop.f32.mrb[0].mxu0
    %3905 = vmatprep.mubr.f32.mxu0 0.0
    %3906 = vmatmul.mubr.f32.gmra.mrb[0].mxu0 %v3189
    %v3907 = vpop.f32.mrb[0].mxu0
    %v3908 = vadd.f32 0.0, %v3907
    %v3909 = vpop.f32.mrb[0].mxu0
    %3910 = vdwg.mxu0
    %v3912 = vsel %vm399, %v3743, 0
    %v3915 = vsel %vm399, %v3823, 0
    %3917 = vmatprep.subr.mxu0 0.0
    %3918 = vmatpush1.xpose.msra.mxu0 %v3915
    %3919 = vmatprep.subr.mxu0 0.0
    %3920 = vmatpush1.xpose.msra.mxu0 0.0
    %3921 = vmatprep.subr.mxu0 0.0
    %3922 = vmatpush1.xpose.msra.mxu0 0.0
    %3923 = vmatprep.subr.mxu0 0.0
    %3924 = vmatpush1.xpose.msra.mxu0 0.0
    %3925 = vmatprep.subr.mxu0 0.0
    %3926 = vmatpush1.xpose.msra.mxu0 0.0
    %3927 = vmatprep.subr.mxu0 0.0
    %3928 = vmatpush1.xpose.msra.mxu0 0.0
    %3929 = vmatprep.subr.mxu0 0.0
    %3930 = vmatpush1.xpose.msra.mxu0 0.0
    %3931 = vmatprep.subr.mxu0 0.0
    %3932 = vmatpush1.xpose.msra.mxu0 0.0
    %3933 = vmatprep.subr.mxu0 0.0
    %3934 = vmatpush1.xpose.msra.mxu0 0.0
    %3935 = vmatprep.subr.mxu0 0.0
    %3936 = vmatpush1.xpose.msra.mxu0 0.0
    %3937 = vmatprep.subr.mxu0 0.0
    %3938 = vmatpush1.xpose.msra.mxu0 0.0
    %3939 = vmatprep.subr.mxu0 0.0
    %3940 = vmatpush1.xpose.msra.mxu0 0.0
    %3941 = vmatprep.subr.mxu0 0.0
    %3942 = vmatpush1.xpose.msra.mxu0 0.0
    %3943 = vmatprep.subr.mxu0 0.0
    %3944 = vmatpush1.xpose.msra.mxu0 0.0
    %3945 = vmatprep.subr.mxu0 0.0
    %3946 = vmatpush1.xpose.msra.mxu0 0.0
    %3947 = vmatprep.subr.mxu0 0.0
    %3948 = vmatpush1.xpose.msra.mxu0 0.0
    %3949 = vmatprep.subr.mxu0 0.0
    %3950 = vmatpush1.xpose.msra.mxu0 0.0
    %3951 = vmatprep.subr.mxu0 0.0
    %3952 = vmatpush1.xpose.msra.mxu0 0.0
    %3953 = vmatprep.subr.mxu0 0.0
    %3954 = vmatpush1.xpose.msra.mxu0 0.0
    %3955 = vmatprep.subr.mxu0 0.0
    %3956 = vmatpush1.xpose.msra.mxu0 0.0
    %3957 = vmatprep.subr.mxu0 0.0
    %3958 = vmatpush1.xpose.msra.mxu0 0.0
    %3959 = vmatprep.subr.mxu0 0.0
    %3960 = vmatpush1.xpose.msra.mxu0 0.0
    %3961 = vmatprep.subr.mxu0 0.0
    %3962 = vmatpush1.xpose.msra.mxu0 0.0
    %3963 = vmatprep.subr.mxu0 0.0
    %3964 = vmatpush1.xpose.msra.mxu0 0.0
    %3965 = vmatprep.subr.mxu0 0.0
    %3966 = vmatpush1.xpose.msra.mxu0 0.0
    %3967 = vmatprep.subr.mxu0 0.0
    %3968 = vmatpush1.xpose.msra.mxu0 0.0
    %3969 = vmatprep.subr.mxu0 0.0
    %3970 = vmatpush1.xpose.msra.mxu0 0.0
    %3971 = vmatprep.subr.mxu0 0.0
    %3972 = vmatpush1.xpose.msra.mxu0 0.0
    %3973 = vmatprep.subr.mxu0 0.0
    %3974 = vmatpush1.xpose.msra.mxu0 0.0
    %3975 = vmatprep.subr.mxu0 0.0
    %3976 = vmatpush1.xpose.msra.mxu0 0.0
    %3977 = vmatprep.subr.mxu0 0.0
    %3978 = vmatpush1.xpose.msra.mxu0 0.0
    %3979 = vmatprep.subr.mxu0 0.0
    %3980 = vmatpush1.xpose.msra.mxu0 0.0
    %3981 = vmatprep.mubr.f32.mxu0 0.0
    %3982 = vmatmul.mubr.f32.gmra.mrb[0].mxu0 %v3912
    %v3983 = vpop.f32.mrb[0].mxu0
    %v3984 = vadd.f32 0.0, %v3983
    %v3985 = vpop.f32.mrb[0].mxu0
    %3986 = vdwg.mxu0
    %v3988 = vsel %vm399, %v3748, 0
    %v3991 = vsel %vm399, %v3828, 0
    %3993 = vmatprep.subr.mxu0 0.0
    %3994 = vmatpush1.xpose.msra.mxu0 %v3991
    %3995 = vmatprep.subr.mxu0 0.0
    %3996 = vmatpush1.xpose.msra.mxu0 0.0
    %3997 = vmatprep.subr.mxu0 0.0
    %3998 = vmatpush1.xpose.msra.mxu0 0.0
    %3999 = vmatprep.subr.mxu0 0.0
    %4000 = vmatpush1.xpose.msra.mxu0 0.0
    %4001 = vmatprep.subr.mxu0 0.0
    %4002 = vmatpush1.xpose.msra.mxu0 0.0
    %4003 = vmatprep.subr.mxu0 0.0
    %4004 = vmatpush1.xpose.msra.mxu0 0.0
    %4005 = vmatprep.subr.mxu0 0.0
    %4006 = vmatpush1.xpose.msra.mxu0 0.0
    %4007 = vmatprep.subr.mxu0 0.0
    %4008 = vmatpush1.xpose.msra.mxu0 0.0
    %4009 = vmatprep.subr.mxu0 0.0
    %4010 = vmatpush1.xpose.msra.mxu0 0.0
    %4011 = vmatprep.subr.mxu0 0.0
    %4012 = vmatpush1.xpose.msra.mxu0 0.0
    %4013 = vmatprep.subr.mxu0 0.0
    %4014 = vmatpush1.xpose.msra.mxu0 0.0
    %4015 = vmatprep.subr.mxu0 0.0
    %4016 = vmatpush1.xpose.msra.mxu0 0.0
    %4017 = vmatprep.subr.mxu0 0.0
    %4018 = vmatpush1.xpose.msra.mxu0 0.0
    %4019 = vmatprep.subr.mxu0 0.0
    %4020 = vmatpush1.xpose.msra.mxu0 0.0
    %4021 = vmatprep.subr.mxu0 0.0
    %4022 = vmatpush1.xpose.msra.mxu0 0.0
    %4023 = vmatprep.subr.mxu0 0.0
    %4024 = vmatpush1.xpose.msra.mxu0 0.0
    %4025 = vmatprep.subr.mxu0 0.0
    %4026 = vmatpush1.xpose.msra.mxu0 0.0
    %4027 = vmatprep.subr.mxu0 0.0
    %4028 = vmatpush1.xpose.msra.mxu0 0.0
    %4029 = vmatprep.subr.mxu0 0.0
    %4030 = vmatpush1.xpose.msra.mxu0 0.0
    %4031 = vmatprep.subr.mxu0 0.0
    %4032 = vmatpush1.xpose.msra.mxu0 0.0
    %4033 = vmatprep.subr.mxu0 0.0
    %4034 = vmatpush1.xpose.msra.mxu0 0.0
    %4035 = vmatprep.subr.mxu0 0.0
    %4036 = vmatpush1.xpose.msra.mxu0 0.0
    %4037 = vmatprep.subr.mxu0 0.0
    %4038 = vmatpush1.xpose.msra.mxu0 0.0
    %4039 = vmatprep.subr.mxu0 0.0
    %4040 = vmatpush1.xpose.msra.mxu0 0.0
    %4041 = vmatprep.subr.mxu0 0.0
    %4042 = vmatpush1.xpose.msra.mxu0 0.0
    %4043 = vmatprep.subr.mxu0 0.0
    %4044 = vmatpush1.xpose.msra.mxu0 0.0
    %4045 = vmatprep.subr.mxu0 0.0
    %4046 = vmatpush1.xpose.msra.mxu0 0.0
    %4047 = vmatprep.subr.mxu0 0.0
    %4048 = vmatpush1.xpose.msra.mxu0 0.0
    %4049 = vmatprep.subr.mxu0 0.0
    %4050 = vmatpush1.xpose.msra.mxu0 0.0
    %4051 = vmatprep.subr.mxu0 0.0
    %4052 = vmatpush1.xpose.msra.mxu0 0.0
    %4053 = vmatprep.subr.mxu0 0.0
    %4054 = vmatpush1.xpose.msra.mxu0 0.0
    %4055 = vmatprep.subr.mxu0 0.0
    %4056 = vmatpush1.xpose.msra.mxu0 0.0
    %4057 = vmatprep.mubr.f32.mxu0 0.0
    %4058 = vmatmul.mubr.f32.gmra.mrb[0].mxu0 %v3988
    %v4059 = vpop.f32.mrb[0].mxu0
    %v4060 = vadd.f32 0.0, %v4059
    %v4061 = vpop.f32.mrb[0].mxu0
    %4062 = vdwg.mxu0
    %v4063 = vmul.f32 %v3984, 0.25
    %v4064 = vmul.f32 %v4060, 0.25
    %v4065 = vadd.f32 %v4063, %v559
    %v4066 = vadd.f32 %v4064, %v563
    %v4067 = vsel %vm568, %v4065, -inf
    %4068 = vmax.xlane.f32.xlu0 %v4067
    %v4069 = vpop.xlane.xlu0 %4068
    %v4070 = vsel %vm568, %v4066, -inf
    %4071 = vmax.xlane.f32.xlu0 %v4070
    %v4072 = vpop.xlane.xlu0 %4071
    %v4073 = vsub.f32 %v4065, %v4069
    %v4074 = vsub.f32 %v4066, %v4072
    %v4075 = vmul.f32 %v4073, 1.442695
    %v4076 = vpow.pop %v4075
    %v4077 = vmul.f32 %v4074, 1.442695
    %v4078 = vpow.pop %v4077
    %v4079 = vsel %vm568, %v4076, 0.0
    %4080 = vadd.xlane.f32.xlu0 %v4079
    %v4081 = vpop.xlane.xlu0 %4080
    %v4082 = vsel %vm568, %v4078, 0.0
    %4083 = vadd.xlane.f32.xlu0 %v4082
    %v4084 = vpop.xlane.xlu0 %4083
    %v4085 = vrcp.pop %v4081
    %v4086 = vrcp.pop %v4084
    %v4087 = vmul.f32 %v4076, %v4085
    %v4088 = vmul.f32 %v4078, %v4086
    %v4090 = vsel %vm568, %v4087, 0
    %4092 = vmatprep.subr.mxu0 0.0
    %4093 = vmatpush1.msra.mxu0 %v3903
    %4094 = vmatprep.subr.mxu0 0.0
    %4095 = vmatpush1.msra.mxu0 0.0
    %4096 = vmatprep.subr.mxu0 0.0
    %4097 = vmatpush1.msra.mxu0 0.0
    %4098 = vmatprep.subr.mxu0 0.0
    %4099 = vmatpush1.msra.mxu0 0.0
    %4100 = vmatprep.subr.mxu0 0.0
    %4101 = vmatpush1.msra.mxu0 0.0
    %4102 = vmatprep.subr.mxu0 0.0
    %4103 = vmatpush1.msra.mxu0 0.0
    %4104 = vmatprep.subr.mxu0 0.0
    %4105 = vmatpush1.msra.mxu0 0.0
    %4106 = vmatprep.subr.mxu0 0.0
    %4107 = vmatpush1.msra.mxu0 0.0
    %4108 = vmatprep.subr.mxu0 0.0
    %4109 = vmatpush1.msra.mxu0 0.0
    %4110 = vmatprep.subr.mxu0 0.0
    %4111 = vmatpush1.msra.mxu0 0.0
    %4112 = vmatprep.subr.mxu0 0.0
    %4113 = vmatpush1.msra.mxu0 0.0
    %4114 = vmatprep.subr.mxu0 0.0
    %4115 = vmatpush1.msra.mxu0 0.0
    %4116 = vmatprep.subr.mxu0 0.0
    %4117 = vmatpush1.msra.mxu0 0.0
    %4118 = vmatprep.subr.mxu0 0.0
    %4119 = vmatpush1.msra.mxu0 0.0
    %4120 = vmatprep.subr.mxu0 0.0
    %4121 = vmatpush1.msra.mxu0 0.0
    %4122 = vmatprep.subr.mxu0 0.0
    %4123 = vmatpush1.msra.mxu0 0.0
    %4124 = vmatprep.subr.mxu0 0.0
    %4125 = vmatpush1.msra.mxu0 0.0
    %4126 = vmatprep.subr.mxu0 0.0
    %4127 = vmatpush1.msra.mxu0 0.0
    %4128 = vmatprep.subr.mxu0 0.0
    %4129 = vmatpush1.msra.mxu0 0.0
    %4130 = vmatprep.subr.mxu0 0.0
    %4131 = vmatpush1.msra.mxu0 0.0
    %4132 = vmatprep.subr.mxu0 0.0
    %4133 = vmatpush1.msra.mxu0 0.0
    %4134 = vmatprep.subr.mxu0 0.0
    %4135 = vmatpush1.msra.mxu0 0.0
    %4136 = vmatprep.subr.mxu0 0.0
    %4137 = vmatpush1.msra.mxu0 0.0
    %4138 = vmatprep.subr.mxu0 0.0
    %4139 = vmatpush1.msra.mxu0 0.0
    %4140 = vmatprep.subr.mxu0 0.0
    %4141 = vmatpush1.msra.mxu0 0.0
    %4142 = vmatprep.subr.mxu0 0.0
    %4143 = vmatpush1.msra.mxu0 0.0
    %4144 = vmatprep.subr.mxu0 0.0
    %4145 = vmatpush1.msra.mxu0 0.0
    %4146 = vmatprep.subr.mxu0 0.0
    %4147 = vmatpush1.msra.mxu0 0.0
    %4148 = vmatprep.subr.mxu0 0.0
    %4149 = vmatpush1.msra.mxu0 0.0
    %4150 = vmatprep.subr.mxu0 0.0
    %4151 = vmatpush1.msra.mxu0 0.0
    %4152 = vmatprep.subr.mxu0 0.0
    %4153 = vmatpush1.msra.mxu0 0.0
    %4154 = vmatprep.subr.mxu0 0.0
    %4155 = vmatpush1.msra.mxu0 0.0
    %4156 = vmatprep.mubr.f32.mxu0 0.0
    %4157 = vmatmul.mubr.f32.gmra.mrb[0].mxu0 %v4090
    %v4158 = vpop.f32.mrb[0].mxu0
    %v4159 = vadd.f32 0.0, %v4158
    %v4160 = vpop.f32.mrb[0].mxu0
    %4161 = vdwg.mxu0
    %v4163 = vsel %vm568, %v4088, 0
    %4165 = vmatprep.subr.mxu0 0.0
    %4166 = vmatpush1.msra.mxu0 %v3908
    %4167 = vmatprep.subr.mxu0 0.0
    %4168 = vmatpush1.msra.mxu0 0.0
    %4169 = vmatprep.subr.mxu0 0.0
    %4170 = vmatpush1.msra.mxu0 0.0
    %4171 = vmatprep.subr.mxu0 0.0
    %4172 = vmatpush1.msra.mxu0 0.0
    %4173 = vmatprep.subr.mxu0 0.0
    %4174 = vmatpush1.msra.mxu0 0.0
    %4175 = vmatprep.subr.mxu0 0.0
    %4176 = vmatpush1.msra.mxu0 0.0
    %4177 = vmatprep.subr.mxu0 0.0
    %4178 = vmatpush1.msra.mxu0 0.0
    %4179 = vmatprep.subr.mxu0 0.0
    %4180 = vmatpush1.msra.mxu0 0.0
    %4181 = vmatprep.subr.mxu0 0.0
    %4182 = vmatpush1.msra.mxu0 0.0
    %4183 = vmatprep.subr.mxu0 0.0
    %4184 = vmatpush1.msra.mxu0 0.0
    %4185 = vmatprep.subr.mxu0 0.0
    %4186 = vmatpush1.msra.mxu0 0.0
    %4187 = vmatprep.subr.mxu0 0.0
    %4188 = vmatpush1.msra.mxu0 0.0
    %4189 = vmatprep.subr.mxu0 0.0
    %4190 = vmatpush1.msra.mxu0 0.0
    %4191 = vmatprep.subr.mxu0 0.0
    %4192 = vmatpush1.msra.mxu0 0.0
    %4193 = vmatprep.subr.mxu0 0.0
    %4194 = vmatpush1.msra.mxu0 0.0
    %4195 = vmatprep.subr.mxu0 0.0
    %4196 = vmatpush1.msra.mxu0 0.0
    %4197 = vmatprep.subr.mxu0 0.0
    %4198 = vmatpush1.msra.mxu0 0.0
    %4199 = vmatprep.subr.mxu0 0.0
    %4200 = vmatpush1.msra.mxu0 0.0
    %4201 = vmatprep.subr.mxu0 0.0
    %4202 = vmatpush1.msra.mxu0 0.0
    %4203 = vmatprep.subr.mxu0 0.0
    %4204 = vmatpush1.msra.mxu0 0.0
    %4205 = vmatprep.subr.mxu0 0.0
    %4206 = vmatpush1.msra.mxu0 0.0
    %4207 = vmatprep.subr.mxu0 0.0
    %4208 = vmatpush1.msra.mxu0 0.0
    %4209 = vmatprep.subr.mxu0 0.0
    %4210 = vmatpush1.msra.mxu0 0.0
    %4211 = vmatprep.subr.mxu0 0.0
    %4212 = vmatpush1.msra.mxu0 0.0
    %4213 = vmatprep.subr.mxu0 0.0
    %4214 = vmatpush1.msra.mxu0 0.0
    %4215 = vmatprep.subr.mxu0 0.0
    %4216 = vmatpush1.msra.mxu0 0.0
    %4217 = vmatprep.subr.mxu0 0.0
    %4218 = vmatpush1.msra.mxu0 0.0
    %4219 = vmatprep.subr.mxu0 0.0
    %4220 = vmatpush1.msra.mxu0 0.0
    %4221 = vmatprep.subr.mxu0 0.0
    %4222 = vmatpush1.msra.mxu0 0.0
    %4223 = vmatprep.subr.mxu0 0.0
    %4224 = vmatpush1.msra.mxu0 0.0
    %4225 = vmatprep.subr.mxu0 0.0
    %4226 = vmatpush1.msra.mxu0 0.0
    %4227 = vmatprep.subr.mxu0 0.0
    %4228 = vmatpush1.msra.mxu0 0.0
    %4229 = vmatprep.mubr.f32.mxu0 0.0
    %4230 = vmatmul.mubr.f32.gmra.mrb[0].mxu0 %v4163
    %v4231 = vpop.f32.mrb[0].mxu0
    %v4232 = vadd.f32 0.0, %v4231
    %v4233 = vpop.f32.mrb[0].mxu0
    %4234 = vdwg.mxu0
    %s4235 = scalar_lea.vmem %s49, 16
    %v4236 = vld [vmem:[%s4235] sm:$0xff]
    %v4237 = vld [vmem:[%s4235 + $0x8] sm:$0xff]
    %v4239 = vsel %vm399, %v4159, 0
    %v4242 = vsel %vm399, %v4232, 0
    %4244 = vmatprep.subr.mxu0 0.0
    %4245 = vmatpush1.msra.mxu0 %v4236
    %4246 = vmatprep.subr.mxu0 0.0
    %4247 = vmatpush1.msra.mxu0 %v4237
    %4248 = vmatprep.subr.mxu0 0.0
    %4249 = vmatpush1.msra.mxu0 0.0
    %4250 = vmatprep.subr.mxu0 0.0
    %4251 = vmatpush1.msra.mxu0 0.0
    %4252 = vmatprep.subr.mxu0 0.0
    %4253 = vmatpush1.msra.mxu0 0.0
    %4254 = vmatprep.subr.mxu0 0.0
    %4255 = vmatpush1.msra.mxu0 0.0
    %4256 = vmatprep.subr.mxu0 0.0
    %4257 = vmatpush1.msra.mxu0 0.0
    %4258 = vmatprep.subr.mxu0 0.0
    %4259 = vmatpush1.msra.mxu0 0.0
    %4260 = vmatprep.subr.mxu0 0.0
    %4261 = vmatpush1.msra.mxu0 0.0
    %4262 = vmatprep.subr.mxu0 0.0
    %4263 = vmatpush1.msra.mxu0 0.0
    %4264 = vmatprep.subr.mxu0 0.0
    %4265 = vmatpush1.msra.mxu0 0.0
    %4266 = vmatprep.subr.mxu0 0.0
    %4267 = vmatpush1.msra.mxu0 0.0
    %4268 = vmatprep.subr.mxu0 0.0
    %4269 = vmatpush1.msra.mxu0 0.0
    %4270 = vmatprep.subr.mxu0 0.0
    %4271 = vmatpush1.msra.mxu0 0.0
    %4272 = vmatprep.subr.mxu0 0.0
    %4273 = vmatpush1.msra.mxu0 0.0
    %4274 = vmatprep.subr.mxu0 0.0
    %4275 = vmatpush1.msra.mxu0 0.0
    %4276 = vmatprep.subr.mxu0 0.0
    %4277 = vmatpush1.msra.mxu0 0.0
    %4278 = vmatprep.subr.mxu0 0.0
    %4279 = vmatpush1.msra.mxu0 0.0
    %4280 = vmatprep.subr.mxu0 0.0
    %4281 = vmatpush1.msra.mxu0 0.0
    %4282 = vmatprep.subr.mxu0 0.0
    %4283 = vmatpush1.msra.mxu0 0.0
    %4284 = vmatprep.subr.mxu0 0.0
    %4285 = vmatpush1.msra.mxu0 0.0
    %4286 = vmatprep.subr.mxu0 0.0
    %4287 = vmatpush1.msra.mxu0 0.0
    %4288 = vmatprep.subr.mxu0 0.0
    %4289 = vmatpush1.msra.mxu0 0.0
    %4290 = vmatprep.subr.mxu0 0.0
    %4291 = vmatpush1.msra.mxu0 0.0
    %4292 = vmatprep.subr.mxu0 0.0
    %4293 = vmatpush1.msra.mxu0 0.0
    %4294 = vmatprep.subr.mxu0 0.0
    %4295 = vmatpush1.msra.mxu0 0.0
    %4296 = vmatprep.subr.mxu0 0.0
    %4297 = vmatpush1.msra.mxu0 0.0
    %4298 = vmatprep.subr.mxu0 0.0
    %4299 = vmatpush1.msra.mxu0 0.0
    %4300 = vmatprep.subr.mxu0 0.0
    %4301 = vmatpush1.msra.mxu0 0.0
    %4302 = vmatprep.subr.mxu0 0.0
    %4303 = vmatpush1.msra.mxu0 0.0
    %4304 = vmatprep.subr.mxu0 0.0
    %4305 = vmatpush1.msra.mxu0 0.0
    %4306 = vmatprep.subr.mxu0 0.0
    %4307 = vmatpush1.msra.mxu0 0.0
    %4308 = vmatprep.mubr.f32.mxu0 0.0
    %4309 = vmatmul.mubr.f32.gmra.mrb[0].mxu0 %v4239
    %v4310 = vpop.f32.mrb[0].mxu0
    %v4311 = vadd.f32 0.0, %v4310
    %v4312 = vpop.f32.mrb[0].mxu0
    %4313 = vmatprep.mubr.f32.mxu0 0.0
    %4314 = vmatmul.mubr.f32.gmra.mrb[0].mxu0 %v4242
    %v4315 = vpop.f32.mrb[0].mxu0
    %v4316 = vadd.f32 0.0, %v4315
    %v4317 = vpop.f32.mrb[0].mxu0
    %4318 = vdwg.mxu0
    %v4320 = vsel %vm399, %v3593, 0
    %v4323 = vsel %vm399, %v3666, 0
    %4325 = vmatprep.subr.mxu0 0.0
    %4326 = vmatpush1.msra.mxu0 %v3669
    %4327 = vmatprep.subr.mxu0 0.0
    %4328 = vmatpush1.msra.mxu0 %v3670
    %4329 = vmatprep.subr.mxu0 0.0
    %4330 = vmatpush1.msra.mxu0 0.0
    %4331 = vmatprep.subr.mxu0 0.0
    %4332 = vmatpush1.msra.mxu0 0.0
    %4333 = vmatprep.subr.mxu0 0.0
    %4334 = vmatpush1.msra.mxu0 0.0
    %4335 = vmatprep.subr.mxu0 0.0
    %4336 = vmatpush1.msra.mxu0 0.0
    %4337 = vmatprep.subr.mxu0 0.0
    %4338 = vmatpush1.msra.mxu0 0.0
    %4339 = vmatprep.subr.mxu0 0.0
    %4340 = vmatpush1.msra.mxu0 0.0
    %4341 = vmatprep.subr.mxu0 0.0
    %4342 = vmatpush1.msra.mxu0 0.0
    %4343 = vmatprep.subr.mxu0 0.0
    %4344 = vmatpush1.msra.mxu0 0.0
    %4345 = vmatprep.subr.mxu0 0.0
    %4346 = vmatpush1.msra.mxu0 0.0
    %4347 = vmatprep.subr.mxu0 0.0
    %4348 = vmatpush1.msra.mxu0 0.0
    %4349 = vmatprep.subr.mxu0 0.0
    %4350 = vmatpush1.msra.mxu0 0.0
    %4351 = vmatprep.subr.mxu0 0.0
    %4352 = vmatpush1.msra.mxu0 0.0
    %4353 = vmatprep.subr.mxu0 0.0
    %4354 = vmatpush1.msra.mxu0 0.0
    %4355 = vmatprep.subr.mxu0 0.0
    %4356 = vmatpush1.msra.mxu0 0.0
    %4357 = vmatprep.subr.mxu0 0.0
    %4358 = vmatpush1.msra.mxu0 0.0
    %4359 = vmatprep.subr.mxu0 0.0
    %4360 = vmatpush1.msra.mxu0 0.0
    %4361 = vmatprep.subr.mxu0 0.0
    %4362 = vmatpush1.msra.mxu0 0.0
    %4363 = vmatprep.subr.mxu0 0.0
    %4364 = vmatpush1.msra.mxu0 0.0
    %4365 = vmatprep.subr.mxu0 0.0
    %4366 = vmatpush1.msra.mxu0 0.0
    %4367 = vmatprep.subr.mxu0 0.0
    %4368 = vmatpush1.msra.mxu0 0.0
    %4369 = vmatprep.subr.mxu0 0.0
    %4370 = vmatpush1.msra.mxu0 0.0
    %4371 = vmatprep.subr.mxu0 0.0
    %4372 = vmatpush1.msra.mxu0 0.0
    %4373 = vmatprep.subr.mxu0 0.0
    %4374 = vmatpush1.msra.mxu0 0.0
    %4375 = vmatprep.subr.mxu0 0.0
    %4376 = vmatpush1.msra.mxu0 0.0
    %4377 = vmatprep.subr.mxu0 0.0
    %4378 = vmatpush1.msra.mxu0 0.0
    %4379 = vmatprep.subr.mxu0 0.0
    %4380 = vmatpush1.msra.mxu0 0.0
    %4381 = vmatprep.subr.mxu0 0.0
    %4382 = vmatpush1.msra.mxu0 0.0
    %4383 = vmatprep.subr.mxu0 0.0
    %4384 = vmatpush1.msra.mxu0 0.0
    %4385 = vmatprep.subr.mxu0 0.0
    %4386 = vmatpush1.msra.mxu0 0.0
    %4387 = vmatprep.subr.mxu0 0.0
    %4388 = vmatpush1.msra.mxu0 0.0
    %4389 = vmatprep.mubr.f32.mxu0 0.0
    %4390 = vmatmul.mubr.f32.gmra.mrb[0].mxu0 %v4320
    %v4391 = vpop.f32.mrb[0].mxu0
    %v4392 = vadd.f32 %v4311, %v4391
    %v4393 = vpop.f32.mrb[0].mxu0
    %4394 = vmatprep.mubr.f32.mxu0 0.0
    %4395 = vmatmul.mubr.f32.gmra.mrb[0].mxu0 %v4323
    %v4396 = vpop.f32.mrb[0].mxu0
    %v4397 = vadd.f32 %v4316, %v4396
    %v4398 = vpop.f32.mrb[0].mxu0
    %4399 = vdwg.mxu0
    %v4400 = vadd.f32 %v3094, %v4392
    %v4401 = vadd.f32 %v3095, %v4397
    %v4402 = vld [vmem:[%s51] sm:$0x1]
    %v4403 = vld [vmem:[%s53] sm:$0x1]
    %v4404 = vsel %vm159, %v4400, 0.0
    %4405 = vadd.xlane.f32.xlu0 %v4404
    %v4406 = vpop.xlane.xlu0 %4405
    %v4407 = vsel %vm159, %v4401, 0.0
    %4408 = vadd.xlane.f32.xlu0 %v4407
    %v4409 = vpop.xlane.xlu0 %4408
    %v4410 = vmul.f32 %v4406, %v1478
    %v4411 = vmul.f32 %v4409, %v1478
    %v4412 = vsub.f32 %v4400, %v4410
    %v4413 = vsub.f32 %v4401, %v4411
    %v4414 = vmul.f32 %v4412, %v4412
    %v4415 = vmul.f32 %v4413, %v4413
    %v4416 = vsel %vm159, %v4414, 0.0
    %4417 = vadd.xlane.f32.xlu0 %v4416
    %v4418 = vpop.xlane.xlu0 %4417
    %v4419 = vsel %vm159, %v4415, 0.0
    %4420 = vadd.xlane.f32.xlu0 %v4419
    %v4421 = vpop.xlane.xlu0 %4420
    %v4422 = vmul.f32 %v4418, %v1478
    %v4423 = vmul.f32 %v4421, %v1478
    %v4424 = vadd.f32 %v4422, 1e-05
    %v4425 = vadd.f32 %v4423, 1e-05
    %v4426 = vrsqrt.pop %v4424
    %v4427 = vrsqrt.pop %v4425
    %v4428 = vmul.f32 %v4412, %v4426
    %v4429 = vmul.f32 %v4413, %v4427
    %v4431 = vlaneseq
    %v4432 = vshrl.u32 %v4431, 7
    %v4433 = vsub.s32 0, %v4432
    %v4434 = vrot.slane %v4402, %v4433
    %v4436 = vmul.f32 %v4428, %v4434
    %v4437 = vmul.f32 %v4429, %v4434
    %v4439 = vlaneseq
    %v4440 = vshrl.u32 %v4439, 7
    %v4441 = vsub.s32 0, %v4440
    %v4442 = vrot.slane %v4403, %v4441
    %v4444 = vadd.f32 %v4436, %v4442
    %v4445 = vadd.f32 %v4437, %v4442
    %v4446 = vld [vmem:[%s55] sm:$0xff]
    %v4447 = vld [vmem:[%s55 + $0x8] sm:$0xff]
    %v4448 = vld [vmem:[%s55 + $0x10] sm:$0xff]
    %v4449 = vld [vmem:[%s55 + $0x18] sm:$0xff]
    %v4450 = vld [vmem:[%s57] sm:$0x1]
    %v4452 = vlaneseq
    %v4453 = vshrl.u32 %v4452, 7
    %v4454 = vsub.s32 0, %v4453
    %v4455 = vrot.slane %v4450, %v4454
    %v4458 = vsel %vm159, %v4444, 0
    %v4461 = vsel %vm159, %v4445, 0
    %4463 = vmatprep.subr.mxu0 0.0
    %4464 = vmatpush1.msra.mxu0 %v4446
    %4465 = vmatprep.subr.mxu0 0.0
    %4466 = vmatpush1.msra.mxu0 %v4447
    %4467 = vmatprep.subr.mxu0 0.0
    %4468 = vmatpush1.msra.mxu0 %v4448
    %4469 = vmatprep.subr.mxu0 0.0
    %4470 = vmatpush1.msra.mxu0 %v4449
    %4471 = vmatprep.subr.mxu0 0.0
    %4472 = vmatpush1.msra.mxu0 0.0
    %4473 = vmatprep.subr.mxu0 0.0
    %4474 = vmatpush1.msra.mxu0 0.0
    %4475 = vmatprep.subr.mxu0 0.0
    %4476 = vmatpush1.msra.mxu0 0.0
    %4477 = vmatprep.subr.mxu0 0.0
    %4478 = vmatpush1.msra.mxu0 0.0
    %4479 = vmatprep.subr.mxu0 0.0
    %4480 = vmatpush1.msra.mxu0 0.0
    %4481 = vmatprep.subr.mxu0 0.0
    %4482 = vmatpush1.msra.mxu0 0.0
    %4483 = vmatprep.subr.mxu0 0.0
    %4484 = vmatpush1.msra.mxu0 0.0
    %4485 = vmatprep.subr.mxu0 0.0
    %4486 = vmatpush1.msra.mxu0 0.0
    %4487 = vmatprep.subr.mxu0 0.0
    %4488 = vmatpush1.msra.mxu0 0.0
    %4489 = vmatprep.subr.mxu0 0.0
    %4490 = vmatpush1.msra.mxu0 0.0
    %4491 = vmatprep.subr.mxu0 0.0
    %4492 = vmatpush1.msra.mxu0 0.0
    %4493 = vmatprep.subr.mxu0 0.0
    %4494 = vmatpush1.msra.mxu0 0.0
    %4495 = vmatprep.subr.mxu0 0.0
    %4496 = vmatpush1.msra.mxu0 0.0
    %4497 = vmatprep.subr.mxu0 0.0
    %4498 = vmatpush1.msra.mxu0 0.0
    %4499 = vmatprep.subr.mxu0 0.0
    %4500 = vmatpush1.msra.mxu0 0.0
    %4501 = vmatprep.subr.mxu0 0.0
    %4502 = vmatpush1.msra.mxu0 0.0
    %4503 = vmatprep.subr.mxu0 0.0
    %4504 = vmatpush1.msra.mxu0 0.0
    %4505 = vmatprep.subr.mxu0 0.0
    %4506 = vmatpush1.msra.mxu0 0.0
    %4507 = vmatprep.subr.mxu0 0.0
    %4508 = vmatpush1.msra.mxu0 0.0
    %4509 = vmatprep.subr.mxu0 0.0
    %4510 = vmatpush1.msra.mxu0 0.0
    %4511 = vmatprep.subr.mxu0 0.0
    %4512 = vmatpush1.msra.mxu0 0.0
    %4513 = vmatprep.subr.mxu0 0.0
    %4514 = vmatpush1.msra.mxu0 0.0
    %4515 = vmatprep.subr.mxu0 0.0
    %4516 = vmatpush1.msra.mxu0 0.0
    %4517 = vmatprep.subr.mxu0 0.0
    %4518 = vmatpush1.msra.mxu0 0.0
    %4519 = vmatprep.subr.mxu0 0.0
    %4520 = vmatpush1.msra.mxu0 0.0
    %4521 = vmatprep.subr.mxu0 0.0
    %4522 = vmatpush1.msra.mxu0 0.0
    %4523 = vmatprep.subr.mxu0 0.0
    %4524 = vmatpush1.msra.mxu0 0.0
    %4525 = vmatprep.subr.mxu0 0.0
    %4526 = vmatpush1.msra.mxu0 0.0
    %4527 = vmatprep.mubr.f32.mxu0 0.0
    %4528 = vmatmul.mubr.f32.gmra.mrb[0].mxu0 %v4458
    %v4529 = vpop.f32.mrb[0].mxu0
    %v4530 = vadd.f32 %v4455, %v4529
    %v4531 = vpop.f32.mrb[0].mxu0
    %4532 = vmatprep.mubr.f32.mxu0 0.0
    %4533 = vmatmul.mubr.f32.gmra.mrb[0].mxu0 %v4461
    %v4534 = vpop.f32.mrb[0].mxu0
    %v4535 = vadd.f32 %v4455, %v4534
    %v4536 = vpop.f32.mrb[0].mxu0
    %4537 = vdwg.mxu0
    %v4538 = vmax.f32 %v4530, 0.0
    %v4539 = vmax.f32 %v4535, 0.0
    %v4540 = vld [vmem:[%s59] sm:$0xff]
    %v4541 = vld [vmem:[%s59 + $0x8] sm:$0xff]
    %v4542 = vld [vmem:[%s59 + $0x10] sm:$0xff]
    %v4543 = vld [vmem:[%s59 + $0x18] sm:$0xff]
    %v4544 = vld [vmem:[%s59 + $0x20] sm:$0xff]
    %v4545 = vld [vmem:[%s59 + $0x28] sm:$0xff]
    %v4546 = vld [vmem:[%s59 + $0x30] sm:$0xff]
    %v4547 = vld [vmem:[%s59 + $0x38] sm:$0xff]
    %v4548 = vld [vmem:[%s61] sm:$0x1]
    %v4550 = vlaneseq
    %v4551 = vshrl.u32 %v4550, 7
    %v4552 = vsub.s32 0, %v4551
    %v4553 = vrot.slane %v4548, %v4552
    %v4556 = vsel %vm1624, %v4538, 0
    %v4559 = vsel %vm1624, %v4539, 0
    %4561 = vmatprep.subr.mxu0 0.0
    %4562 = vmatpush1.msra.mxu0 %v4540
    %4563 = vmatprep.subr.mxu0 0.0
    %4564 = vmatpush1.msra.mxu0 %v4541
    %4565 = vmatprep.subr.mxu0 0.0
    %4566 = vmatpush1.msra.mxu0 %v4542
    %4567 = vmatprep.subr.mxu0 0.0
    %4568 = vmatpush1.msra.mxu0 %v4543
    %4569 = vmatprep.subr.mxu0 0.0
    %4570 = vmatpush1.msra.mxu0 %v4544
    %4571 = vmatprep.subr.mxu0 0.0
    %4572 = vmatpush1.msra.mxu0 %v4545
    %4573 = vmatprep.subr.mxu0 0.0
    %4574 = vmatpush1.msra.mxu0 %v4546
    %4575 = vmatprep.subr.mxu0 0.0
    %4576 = vmatpush1.msra.mxu0 %v4547
    %4577 = vmatprep.subr.mxu0 0.0
    %4578 = vmatpush1.msra.mxu0 0.0
    %4579 = vmatprep.subr.mxu0 0.0
    %4580 = vmatpush1.msra.mxu0 0.0
    %4581 = vmatprep.subr.mxu0 0.0
    %4582 = vmatpush1.msra.mxu0 0.0
    %4583 = vmatprep.subr.mxu0 0.0
    %4584 = vmatpush1.msra.mxu0 0.0
    %4585 = vmatprep.subr.mxu0 0.0
    %4586 = vmatpush1.msra.mxu0 0.0
    %4587 = vmatprep.subr.mxu0 0.0
    %4588 = vmatpush1.msra.mxu0 0.0
    %4589 = vmatprep.subr.mxu0 0.0
    %4590 = vmatpush1.msra.mxu0 0.0
    %4591 = vmatprep.subr.mxu0 0.0
    %4592 = vmatpush1.msra.mxu0 0.0
    %4593 = vmatprep.subr.mxu0 0.0
    %4594 = vmatpush1.msra.mxu0 0.0
    %4595 = vmatprep.subr.mxu0 0.0
    %4596 = vmatpush1.msra.mxu0 0.0
    %4597 = vmatprep.subr.mxu0 0.0
    %4598 = vmatpush1.msra.mxu0 0.0
    %4599 = vmatprep.subr.mxu0 0.0
    %4600 = vmatpush1.msra.mxu0 0.0
    %4601 = vmatprep.subr.mxu0 0.0
    %4602 = vmatpush1.msra.mxu0 0.0
    %4603 = vmatprep.subr.mxu0 0.0
    %4604 = vmatpush1.msra.mxu0 0.0
    %4605 = vmatprep.subr.mxu0 0.0
    %4606 = vmatpush1.msra.mxu0 0.0
    %4607 = vmatprep.subr.mxu0 0.0
    %4608 = vmatpush1.msra.mxu0 0.0
    %4609 = vmatprep.subr.mxu0 0.0
    %4610 = vmatpush1.msra.mxu0 0.0
    %4611 = vmatprep.subr.mxu0 0.0
    %4612 = vmatpush1.msra.mxu0 0.0
    %4613 = vmatprep.subr.mxu0 0.0
    %4614 = vmatpush1.msra.mxu0 0.0
    %4615 = vmatprep.subr.mxu0 0.0
    %4616 = vmatpush1.msra.mxu0 0.0
    %4617 = vmatprep.subr.mxu0 0.0
    %4618 = vmatpush1.msra.mxu0 0.0
    %4619 = vmatprep.subr.mxu0 0.0
    %4620 = vmatpush1.msra.mxu0 0.0
    %4621 = vmatprep.subr.mxu0 0.0
    %4622 = vmatpush1.msra.mxu0 0.0
    %4623 = vmatprep.subr.mxu0 0.0
    %4624 = vmatpush1.msra.mxu0 0.0
    %4625 = vmatprep.mubr.f32.mxu0 0.0
    %4626 = vmatmul.mubr.f32.gmra.mrb[0].mxu0 %v4556
    %v4627 = vpop.f32.mrb[0].mxu0
    %v4628 = vadd.f32 %v4553, %v4627
    %v4629 = vpop.f32.mrb[0].mxu0
    %4630 = vmatprep.mubr.f32.mxu0 0.0
    %4631 = vmatmul.mubr.f32.gmra.mrb[0].mxu0 %v4559
    %v4632 = vpop.f32.mrb[0].mxu0
    %v4633 = vadd.f32 %v4553, %v4632
    %v4634 = vpop.f32.mrb[0].mxu0
    %4635 = vdwg.mxu0
    %v4636 = vadd.f32 %v4444, %v4628
    %v4637 = vadd.f32 %v4445, %v4633
    %v4638 = vld [vmem:[%s63] sm:$0x1]
    %v4639 = vld [vmem:[%s65] sm:$0x1]
    %v4640 = vsel %vm159, %v4636, 0.0
    %4641 = vadd.xlane.f32.xlu0 %v4640
    %v4642 = vpop.xlane.xlu0 %4641
    %v4643 = vsel %vm159, %v4637, 0.0
    %4644 = vadd.xlane.f32.xlu0 %v4643
    %v4645 = vpop.xlane.xlu0 %4644
    %v4646 = vmul.f32 %v4642, %v1478
    %v4647 = vmul.f32 %v4645, %v1478
    %v4648 = vsub.f32 %v4636, %v4646
    %v4649 = vsub.f32 %v4637, %v4647
    %v4650 = vmul.f32 %v4648, %v4648
    %v4651 = vmul.f32 %v4649, %v4649
    %v4652 = vsel %vm159, %v4650, 0.0
    %4653 = vadd.xlane.f32.xlu0 %v4652
    %v4654 = vpop.xlane.xlu0 %4653
    %v4655 = vsel %vm159, %v4651, 0.0
    %4656 = vadd.xlane.f32.xlu0 %v4655
    %v4657 = vpop.xlane.xlu0 %4656
    %v4658 = vmul.f32 %v4654, %v1478
    %v4659 = vmul.f32 %v4657, %v1478
    %v4660 = vadd.f32 %v4658, 1e-05
    %v4661 = vadd.f32 %v4659, 1e-05
    %v4662 = vrsqrt.pop %v4660
    %v4663 = vrsqrt.pop %v4661
    %v4664 = vmul.f32 %v4648, %v4662
    %v4665 = vmul.f32 %v4649, %v4663
    %v4667 = vlaneseq
    %v4668 = vshrl.u32 %v4667, 7
    %v4669 = vsub.s32 0, %v4668
    %v4670 = vrot.slane %v4638, %v4669
    %v4672 = vmul.f32 %v4664, %v4670
    %v4673 = vmul.f32 %v4665, %v4670
    %v4675 = vlaneseq
    %v4676 = vshrl.u32 %v4675, 7
    %v4677 = vsub.s32 0, %v4676
    %v4678 = vrot.slane %v4639, %v4677
    %v4680 = vadd.f32 %v4672, %v4678
    %v4681 = vadd.f32 %v4673, %v4678
    %4682 = vst.msk [vmem:[#allocation2] sm:$0xff] %vm159, %v4680
    %4683 = vst.msk [vmem:[#allocation2 + $0x8] sm:$0xff] %vm159, %v4681
    // Predicated region
    $region134: #{autoencoder_forward.1} parent=1 // pred_check
      _
    $region135: #{autoencoder_forward.1} parent=1 // pred_check_branch
      %4685 = sbr.rel (0) target = $region137
    $region136: #{autoencoder_forward.1} parent=1 // pred_region
      %s4687 = ssub.s32 256, 256
      %4688 = vsyncadd [#allocation3], %s4687
      %s4689 = sshll.u32 [#allocation2], 4
      %s4690 = int_to_ptr.vmem [resolvable:$true] %s4689
      %4695 = dma.vmem_to_hbm [thread:$0]  %s4690, 256, %s67, [#allocation3], 128, 128, 8
    $region137: #{autoencoder_forward.1} parent=1 // pred_fallthru
      _
    // Predicated region
    $region138: #{autoencoder_forward.1} parent=1 // pred_check
      _
    $region139: #{autoencoder_forward.1} parent=1 // pred_check_branch
      %4697 = sbr.rel (0) target = $region141
    $region140: #{autoencoder_forward.1} parent=1 // pred_region
      %4698 = dma.done [#allocation3], 256
    $region141: #{autoencoder_forward.1} parent=1 // pred_fallthru
      _
    %4699 = vsyncpa [#allocation3], 1

</llo_original>
